<compile_context>
chip_gen: v7x
topology: tpu7x:2x2x1
jax: 0.10.0
libtpu: 0.0.40
codegen_flags: <defaults>
</compile_context>

<pallas_src>
import functools

import jax
import jax.numpy as jnp
from jax import lax
from jax.experimental import pallas as pl
from jax.experimental.pallas import tpu as pltpu


def _pinsage_kernel(h_node_ref, h_nb_ref, w_ref,
                    qw_ref, qb_ref, ws_ref, wa_ref, wb_ref,
                    out_ref):
    tile_n = h_node_ref.shape[0]
    t = h_nb_ref.shape[0] // tile_n
    hid_p = qw_ref.shape[1]

    # Q projection of ALL neighbor rows in one 2-D bf16 MXU matmul (f32 acc),
    # then bias + ReLU in f32.          (tile_n*T, Fin) @ (Fin, H_p)
    q = jnp.dot(h_nb_ref[...], qw_ref[...],
                preferred_element_type=jnp.float32)
    q = jnp.maximum(q + qb_ref[...], 0.0)                # (tile_n*T, H_p) f32

    # Weighted aggregation over the T neighbors:
    # lane-splat multiply by the per-row weight, then a sublane reduce over T.
    w = w_ref[...]                                       # (tile_n*T, 1) f32
    q = q * w                                            # VPU lane-splat
    h_agg = jnp.sum(q.reshape(tile_n, t, hid_p), axis=1)  # (tile_n, H_p)
    w_sum = jnp.sum(w.reshape(tile_n, t), axis=1, keepdims=True)
    h_agg = h_agg * pl.reciprocal(w_sum, approx=True)    # EUP reciprocal

    # W(concat([h_node, h_agg])) as a split matmul (no concat materialized).
    z = (jnp.dot(h_node_ref[...], ws_ref[...],
                 preferred_element_type=jnp.float32)
         + jnp.dot(h_agg.astype(jnp.bfloat16), wa_ref[...],
                   preferred_element_type=jnp.float32)
         + wb_ref[...])
    z = jnp.maximum(z, 0.0)                              # ReLU (f32)

    # L2 normalize along features (rsqrt lands on the EUP slot); eps keeps
    # padded all-zero rows finite.
    inv_norm = lax.rsqrt(jnp.sum(z * z, axis=1, keepdims=True) + 1e-12)
    out_ref[...] = z * inv_norm


def _round_up(x, m):
    return (x + m - 1) // m * m


@functools.partial(jax.jit, static_argnames=("tile_n",))
def pinsage_conv(h, nodeset, nb_nodes, nb_weights, q_w, q_b, w_w, w_b,
                 *, tile_n=256):
    """Pallas-backed PinSageConv forward."""
    n_nodes, t = nb_nodes.shape
    fin = h.shape[1]
    hid = q_w.shape[1]
    fout = w_w.shape[1]

    hid_p = _round_up(hid, 128)
    fout_p = _round_up(fout, 128)

    # Keep >= 2 parallel grid steps when sensible (v7x megacore = 2 TCs) and
    # keep the node tile a multiple of 16 (bf16 sublane packing).
    half = _round_up(max(n_nodes // 2, 16), 16)
    tile_n = max(16, min(_round_up(tile_n, 16), half))
    n_pad = _round_up(n_nodes, tile_n)

    # --- gather glue (plain JAX), directly in bf16 ---------------------------
    h_bf16 = h.astype(jnp.bfloat16)
    h_nodeset = h_bf16[nodeset]                           # (N, Fin) bf16
    h_neighbors = h_bf16[nb_nodes.reshape(-1)]            # (N*T, Fin) bf16 flat

    # Row padding only (no Fin padding on the hot operands).
    h_nodeset_p = jnp.pad(h_nodeset, ((0, n_pad - n_nodes), (0, 0)))
    h_neighbors_p = jnp.pad(h_neighbors, ((0, (n_pad - n_nodes) * t), (0, 0)))
    nb_w_p = jnp.pad(nb_weights.astype(jnp.float32),
                     ((0, n_pad - n_nodes), (0, 0)),
                     constant_values=1.0)                 # pad w=1 -> no 0/0
    w_rows = nb_w_p.reshape(n_pad * t, 1)                 # (N_pad*T, 1) f32

    # Weights: pad only the lane-dense output dims (hid, fout) to 128.
    qw_p = jnp.pad(q_w, ((0, 0), (0, hid_p - hid))).astype(jnp.bfloat16)
    qb_p = jnp.pad(q_b.reshape(1, hid),
                   ((0, 0), (0, hid_p - hid))).astype(jnp.float32)
    ws_p = jnp.pad(w_w[:fin, :],
                   ((0, 0), (0, fout_p - fout))).astype(jnp.bfloat16)
    wa_p = jnp.pad(w_w[fin:, :],
                   ((0, hid_p - hid), (0, fout_p - fout))).astype(jnp.bfloat16)
    wb_p = jnp.pad(w_b.reshape(1, fout),
                   ((0, 0), (0, fout_p - fout))).astype(jnp.float32)

    grid = (n_pad // tile_n,)
    out = pl.pallas_call(
        _pinsage_kernel,
        out_shape=jax.ShapeDtypeStruct((n_pad, fout_p), jnp.float32),
        grid_spec=pltpu.PrefetchScalarGridSpec(
            num_scalar_prefetch=0,
            grid=grid,
            in_specs=[
                pl.BlockSpec((tile_n, fin), lambda i: (i, 0)),      # h_nodeset
                pl.BlockSpec((tile_n * t, fin), lambda i: (i, 0)),  # neighbors
                pl.BlockSpec((tile_n * t, 1), lambda i: (i, 0)),    # nb weights
                pl.BlockSpec((fin, hid_p), lambda i: (0, 0)),       # Q weight
                pl.BlockSpec((1, hid_p), lambda i: (0, 0)),         # Q bias
                pl.BlockSpec((fin, fout_p), lambda i: (0, 0)),      # W (self)
                pl.BlockSpec((hid_p, fout_p), lambda i: (0, 0)),    # W (agg)
                pl.BlockSpec((1, fout_p), lambda i: (0, 0)),        # W bias
            ],
            out_specs=pl.BlockSpec((tile_n, fout_p), lambda i: (i, 0)),
        ),
        compiler_params=pltpu.CompilerParams(
            dimension_semantics=("parallel",),
            vmem_limit_bytes=32 * 1024 * 1024),
    )(h_nodeset_p, h_neighbors_p, w_rows, qw_p, qb_p, ws_p, wa_p, wb_p)

    return out[:n_nodes, :fout]


def _reference(h, nodeset, nb_nodes, nb_weights, q_w, q_b, w_w, w_b):
    """Pure-JAX f32 reference mirroring the PyTorch forward."""
    n_nodes, t = nb_nodes.shape
    fin = h.shape[1]
    h_nodeset = h[nodeset]
    h_neighbors = h[nb_nodes.reshape(-1)].reshape(n_nodes, t, fin)
    h_neighbors = jax.nn.relu(h_neighbors @ q_w + q_b)
    h_agg = (nb_weights[:, :, None] * h_neighbors).sum(1) / nb_weights.sum(
        1, keepdims=True)
    h_concat = jnp.concatenate([h_nodeset, h_agg], axis=1)
    h_new = jax.nn.relu(h_concat @ w_w + w_b)
    h_new = h_new / jnp.linalg.norm(h_new, axis=1, keepdims=True)
    return h_new


if __name__ == "__main__":
    key = jax.random.PRNGKey(0)
    k = jax.random.split(key, 8)

    num_total_nodes = 512
    in_features, hidden_features, out_features = 32, 64, 48
    num_nodes, num_neighbors = 200, 8      # 200 -> exercises node padding

    h = jax.random.normal(k[0], (num_total_nodes, in_features), jnp.float32)
    nodeset = jax.random.randint(k[1], (num_nodes,), 0, num_total_nodes,
                                 dtype=jnp.int32)
    nb_nodes = jax.random.randint(k[2], (num_nodes, num_neighbors), 0,
                                  num_total_nodes, dtype=jnp.int32)
    nb_weights = jax.random.uniform(k[3], (num_nodes, num_neighbors),
                                    jnp.float32, minval=0.1, maxval=1.0)

    # Deterministic parameter init (nn.Linear-style uniform bounds).
    bq = 1.0 / jnp.sqrt(in_features)
    q_w = jax.random.uniform(k[4], (in_features, hidden_features),
                             jnp.float32, -bq, bq)
    q_b = jax.random.uniform(k[5], (hidden_features,), jnp.float32, -bq, bq)
    bw = 1.0 / jnp.sqrt(in_features + hidden_features)
    w_w = jax.random.uniform(k[6], (in_features + hidden_features,
                                    out_features), jnp.float32, -bw, bw)
    w_b = jax.random.uniform(k[7], (out_features,), jnp.float32, -bw, bw)

    out = pinsage_conv(h, nodeset, nb_nodes, nb_weights, q_w, q_b, w_w, w_b,
                       tile_n=256)
    out = jax.block_until_ready(out)

    ref = _reference(h, nodeset, nb_nodes, nb_weights, q_w, q_b, w_w, w_b)
    assert out.shape == (num_nodes, out_features)
    # Tolerance loosened vs. the f32 version: bf16 matmul operands + EUP
    # approx reciprocal (outputs are L2-normalized, so |out| <= 1).
    assert jnp.allclose(out, ref, atol=2e-2, rtol=2e-2), (
        f"max abs err = {jnp.max(jnp.abs(out - ref))}")

    print("KERNEL_OK")
</pallas_src>

<mosaic_0001>
module attributes {stable_mosaic.version = 11 : i64} {
  func.func @_pinsage_kernel(%arg0: i32, %arg1: memref<112x32xbf16, #tpu.memory_space<vmem>>, %arg2: memref<896x32xbf16, #tpu.memory_space<vmem>>, %arg3: memref<896x1xf32, #tpu.memory_space<vmem>>, %arg4: memref<32x128xbf16, #tpu.memory_space<vmem>>, %arg5: memref<1x128xf32, #tpu.memory_space<vmem>>, %arg6: memref<32x128xbf16, #tpu.memory_space<vmem>>, %arg7: memref<128x128xbf16, #tpu.memory_space<vmem>>, %arg8: memref<1x128xf32, #tpu.memory_space<vmem>>, %arg9: memref<112x128xf32, #tpu.memory_space<vmem>>) attributes {dimension_semantics = [#tpu.dimension_semantics<parallel>], iteration_bounds = array<i64: 2>, scalar_prefetch = 0 : i64, scratch_operands = 0 : i64, tpu.core_type = #tpu.core_type<tc>, window_params = [{transform_indices = @transform_0, window_bounds = array<i64: 112, 32>}, {transform_indices = @transform_1, window_bounds = array<i64: 896, 32>}, {transform_indices = @transform_2, window_bounds = array<i64: 896, 1>}, {pipeline_mode = #tpu.pipeline_mode<synchronous>, transform_indices = @transform_3, window_bounds = array<i64: 32, 128>}, {pipeline_mode = #tpu.pipeline_mode<synchronous>, transform_indices = @transform_4, window_bounds = array<i64: 1, 128>}, {pipeline_mode = #tpu.pipeline_mode<synchronous>, transform_indices = @transform_5, window_bounds = array<i64: 32, 128>}, {pipeline_mode = #tpu.pipeline_mode<synchronous>, transform_indices = @transform_6, window_bounds = array<i64: 128, 128>}, {pipeline_mode = #tpu.pipeline_mode<synchronous>, transform_indices = @transform_7, window_bounds = array<i64: 1, 128>}, {transform_indices = @transform_8, window_bounds = array<i64: 112, 128>}]} {
    %c0 = arith.constant 0 : index
    %c0_0 = arith.constant 0 : index
    %0 = vector.load %arg2[%c0, %c0_0] : memref<896x32xbf16, #tpu.memory_space<vmem>>, vector<896x32xbf16>
    %c0_1 = arith.constant 0 : index
    %c0_2 = arith.constant 0 : index
    %1 = vector.load %arg4[%c0_1, %c0_2] : memref<32x128xbf16, #tpu.memory_space<vmem>>, vector<32x128xbf16>
    %cst = arith.constant dense<0.000000e+00> : vector<896x128xf32>
    %2 = tpu.matmul %0, %1, %cst {dimension_numbers = #tpu.dot_dimension_numbers<[1], [0], [0], [1], [0, 0, 1, 1], [], []>} : vector<896x32xbf16>, vector<32x128xbf16>, vector<896x128xf32> -> vector<896x128xf32>
    %c0_3 = arith.constant 0 : index
    %c0_4 = arith.constant 0 : index
    %3 = vector.load %arg5[%c0_3, %c0_4] : memref<1x128xf32, #tpu.memory_space<vmem>>, vector<1x128xf32>
    %4 = vector.broadcast %3 : vector<1x128xf32> to vector<896x128xf32>
    %5 = arith.addf %2, %4 : vector<896x128xf32>
    %cst_5 = arith.constant 0.000000e+00 : f32
    %6 = vector.broadcast %cst_5 : f32 to vector<896x128xf32>
    %7 = arith.maximumf %5, %6 : vector<896x128xf32>
    %c0_6 = arith.constant 0 : index
    %c0_7 = arith.constant 0 : index
    %8 = vector.load %arg3[%c0_6, %c0_7] : memref<896x1xf32, #tpu.memory_space<vmem>>, vector<896x1xf32>
    %9 = vector.broadcast %8 : vector<896x1xf32> to vector<896x128xf32>
    %10 = arith.mulf %7, %9 : vector<896x128xf32>
    %11 = vector.shape_cast %10 : vector<896x128xf32> to vector<112x8x128xf32>
    %cst_8 = arith.constant dense<0.000000e+00> : vector<112x128xf32>
    %12 = vector.multi_reduction <add>, %11, %cst_8 [1] : vector<112x8x128xf32> to vector<112x128xf32>
    %13 = vector.shape_cast %8 : vector<896x1xf32> to vector<112x8xf32>
    %cst_9 = arith.constant dense<0.000000e+00> : vector<112xf32>
    %14 = vector.multi_reduction <add>, %13, %cst_9 [1] : vector<112x8xf32> to vector<112xf32>
    %15 = vector.shape_cast %14 : vector<112xf32> to vector<112x1xf32>
    %16 = tpu.reciprocal %15 {approx = true} : vector<112x1xf32> -> vector<112x1xf32>
    %17 = vector.broadcast %16 : vector<112x1xf32> to vector<112x128xf32>
    %18 = arith.mulf %12, %17 : vector<112x128xf32>
    %c0_10 = arith.constant 0 : index
    %c0_11 = arith.constant 0 : index
    %19 = vector.load %arg1[%c0_10, %c0_11] : memref<112x32xbf16, #tpu.memory_space<vmem>>, vector<112x32xbf16>
    %c0_12 = arith.constant 0 : index
    %c0_13 = arith.constant 0 : index
    %20 = vector.load %arg6[%c0_12, %c0_13] : memref<32x128xbf16, #tpu.memory_space<vmem>>, vector<32x128xbf16>
    %cst_14 = arith.constant dense<0.000000e+00> : vector<112x128xf32>
    %21 = tpu.matmul %19, %20, %cst_14 {dimension_numbers = #tpu.dot_dimension_numbers<[1], [0], [0], [1], [0, 0, 1, 1], [], []>} : vector<112x32xbf16>, vector<32x128xbf16>, vector<112x128xf32> -> vector<112x128xf32>
    %22 = arith.truncf %18 : vector<112x128xf32> to vector<112x128xbf16>
    %c0_15 = arith.constant 0 : index
    %c0_16 = arith.constant 0 : index
    %23 = vector.load %arg7[%c0_15, %c0_16] : memref<128x128xbf16, #tpu.memory_space<vmem>>, vector<128x128xbf16>
    %cst_17 = arith.constant dense<0.000000e+00> : vector<112x128xf32>
    %24 = tpu.matmul %22, %23, %cst_17 {dimension_numbers = #tpu.dot_dimension_numbers<[1], [0], [0], [1], [0, 0, 1, 1], [], []>} : vector<112x128xbf16>, vector<128x128xbf16>, vector<112x128xf32> -> vector<112x128xf32>
    %25 = arith.addf %21, %24 : vector<112x128xf32>
    %c0_18 = arith.constant 0 : index
    %c0_19 = arith.constant 0 : index
    %26 = vector.load %arg8[%c0_18, %c0_19] : memref<1x128xf32, #tpu.memory_space<vmem>>, vector<1x128xf32>
    %27 = vector.broadcast %26 : vector<1x128xf32> to vector<112x128xf32>
    %28 = arith.addf %25, %27 : vector<112x128xf32>
    %cst_20 = arith.constant 0.000000e+00 : f32
    %29 = vector.broadcast %cst_20 : f32 to vector<112x128xf32>
    %30 = arith.maximumf %28, %29 : vector<112x128xf32>
    %31 = arith.mulf %30, %30 : vector<112x128xf32>
    %cst_21 = arith.constant dense<0.000000e+00> : vector<112xf32>
    %32 = vector.multi_reduction <add>, %31, %cst_21 [1] : vector<112x128xf32> to vector<112xf32>
    %33 = vector.shape_cast %32 : vector<112xf32> to vector<112x1xf32>
    %cst_22 = arith.constant 9.99999996E-13 : f32
    %34 = vector.broadcast %cst_22 : f32 to vector<112x1xf32>
    %35 = arith.addf %33, %34 : vector<112x1xf32>
    %36 = math.rsqrt %35 : vector<112x1xf32>
    %37 = vector.broadcast %36 : vector<112x1xf32> to vector<112x128xf32>
    %38 = arith.mulf %30, %37 : vector<112x128xf32>
    %c0_23 = arith.constant 0 : index
    %c0_24 = arith.constant 0 : index
    %39 = vector.load %arg9[%c0_23, %c0_24] : memref<112x128xf32, #tpu.memory_space<vmem>>, vector<112x128xf32>
    tpu.vector_store %arg9[%c0_23, %c0_24], %38 {strides = array<i32>} : memref<112x128xf32, #tpu.memory_space<vmem>>, vector<112x128xf32>,
    return
  }
  func.func @transform_0(%arg0: i32) -> (i32, i32) {
    %c0_i32 = arith.constant 0 : i32
    %c0_i32_0 = arith.constant 0 : i32
    return %arg0, %c0_i32 : i32, i32
  }
  func.func @transform_1(%arg0: i32) -> (i32, i32) {
    %c0_i32 = arith.constant 0 : i32
    %c0_i32_0 = arith.constant 0 : i32
    return %arg0, %c0_i32 : i32, i32
  }
  func.func @transform_2(%arg0: i32) -> (i32, i32) {
    %c0_i32 = arith.constant 0 : i32
    %c0_i32_0 = arith.constant 0 : i32
    return %arg0, %c0_i32 : i32, i32
  }
  func.func @transform_3(%arg0: i32) -> (i32, i32) {
    %c0_i32 = arith.constant 0 : i32
    %c0_i32_0 = arith.constant 0 : i32
    %c0_i32_1 = arith.constant 0 : i32
    return %c0_i32, %c0_i32_0 : i32, i32
  }
  func.func @transform_4(%arg0: i32) -> (i32, i32) {
    %c0_i32 = arith.constant 0 : i32
    %c0_i32_0 = arith.constant 0 : i32
    %c0_i32_1 = arith.constant 0 : i32
    return %c0_i32, %c0_i32_0 : i32, i32
  }
  func.func @transform_5(%arg0: i32) -> (i32, i32) {
    %c0_i32 = arith.constant 0 : i32
    %c0_i32_0 = arith.constant 0 : i32
    %c0_i32_1 = arith.constant 0 : i32
    return %c0_i32, %c0_i32_0 : i32, i32
  }
  func.func @transform_6(%arg0: i32) -> (i32, i32) {
    %c0_i32 = arith.constant 0 : i32
    %c0_i32_0 = arith.constant 0 : i32
    %c0_i32_1 = arith.constant 0 : i32
    return %c0_i32, %c0_i32_0 : i32, i32
  }
  func.func @transform_7(%arg0: i32) -> (i32, i32) {
    %c0_i32 = arith.constant 0 : i32
    %c0_i32_0 = arith.constant 0 : i32
    %c0_i32_1 = arith.constant 0 : i32
    return %c0_i32, %c0_i32_0 : i32, i32
  }
  func.func @transform_8(%arg0: i32) -> (i32, i32) {
    %c0_i32 = arith.constant 0 : i32
    %c0_i32_0 = arith.constant 0 : i32
    return %arg0, %c0_i32 : i32, i32
  }
}

</mosaic_0001>

<llo_original>
// kernel: pinsage_conv.1
$region0: #{pinsage_conv.1}
  #allocation0 [shape = 'u32[]', space=smem, size = 0x4, offset = 0x4, fixed_abs, tag = 'smem constant byte address 0x4 - core index']
  #allocation1 [shape = 'u32[144,128]{1,0:T(1,128)}', space=vmem, size = 0x12000, scoped, tag = 'internal scratch']
  %s0 = inlined_call_operand.vmem [shape: bf16[224,32], index: 0, kind: input, shape index: {}]
  %s1 = inlined_call_operand.vmem [shape: bf16[1792,32], index: 1, kind: input, shape index: {}]
  %s2 = inlined_call_operand.vmem [shape: f32[1792,1], index: 2, kind: input, shape index: {}]
  %s3 = inlined_call_operand.vmem [shape: bf16[32,128], index: 3, kind: input, shape index: {}]
  %s4 = inlined_call_operand.vmem [shape: f32[1,128], index: 4, kind: input, shape index: {}]
  %s5 = inlined_call_operand.vmem [shape: bf16[32,128], index: 5, kind: input, shape index: {}]
  %s6 = inlined_call_operand.vmem [shape: bf16[128,128], index: 6, kind: input, shape index: {}]
  %s7 = inlined_call_operand.vmem [shape: f32[1,128], index: 7, kind: input, shape index: {}]
  %s8 = inlined_call_operand.vmem [shape: f32[224,128], index: 8, kind: output, shape index: {}]
  %s9 = sld [smem:[#allocation0]]
  $region65: #{pinsage_conv.1} parent=0
    _
  %s11 = ssub.s32 1, %s9
  %s12 = scalar_select 0, %s11, %s9
  loop: start=0, step=1, limit=4
  $region2: #{pinsage_conv.1} parent=0 // loop_pre_header
    _
  $region3: #{pinsage_conv.1} parent=0 // loop_header
    %s14 = sphi 0, %s18
    %p15 = scmp.ge.s32.totalorder %s14, 4
    %s24 = sphi 0, %s26
    %s27 = sphi 0, %s24
    %s28 = sphi 0, %s27
    %s44 = sphi 0, %s28
    %s50 = sphi 0, %s52
    %s53 = sphi 0, %s50
    %s54 = sphi 0, %s53
    %s70 = sphi 0, %s54
    %s76 = sphi 0, %s78
    %s79 = sphi 0, %s76
    %s80 = sphi 0, %s79
    %s96 = sphi 0, %s80
    %s100 = sphi 0, %s100
    %s102 = sphi 0, %s100
    %s103 = sphi 0, %s102
    %s117 = sphi 0, %s103
    %s121 = sphi 0, %s121
    %s123 = sphi 0, %s121
    %s124 = sphi 0, %s123
    %s138 = sphi 0, %s124
    %s142 = sphi 0, %s142
    %s144 = sphi 0, %s142
    %s145 = sphi 0, %s144
    %s159 = sphi 0, %s145
    %s163 = sphi 0, %s163
    %s165 = sphi 0, %s163
    %s166 = sphi 0, %s165
    %s180 = sphi 0, %s166
    %s184 = sphi 0, %s184
    %s186 = sphi 0, %s184
    %s187 = sphi 0, %s186
    %s201 = sphi 0, %s187
    %s207 = sphi 0, %s209
    %s210 = sphi 0, %s207
    %s211 = sphi 0, %s210
    %s227 = sphi 0, %s211
  $region4: #{pinsage_conv.1} parent=0 // loop_header_branch
    %17 = sbr.rel (%p15) target = $region8
  $region5: #{pinsage_conv.1} parent=0 // loop_body
    %s19 = ssub.s32 %s14, 1
    %s20 = ssub.s32 %s14, 2
    %s21 = sadd.s32 %s14, 1
    %s22 = ssub.s32 %s14, %s21
    %p23 = scmp.eq.s32.totalorder %s22, 0
    %s25 = sadd.s32 %s24, 1
    %s26 = scalar_select %p23, %s24, %s25
    %p29 = pneg %p23
    %p30 = scmp.eq.s32.totalorder %s14, 1
    %p31 = por %p29, %p30
    %p32 = scmp.ne.s32.totalorder %s24, %s27
    %p33 = scmp.eq.s32.totalorder %s14, 0
    %p34 = por %p32, %p33
    %p35 = scmp.ne.s32.totalorder %s24, %s27
    %p36 = scmp.eq.s32.totalorder %s19, 1
    %p37 = por %p35, %p36
    %p38 = scmp.ne.s32.totalorder %s27, %s28
    %p39 = scmp.eq.s32.totalorder %s19, 0
    %p40 = por %p38, %p39
    %p41 = scmp.ne.s32.totalorder %s27, %s28
    %p42 = scmp.eq.s32.totalorder %s20, 1
    %p43 = por %p41, %p42
    %p45 = scmp.ne.s32.totalorder %s28, %s44
    %p46 = scmp.eq.s32.totalorder %s20, 0
    %p47 = por %p45, %p46
    %s48 = ssub.s32 %s14, %s21
    %p49 = scmp.eq.s32.totalorder %s48, 0
    %s51 = sadd.s32 %s50, 1
    %s52 = scalar_select %p49, %s50, %s51
    %p55 = pneg %p49
    %p56 = scmp.eq.s32.totalorder %s14, 1
    %p57 = por %p55, %p56
    %p58 = scmp.ne.s32.totalorder %s50, %s53
    %p59 = scmp.eq.s32.totalorder %s14, 0
    %p60 = por %p58, %p59
    %p61 = scmp.ne.s32.totalorder %s50, %s53
    %p62 = scmp.eq.s32.totalorder %s19, 1
    %p63 = por %p61, %p62
    %p64 = scmp.ne.s32.totalorder %s53, %s54
    %p65 = scmp.eq.s32.totalorder %s19, 0
    %p66 = por %p64, %p65
    %p67 = scmp.ne.s32.totalorder %s53, %s54
    %p68 = scmp.eq.s32.totalorder %s20, 1
    %p69 = por %p67, %p68
    %p71 = scmp.ne.s32.totalorder %s54, %s70
    %p72 = scmp.eq.s32.totalorder %s20, 0
    %p73 = por %p71, %p72
    %s74 = ssub.s32 %s14, %s21
    %p75 = scmp.eq.s32.totalorder %s74, 0
    %s77 = sadd.s32 %s76, 1
    %s78 = scalar_select %p75, %s76, %s77
    %p81 = pneg %p75
    %p82 = scmp.eq.s32.totalorder %s14, 1
    %p83 = por %p81, %p82
    %p84 = scmp.ne.s32.totalorder %s76, %s79
    %p85 = scmp.eq.s32.totalorder %s14, 0
    %p86 = por %p84, %p85
    %p87 = scmp.ne.s32.totalorder %s76, %s79
    %p88 = scmp.eq.s32.totalorder %s19, 1
    %p89 = por %p87, %p88
    %p90 = scmp.ne.s32.totalorder %s79, %s80
    %p91 = scmp.eq.s32.totalorder %s19, 0
    %p92 = por %p90, %p91
    %p93 = scmp.ne.s32.totalorder %s79, %s80
    %p94 = scmp.eq.s32.totalorder %s20, 1
    %p95 = por %p93, %p94
    %p97 = scmp.ne.s32.totalorder %s80, %s96
    %p98 = scmp.eq.s32.totalorder %s20, 0
    %p99 = por %p97, %p98
    %s101 = sadd.s32 %s100, 1
    %p104 = scmp.eq.s32.totalorder %s14, 1
    %p105 = scmp.ne.s32.totalorder %s100, %s102
    %p106 = scmp.eq.s32.totalorder %s14, 0
    %p107 = por %p105, %p106
    %p108 = scmp.ne.s32.totalorder %s100, %s102
    %p109 = scmp.eq.s32.totalorder %s19, 1
    %p110 = por %p108, %p109
    %p111 = scmp.ne.s32.totalorder %s102, %s103
    %p112 = scmp.eq.s32.totalorder %s19, 0
    %p113 = por %p111, %p112
    %p114 = scmp.ne.s32.totalorder %s102, %s103
    %p115 = scmp.eq.s32.totalorder %s20, 1
    %p116 = por %p114, %p115
    %p118 = scmp.ne.s32.totalorder %s103, %s117
    %p119 = scmp.eq.s32.totalorder %s20, 0
    %p120 = por %p118, %p119
    %s122 = sadd.s32 %s121, 1
    %p125 = scmp.eq.s32.totalorder %s14, 1
    %p126 = scmp.ne.s32.totalorder %s121, %s123
    %p127 = scmp.eq.s32.totalorder %s14, 0
    %p128 = por %p126, %p127
    %p129 = scmp.ne.s32.totalorder %s121, %s123
    %p130 = scmp.eq.s32.totalorder %s19, 1
    %p131 = por %p129, %p130
    %p132 = scmp.ne.s32.totalorder %s123, %s124
    %p133 = scmp.eq.s32.totalorder %s19, 0
    %p134 = por %p132, %p133
    %p135 = scmp.ne.s32.totalorder %s123, %s124
    %p136 = scmp.eq.s32.totalorder %s20, 1
    %p137 = por %p135, %p136
    %p139 = scmp.ne.s32.totalorder %s124, %s138
    %p140 = scmp.eq.s32.totalorder %s20, 0
    %p141 = por %p139, %p140
    %s143 = sadd.s32 %s142, 1
    %p146 = scmp.eq.s32.totalorder %s14, 1
    %p147 = scmp.ne.s32.totalorder %s142, %s144
    %p148 = scmp.eq.s32.totalorder %s14, 0
    %p149 = por %p147, %p148
    %p150 = scmp.ne.s32.totalorder %s142, %s144
    %p151 = scmp.eq.s32.totalorder %s19, 1
    %p152 = por %p150, %p151
    %p153 = scmp.ne.s32.totalorder %s144, %s145
    %p154 = scmp.eq.s32.totalorder %s19, 0
    %p155 = por %p153, %p154
    %p156 = scmp.ne.s32.totalorder %s144, %s145
    %p157 = scmp.eq.s32.totalorder %s20, 1
    %p158 = por %p156, %p157
    %p160 = scmp.ne.s32.totalorder %s145, %s159
    %p161 = scmp.eq.s32.totalorder %s20, 0
    %p162 = por %p160, %p161
    %s164 = sadd.s32 %s163, 1
    %p167 = scmp.eq.s32.totalorder %s14, 1
    %p168 = scmp.ne.s32.totalorder %s163, %s165
    %p169 = scmp.eq.s32.totalorder %s14, 0
    %p170 = por %p168, %p169
    %p171 = scmp.ne.s32.totalorder %s163, %s165
    %p172 = scmp.eq.s32.totalorder %s19, 1
    %p173 = por %p171, %p172
    %p174 = scmp.ne.s32.totalorder %s165, %s166
    %p175 = scmp.eq.s32.totalorder %s19, 0
    %p176 = por %p174, %p175
    %p177 = scmp.ne.s32.totalorder %s165, %s166
    %p178 = scmp.eq.s32.totalorder %s20, 1
    %p179 = por %p177, %p178
    %p181 = scmp.ne.s32.totalorder %s166, %s180
    %p182 = scmp.eq.s32.totalorder %s20, 0
    %p183 = por %p181, %p182
    %s185 = sadd.s32 %s184, 1
    %p188 = scmp.eq.s32.totalorder %s14, 1
    %p189 = scmp.ne.s32.totalorder %s184, %s186
    %p190 = scmp.eq.s32.totalorder %s14, 0
    %p191 = por %p189, %p190
    %p192 = scmp.ne.s32.totalorder %s184, %s186
    %p193 = scmp.eq.s32.totalorder %s19, 1
    %p194 = por %p192, %p193
    %p195 = scmp.ne.s32.totalorder %s186, %s187
    %p196 = scmp.eq.s32.totalorder %s19, 0
    %p197 = por %p195, %p196
    %p198 = scmp.ne.s32.totalorder %s186, %s187
    %p199 = scmp.eq.s32.totalorder %s20, 1
    %p200 = por %p198, %p199
    %p202 = scmp.ne.s32.totalorder %s187, %s201
    %p203 = scmp.eq.s32.totalorder %s20, 0
    %p204 = por %p202, %p203
    %s205 = ssub.s32 %s14, %s21
    %p206 = scmp.eq.s32.totalorder %s205, 0
    %s208 = sadd.s32 %s207, 1
    %s209 = scalar_select %p206, %s207, %s208
    %p212 = pneg %p206
    %p213 = scmp.eq.s32.totalorder %s14, 1
    %p214 = por %p212, %p213
    %p215 = scmp.ne.s32.totalorder %s207, %s210
    %p216 = scmp.eq.s32.totalorder %s14, 0
    %p217 = por %p215, %p216
    %p218 = scmp.ne.s32.totalorder %s207, %s210
    %p219 = scmp.eq.s32.totalorder %s19, 1
    %p220 = por %p218, %p219
    %p221 = scmp.ne.s32.totalorder %s210, %s211
    %p222 = scmp.eq.s32.totalorder %s19, 0
    %p223 = por %p221, %p222
    %p224 = scmp.ne.s32.totalorder %s210, %s211
    %p225 = scmp.eq.s32.totalorder %s20, 1
    %p226 = por %p224, %p225
    %p228 = scmp.ne.s32.totalorder %s211, %s227
    %p229 = scmp.eq.s32.totalorder %s20, 0
    %p230 = por %p228, %p229
    %p231 = scmp.le.s32.totalorder 1, %s14
    %p232 = scmp.lt.s32.totalorder %s14, 3
    %p233 = pnand %p231, %p232
    %p234 = pneg %p233
    // Predicated region
    $region9: #{pinsage_conv.1} parent=5 // pred_check
      _
    $region10: #{pinsage_conv.1} parent=5 // pred_check_branch
      %236 = sbr.rel (%p233) target = $region12
    $region11: #{pinsage_conv.1} parent=5 // pred_region
      %s237 = ssub.s32 %s14, 1
      // Predicated region
      $region13: #{pinsage_conv.1} parent=11 // pred_check
        %p238 = pneg %p113
      $region14: #{pinsage_conv.1} parent=11 // pred_check_branch
        %240 = sbr.rel (%p238) target = $region16
      $region15: #{pinsage_conv.1} parent=11 // pred_region
        _
      $region16: #{pinsage_conv.1} parent=11 // pred_fallthru
        _
      // Predicated region
      $region17: #{pinsage_conv.1} parent=11 // pred_check
        %p241 = pneg %p134
      $region18: #{pinsage_conv.1} parent=11 // pred_check_branch
        %243 = sbr.rel (%p241) target = $region20
      $region19: #{pinsage_conv.1} parent=11 // pred_region
        _
      $region20: #{pinsage_conv.1} parent=11 // pred_fallthru
        _
      // Predicated region
      $region21: #{pinsage_conv.1} parent=11 // pred_check
        %p244 = pneg %p155
      $region22: #{pinsage_conv.1} parent=11 // pred_check_branch
        %246 = sbr.rel (%p244) target = $region24
      $region23: #{pinsage_conv.1} parent=11 // pred_region
        _
      $region24: #{pinsage_conv.1} parent=11 // pred_fallthru
        _
      // Predicated region
      $region25: #{pinsage_conv.1} parent=11 // pred_check
        %p247 = pneg %p176
      $region26: #{pinsage_conv.1} parent=11 // pred_check_branch
        %249 = sbr.rel (%p247) target = $region28
      $region27: #{pinsage_conv.1} parent=11 // pred_region
        _
      $region28: #{pinsage_conv.1} parent=11 // pred_fallthru
        _
      // Predicated region
      $region29: #{pinsage_conv.1} parent=11 // pred_check
        %p250 = pneg %p197
      $region30: #{pinsage_conv.1} parent=11 // pred_check_branch
        %252 = sbr.rel (%p250) target = $region32
      $region31: #{pinsage_conv.1} parent=11 // pred_region
        _
      $region32: #{pinsage_conv.1} parent=11 // pred_fallthru
        _
    $region12: #{pinsage_conv.1} parent=5 // pred_fallthru
      _
    %p253 = scmp.lt.s32.totalorder %s14, 2
    // Predicated region
    $region33: #{pinsage_conv.1} parent=5 // pred_check
      %p254 = pneg %p253
    $region34: #{pinsage_conv.1} parent=5 // pred_check_branch
      %256 = sbr.rel (%p254) target = $region36
    $region35: #{pinsage_conv.1} parent=5 // pred_region
      // Predicated region
      $region37: #{pinsage_conv.1} parent=35 // pred_check
        %p257 = pneg %p34
      $region38: #{pinsage_conv.1} parent=35 // pred_check_branch
        %259 = sbr.rel (%p257) target = $region40
      $region39: #{pinsage_conv.1} parent=35 // pred_region
        %s260 = smul.u32 14, %s14
        %p261 = scmp.lt.s32.totalorder %s260, 27
        %s262 = scalar_select %p261, %s260, 27
        %s263 = smul.addr %s262, 4
        %s264 = scalar_lea.vmem %s0, %s263
        %s265 = smul.u32 14, %s14
      $region40: #{pinsage_conv.1} parent=35 // pred_fallthru
        _
      // Predicated region
      $region41: #{pinsage_conv.1} parent=35 // pred_check
        %p266 = pneg %p60
      $region42: #{pinsage_conv.1} parent=35 // pred_check_branch
        %268 = sbr.rel (%p266) target = $region44
      $region43: #{pinsage_conv.1} parent=35 // pred_region
        %s269 = smul.u32 112, %s14
        %p270 = scmp.lt.s32.totalorder %s269, 223
        %s271 = scalar_select %p270, %s269, 223
        %s272 = smul.addr %s271, 4
        %s273 = scalar_lea.vmem %s1, %s272
        %s274 = smul.u32 112, %s14
      $region44: #{pinsage_conv.1} parent=35 // pred_fallthru
        _
      // Predicated region
      $region45: #{pinsage_conv.1} parent=35 // pred_check
        %p275 = pneg %p86
      $region46: #{pinsage_conv.1} parent=35 // pred_check_branch
        %277 = sbr.rel (%p275) target = $region48
      $region47: #{pinsage_conv.1} parent=35 // pred_region
        %s278 = smul.u32 112, %s14
        %p279 = scmp.lt.s32.totalorder %s278, 223
        %s280 = scalar_select %p279, %s278, 223
        %s281 = smul.addr %s280, 8
        %s282 = scalar_lea.vmem %s2, %s281
        %s283 = smul.u32 112, %s14
      $region48: #{pinsage_conv.1} parent=35 // pred_fallthru
        _
    $region36: #{pinsage_conv.1} parent=5 // pred_fallthru
      _
    %p284 = scmp.le.s32.totalorder 1, %s14
    %p285 = scmp.lt.s32.totalorder %s14, 3
    %p286 = pnand %p284, %p285
    %p287 = pneg %p286
    // Predicated region
    $region49: #{pinsage_conv.1} parent=5 // pred_check
      _
    $region50: #{pinsage_conv.1} parent=5 // pred_check_branch
      %289 = sbr.rel (%p286) target = $region52
    $region51: #{pinsage_conv.1} parent=5 // pred_region
      %s290 = ssub.s32 %s14, 1
      %s291 = smul.u32 14, %s19
      %p292 = scmp.lt.s32.totalorder %s291, 27
      %s293 = scalar_select %p292, %s291, 27
      %s294 = smul.addr %s293, 4
      %s295 = scalar_lea.vmem %s0, %s294
      %p296 = pneg %p40
      %p297 = pneg %p37
      %s298 = smul.u32 112, %s19
      %p299 = scmp.lt.s32.totalorder %s298, 223
      %s300 = scalar_select %p299, %s298, 223
      %s301 = smul.addr %s300, 4
      %s302 = scalar_lea.vmem %s1, %s301
      %p303 = pneg %p66
      %p304 = pneg %p63
      %s305 = smul.u32 112, %s19
      %p306 = scmp.lt.s32.totalorder %s305, 223
      %s307 = scalar_select %p306, %s305, 223
      %s308 = smul.addr %s307, 8
      %s309 = scalar_lea.vmem %s2, %s308
      %p310 = pneg %p92
      %p311 = pneg %p89
      %p312 = pneg %p113
      %p313 = pneg %p110
      %p314 = pneg %p134
      %p315 = pneg %p131
      %p316 = pneg %p155
      %p317 = pneg %p152
      %p318 = pneg %p176
      %p319 = pneg %p173
      %p320 = pneg %p197
      %p321 = pneg %p194
      %p322 = pneg %p223
      %p323 = pneg %p220
      %s324 = smul.u32 14, %s19
      %p325 = scmp.lt.s32.totalorder %s324, 27
      %s326 = scalar_select %p325, %s324, 27
      %s327 = smul.addr %s326, 8
      %s328 = scalar_lea.vmem %s8, %s327
      %s329 = smul.u32 14, %s19
      %p330 = scmp.lt.s32.totalorder %s329, 27
      %s331 = scalar_select %p330, %s329, 27
      %s332 = smul.addr %s331, 4
      %s333 = scalar_lea.vmem %s0, %s332
      %s334 = smul.u32 14, %s19
      %s335 = smul.u32 112, %s19
      %p336 = scmp.lt.s32.totalorder %s335, 223
      %s337 = scalar_select %p336, %s335, 223
      %s338 = smul.addr %s337, 4
      %s339 = scalar_lea.vmem %s1, %s338
      %s340 = smul.u32 112, %s19
      %s341 = smul.u32 112, %s19
      %p342 = scmp.lt.s32.totalorder %s341, 223
      %s343 = scalar_select %p342, %s341, 223
      %s344 = smul.addr %s343, 8
      %s345 = scalar_lea.vmem %s2, %s344
      %s346 = smul.u32 112, %s19
      %s347 = smul.u32 14, %s19
      %p348 = scmp.lt.s32.totalorder %s347, 27
      %s349 = scalar_select %p348, %s347, 27
      %s350 = smul.addr %s349, 8
      %s351 = scalar_lea.vmem %s8, %s350
      %s352 = smul.u32 14, %s19
      %v354 = vld [vmem:[%s339] sm:$0xf]
      %v355 = vld [vmem:[%s339 + $0x4] sm:$0xf]
      %v356 = vld [vmem:[%s339 + $0x8] sm:$0xf]
      %v357 = vld [vmem:[%s339 + $0xc] sm:$0xf]
      %v358 = vld [vmem:[%s339 + $0x10] sm:$0xf]
      %v359 = vld [vmem:[%s339 + $0x14] sm:$0xf]
      %v360 = vld [vmem:[%s339 + $0x18] sm:$0xf]
      %v361 = vld [vmem:[%s339 + $0x1c] sm:$0xf]
      %v362 = vld [vmem:[%s339 + $0x20] sm:$0xf]
      %v363 = vld [vmem:[%s339 + $0x24] sm:$0xf]
      %v364 = vld [vmem:[%s339 + $0x28] sm:$0xf]
      %v365 = vld [vmem:[%s339 + $0x2c] sm:$0xf]
      %v366 = vld [vmem:[%s339 + $0x30] sm:$0xf]
      %v367 = vld [vmem:[%s339 + $0x34] sm:$0xf]
      %v368 = vld [vmem:[%s339 + $0x38] sm:$0xf]
      %v369 = vld [vmem:[%s339 + $0x3c] sm:$0xf]
      %v370 = vld [vmem:[%s339 + $0x40] sm:$0xf]
      %v371 = vld [vmem:[%s339 + $0x44] sm:$0xf]
      %v372 = vld [vmem:[%s339 + $0x48] sm:$0xf]
      %v373 = vld [vmem:[%s339 + $0x4c] sm:$0xf]
      %v374 = vld [vmem:[%s339 + $0x50] sm:$0xf]
      %v375 = vld [vmem:[%s339 + $0x54] sm:$0xf]
      %v376 = vld [vmem:[%s339 + $0x58] sm:$0xf]
      %v377 = vld [vmem:[%s339 + $0x5c] sm:$0xf]
      %v378 = vld [vmem:[%s339 + $0x60] sm:$0xf]
      %v379 = vld [vmem:[%s339 + $0x64] sm:$0xf]
      %v380 = vld [vmem:[%s339 + $0x68] sm:$0xf]
      %v381 = vld [vmem:[%s339 + $0x6c] sm:$0xf]
      %v382 = vld [vmem:[%s339 + $0x70] sm:$0xf]
      %v383 = vld [vmem:[%s339 + $0x74] sm:$0xf]
      %v384 = vld [vmem:[%s339 + $0x78] sm:$0xf]
      %v385 = vld [vmem:[%s339 + $0x7c] sm:$0xf]
      %v386 = vld [vmem:[%s339 + $0x80] sm:$0xf]
      %v387 = vld [vmem:[%s339 + $0x84] sm:$0xf]
      %v388 = vld [vmem:[%s339 + $0x88] sm:$0xf]
      %v389 = vld [vmem:[%s339 + $0x8c] sm:$0xf]
      %v390 = vld [vmem:[%s339 + $0x90] sm:$0xf]
      %v391 = vld [vmem:[%s339 + $0x94] sm:$0xf]
      %v392 = vld [vmem:[%s339 + $0x98] sm:$0xf]
      %v393 = vld [vmem:[%s339 + $0x9c] sm:$0xf]
      %v394 = vld [vmem:[%s339 + $0xa0] sm:$0xf]
      %v395 = vld [vmem:[%s339 + $0xa4] sm:$0xf]
      %v396 = vld [vmem:[%s339 + $0xa8] sm:$0xf]
      %v397 = vld [vmem:[%s339 + $0xac] sm:$0xf]
      %v398 = vld [vmem:[%s339 + $0xb0] sm:$0xf]
      %v399 = vld [vmem:[%s339 + $0xb4] sm:$0xf]
      %v400 = vld [vmem:[%s339 + $0xb8] sm:$0xf]
      %v401 = vld [vmem:[%s339 + $0xbc] sm:$0xf]
      %v402 = vld [vmem:[%s339 + $0xc0] sm:$0xf]
      %v403 = vld [vmem:[%s339 + $0xc4] sm:$0xf]
      %v404 = vld [vmem:[%s339 + $0xc8] sm:$0xf]
      %v405 = vld [vmem:[%s339 + $0xcc] sm:$0xf]
      %v406 = vld [vmem:[%s339 + $0xd0] sm:$0xf]
      %v407 = vld [vmem:[%s339 + $0xd4] sm:$0xf]
      %v408 = vld [vmem:[%s339 + $0xd8] sm:$0xf]
      %v409 = vld [vmem:[%s339 + $0xdc] sm:$0xf]
      %v410 = vld [vmem:[%s339 + $0xe0] sm:$0xf]
      %v411 = vld [vmem:[%s339 + $0xe4] sm:$0xf]
      %v412 = vld [vmem:[%s339 + $0xe8] sm:$0xf]
      %v413 = vld [vmem:[%s339 + $0xec] sm:$0xf]
      %v414 = vld [vmem:[%s339 + $0xf0] sm:$0xf]
      %v415 = vld [vmem:[%s339 + $0xf4] sm:$0xf]
      %v416 = vld [vmem:[%s339 + $0xf8] sm:$0xf]
      %v417 = vld [vmem:[%s339 + $0xfc] sm:$0xf]
      %v418 = vld [vmem:[%s339 + $0x100] sm:$0xf]
      %v419 = vld [vmem:[%s339 + $0x104] sm:$0xf]
      %v420 = vld [vmem:[%s339 + $0x108] sm:$0xf]
      %v421 = vld [vmem:[%s339 + $0x10c] sm:$0xf]
      %v422 = vld [vmem:[%s339 + $0x110] sm:$0xf]
      %v423 = vld [vmem:[%s339 + $0x114] sm:$0xf]
      %v424 = vld [vmem:[%s339 + $0x118] sm:$0xf]
      %v425 = vld [vmem:[%s339 + $0x11c] sm:$0xf]
      %v426 = vld [vmem:[%s339 + $0x120] sm:$0xf]
      %v427 = vld [vmem:[%s339 + $0x124] sm:$0xf]
      %v428 = vld [vmem:[%s339 + $0x128] sm:$0xf]
      %v429 = vld [vmem:[%s339 + $0x12c] sm:$0xf]
      %v430 = vld [vmem:[%s339 + $0x130] sm:$0xf]
      %v431 = vld [vmem:[%s339 + $0x134] sm:$0xf]
      %v432 = vld [vmem:[%s339 + $0x138] sm:$0xf]
      %v433 = vld [vmem:[%s339 + $0x13c] sm:$0xf]
      %v434 = vld [vmem:[%s339 + $0x140] sm:$0xf]
      %v435 = vld [vmem:[%s339 + $0x144] sm:$0xf]
      %v436 = vld [vmem:[%s339 + $0x148] sm:$0xf]
      %v437 = vld [vmem:[%s339 + $0x14c] sm:$0xf]
      %v438 = vld [vmem:[%s339 + $0x150] sm:$0xf]
      %v439 = vld [vmem:[%s339 + $0x154] sm:$0xf]
      %v440 = vld [vmem:[%s339 + $0x158] sm:$0xf]
      %v441 = vld [vmem:[%s339 + $0x15c] sm:$0xf]
      %v442 = vld [vmem:[%s339 + $0x160] sm:$0xf]
      %v443 = vld [vmem:[%s339 + $0x164] sm:$0xf]
      %v444 = vld [vmem:[%s339 + $0x168] sm:$0xf]
      %v445 = vld [vmem:[%s339 + $0x16c] sm:$0xf]
      %v446 = vld [vmem:[%s339 + $0x170] sm:$0xf]
      %v447 = vld [vmem:[%s339 + $0x174] sm:$0xf]
      %v448 = vld [vmem:[%s339 + $0x178] sm:$0xf]
      %v449 = vld [vmem:[%s339 + $0x17c] sm:$0xf]
      %v450 = vld [vmem:[%s339 + $0x180] sm:$0xf]
      %v451 = vld [vmem:[%s339 + $0x184] sm:$0xf]
      %v452 = vld [vmem:[%s339 + $0x188] sm:$0xf]
      %v453 = vld [vmem:[%s339 + $0x18c] sm:$0xf]
      %v454 = vld [vmem:[%s339 + $0x190] sm:$0xf]
      %v455 = vld [vmem:[%s339 + $0x194] sm:$0xf]
      %v456 = vld [vmem:[%s339 + $0x198] sm:$0xf]
      %v457 = vld [vmem:[%s339 + $0x19c] sm:$0xf]
      %v458 = vld [vmem:[%s339 + $0x1a0] sm:$0xf]
      %v459 = vld [vmem:[%s339 + $0x1a4] sm:$0xf]
      %v460 = vld [vmem:[%s339 + $0x1a8] sm:$0xf]
      %v461 = vld [vmem:[%s339 + $0x1ac] sm:$0xf]
      %v462 = vld [vmem:[%s339 + $0x1b0] sm:$0xf]
      %v463 = vld [vmem:[%s339 + $0x1b4] sm:$0xf]
      %v464 = vld [vmem:[%s339 + $0x1b8] sm:$0xf]
      %v465 = vld [vmem:[%s339 + $0x1bc] sm:$0xf]
      %v466 = vld [vmem:[%s3] sm:$0xf]
      %v467 = vld [vmem:[%s3 + $0x4] sm:$0xf]
      %v468 = vld [vmem:[%s3 + $0x8] sm:$0xf]
      %v469 = vld [vmem:[%s3 + $0xc] sm:$0xf]
      %v470 = vld [vmem:[%s4] sm:$0x1]
      %v472 = vlaneseq
      %v473 = vshrl.u32 %v472, 7
      %v474 = vsub.s32 0, %v473
      %v475 = vrot.slane %v470, %v474
      %v589 = vunpack.c.l.b16 %v354
      %v590 = vunpack.c.l.b16 %v355
      %v591 = vunpack.c.l.b16 %v356
      %v592 = vunpack.c.l.b16 %v357
      %v593 = vunpack.c.l.b16 %v358
      %v594 = vunpack.c.l.b16 %v359
      %v595 = vunpack.c.l.b16 %v360
      %v596 = vunpack.c.l.b16 %v361
      %v597 = vunpack.c.l.b16 %v362
      %v598 = vunpack.c.l.b16 %v363
      %v599 = vunpack.c.l.b16 %v364
      %v600 = vunpack.c.l.b16 %v365
      %v601 = vunpack.c.l.b16 %v366
      %v602 = vunpack.c.l.b16 %v367
      %v603 = vunpack.c.l.b16 %v368
      %v604 = vunpack.c.l.b16 %v369
      %v605 = vunpack.c.l.b16 %v370
      %v606 = vunpack.c.l.b16 %v371
      %v607 = vunpack.c.l.b16 %v372
      %v608 = vunpack.c.l.b16 %v373
      %v609 = vunpack.c.l.b16 %v374
      %v610 = vunpack.c.l.b16 %v375
      %v611 = vunpack.c.l.b16 %v376
      %v612 = vunpack.c.l.b16 %v377
      %v613 = vunpack.c.l.b16 %v378
      %v614 = vunpack.c.l.b16 %v379
      %v615 = vunpack.c.l.b16 %v380
      %v616 = vunpack.c.l.b16 %v381
      %v617 = vunpack.c.l.b16 %v382
      %v618 = vunpack.c.l.b16 %v383
      %v619 = vunpack.c.l.b16 %v384
      %v620 = vunpack.c.l.b16 %v385
      %v621 = vunpack.c.l.b16 %v386
      %v622 = vunpack.c.l.b16 %v387
      %v623 = vunpack.c.l.b16 %v388
      %v624 = vunpack.c.l.b16 %v389
      %v625 = vunpack.c.l.b16 %v390
      %v626 = vunpack.c.l.b16 %v391
      %v627 = vunpack.c.l.b16 %v392
      %v628 = vunpack.c.l.b16 %v393
      %v629 = vunpack.c.l.b16 %v394
      %v630 = vunpack.c.l.b16 %v395
      %v631 = vunpack.c.l.b16 %v396
      %v632 = vunpack.c.l.b16 %v397
      %v633 = vunpack.c.l.b16 %v398
      %v634 = vunpack.c.l.b16 %v399
      %v635 = vunpack.c.l.b16 %v400
      %v636 = vunpack.c.l.b16 %v401
      %v637 = vunpack.c.l.b16 %v402
      %v638 = vunpack.c.l.b16 %v403
      %v639 = vunpack.c.l.b16 %v404
      %v640 = vunpack.c.l.b16 %v405
      %v641 = vunpack.c.l.b16 %v406
      %v642 = vunpack.c.l.b16 %v407
      %v643 = vunpack.c.l.b16 %v408
      %v644 = vunpack.c.l.b16 %v409
      %v645 = vunpack.c.l.b16 %v410
      %v646 = vunpack.c.l.b16 %v411
      %v647 = vunpack.c.l.b16 %v412
      %v648 = vunpack.c.l.b16 %v413
      %v649 = vunpack.c.l.b16 %v414
      %v650 = vunpack.c.l.b16 %v415
      %v651 = vunpack.c.l.b16 %v416
      %v652 = vunpack.c.l.b16 %v417
      %v653 = vunpack.c.l.b16 %v418
      %v654 = vunpack.c.l.b16 %v419
      %v655 = vunpack.c.l.b16 %v420
      %v656 = vunpack.c.l.b16 %v421
      %v657 = vunpack.c.l.b16 %v422
      %v658 = vunpack.c.l.b16 %v423
      %v659 = vunpack.c.l.b16 %v424
      %v660 = vunpack.c.l.b16 %v425
      %v661 = vunpack.c.l.b16 %v426
      %v662 = vunpack.c.l.b16 %v427
      %v663 = vunpack.c.l.b16 %v428
      %v664 = vunpack.c.l.b16 %v429
      %v665 = vunpack.c.l.b16 %v430
      %v666 = vunpack.c.l.b16 %v431
      %v667 = vunpack.c.l.b16 %v432
      %v668 = vunpack.c.l.b16 %v433
      %v669 = vunpack.c.l.b16 %v434
      %v670 = vunpack.c.l.b16 %v435
      %v671 = vunpack.c.l.b16 %v436
      %v672 = vunpack.c.l.b16 %v437
      %v673 = vunpack.c.l.b16 %v438
      %v674 = vunpack.c.l.b16 %v439
      %v675 = vunpack.c.l.b16 %v440
      %v676 = vunpack.c.l.b16 %v441
      %v677 = vunpack.c.l.b16 %v442
      %v678 = vunpack.c.l.b16 %v443
      %v679 = vunpack.c.l.b16 %v444
      %v680 = vunpack.c.l.b16 %v445
      %v681 = vunpack.c.l.b16 %v446
      %v682 = vunpack.c.l.b16 %v447
      %v683 = vunpack.c.l.b16 %v448
      %v684 = vunpack.c.l.b16 %v449
      %v685 = vunpack.c.l.b16 %v450
      %v686 = vunpack.c.l.b16 %v451
      %v687 = vunpack.c.l.b16 %v452
      %v688 = vunpack.c.l.b16 %v453
      %v689 = vunpack.c.l.b16 %v454
      %v690 = vunpack.c.l.b16 %v455
      %v691 = vunpack.c.l.b16 %v456
      %v692 = vunpack.c.l.b16 %v457
      %v693 = vunpack.c.l.b16 %v458
      %v694 = vunpack.c.l.b16 %v459
      %v695 = vunpack.c.l.b16 %v460
      %v696 = vunpack.c.l.b16 %v461
      %v697 = vunpack.c.l.b16 %v462
      %v698 = vunpack.c.l.b16 %v463
      %v699 = vunpack.c.l.b16 %v464
      %v700 = vunpack.c.l.b16 %v465
      %v701 = vpack.c.b16 %v590, %v589
      %v702 = vpack.c.b16 %v592, %v591
      %v703 = vpack.c.b16 %v594, %v593
      %v704 = vpack.c.b16 %v596, %v595
      %v705 = vpack.c.b16 %v598, %v597
      %v706 = vpack.c.b16 %v600, %v599
      %v707 = vpack.c.b16 %v602, %v601
      %v708 = vpack.c.b16 %v604, %v603
      %v709 = vpack.c.b16 %v606, %v605
      %v710 = vpack.c.b16 %v608, %v607
      %v711 = vpack.c.b16 %v610, %v609
      %v712 = vpack.c.b16 %v612, %v611
      %v713 = vpack.c.b16 %v614, %v613
      %v714 = vpack.c.b16 %v616, %v615
      %v715 = vpack.c.b16 %v618, %v617
      %v716 = vpack.c.b16 %v620, %v619
      %v717 = vpack.c.b16 %v622, %v621
      %v718 = vpack.c.b16 %v624, %v623
      %v719 = vpack.c.b16 %v626, %v625
      %v720 = vpack.c.b16 %v628, %v627
      %v721 = vpack.c.b16 %v630, %v629
      %v722 = vpack.c.b16 %v632, %v631
      %v723 = vpack.c.b16 %v634, %v633
      %v724 = vpack.c.b16 %v636, %v635
      %v725 = vpack.c.b16 %v638, %v637
      %v726 = vpack.c.b16 %v640, %v639
      %v727 = vpack.c.b16 %v642, %v641
      %v728 = vpack.c.b16 %v644, %v643
      %v729 = vpack.c.b16 %v646, %v645
      %v730 = vpack.c.b16 %v648, %v647
      %v731 = vpack.c.b16 %v650, %v649
      %v732 = vpack.c.b16 %v652, %v651
      %v733 = vpack.c.b16 %v654, %v653
      %v734 = vpack.c.b16 %v656, %v655
      %v735 = vpack.c.b16 %v658, %v657
      %v736 = vpack.c.b16 %v660, %v659
      %v737 = vpack.c.b16 %v662, %v661
      %v738 = vpack.c.b16 %v664, %v663
      %v739 = vpack.c.b16 %v666, %v665
      %v740 = vpack.c.b16 %v668, %v667
      %v741 = vpack.c.b16 %v670, %v669
      %v742 = vpack.c.b16 %v672, %v671
      %v743 = vpack.c.b16 %v674, %v673
      %v744 = vpack.c.b16 %v676, %v675
      %v745 = vpack.c.b16 %v678, %v677
      %v746 = vpack.c.b16 %v680, %v679
      %v747 = vpack.c.b16 %v682, %v681
      %v748 = vpack.c.b16 %v684, %v683
      %v749 = vpack.c.b16 %v686, %v685
      %v750 = vpack.c.b16 %v688, %v687
      %v751 = vpack.c.b16 %v690, %v689
      %v752 = vpack.c.b16 %v692, %v691
      %v753 = vpack.c.b16 %v694, %v693
      %v754 = vpack.c.b16 %v696, %v695
      %v755 = vpack.c.b16 %v698, %v697
      %v756 = vpack.c.b16 %v700, %v699
      %v761 = vunpack.c.l.b16 %v466
      %v762 = vunpack.c.l.b16 %v467
      %v763 = vunpack.c.l.b16 %v468
      %v764 = vunpack.c.l.b16 %v469
      %v765 = vpack.c.b16 %v762, %v761
      %v766 = vpack.c.b16 %v764, %v763
      %vm769 = vcmask 261120
      %v771 = vsel %vm769, %v701, 0
      %v774 = vsel %vm769, %v702, 0
      %v777 = vsel %vm769, %v703, 0
      %v780 = vsel %vm769, %v704, 0
      %v783 = vsel %vm769, %v705, 0
      %v786 = vsel %vm769, %v706, 0
      %v789 = vsel %vm769, %v707, 0
      %v792 = vsel %vm769, %v708, 0
      %v795 = vsel %vm769, %v709, 0
      %v798 = vsel %vm769, %v710, 0
      %v801 = vsel %vm769, %v711, 0
      %v804 = vsel %vm769, %v712, 0
      %v807 = vsel %vm769, %v713, 0
      %v810 = vsel %vm769, %v714, 0
      %v813 = vsel %vm769, %v715, 0
      %v816 = vsel %vm769, %v716, 0
      %v819 = vsel %vm769, %v717, 0
      %v822 = vsel %vm769, %v718, 0
      %v825 = vsel %vm769, %v719, 0
      %v828 = vsel %vm769, %v720, 0
      %v831 = vsel %vm769, %v721, 0
      %v834 = vsel %vm769, %v722, 0
      %v837 = vsel %vm769, %v723, 0
      %v840 = vsel %vm769, %v724, 0
      %v843 = vsel %vm769, %v725, 0
      %v846 = vsel %vm769, %v726, 0
      %v849 = vsel %vm769, %v727, 0
      %v852 = vsel %vm769, %v728, 0
      %v855 = vsel %vm769, %v729, 0
      %v858 = vsel %vm769, %v730, 0
      %v861 = vsel %vm769, %v731, 0
      %v864 = vsel %vm769, %v732, 0
      %v867 = vsel %vm769, %v733, 0
      %v870 = vsel %vm769, %v734, 0
      %v873 = vsel %vm769, %v735, 0
      %v876 = vsel %vm769, %v736, 0
      %v879 = vsel %vm769, %v737, 0
      %v882 = vsel %vm769, %v738, 0
      %v885 = vsel %vm769, %v739, 0
      %v888 = vsel %vm769, %v740, 0
      %v891 = vsel %vm769, %v741, 0
      %v894 = vsel %vm769, %v742, 0
      %v897 = vsel %vm769, %v743, 0
      %v900 = vsel %vm769, %v744, 0
      %v903 = vsel %vm769, %v745, 0
      %v906 = vsel %vm769, %v746, 0
      %v909 = vsel %vm769, %v747, 0
      %v912 = vsel %vm769, %v748, 0
      %v915 = vsel %vm769, %v749, 0
      %v918 = vsel %vm769, %v750, 0
      %v921 = vsel %vm769, %v751, 0
      %v924 = vsel %vm769, %v752, 0
      %v927 = vsel %vm769, %v753, 0
      %v930 = vsel %vm769, %v754, 0
      %v933 = vsel %vm769, %v755, 0
      %v936 = vsel %vm769, %v756, 0
      %938 = vmatprep.subr.bf16.mxu0 0
      %939 = vmatpush1.bf16.msra.mxu0 %v765
      %940 = vmatprep.subr.bf16.mxu0 0
      %941 = vmatpush1.bf16.msra.mxu0 %v766
      %942 = vmatprep.subr.bf16.mxu0 0
      %943 = vmatpush1.bf16.msra.mxu0 0
      %944 = vmatprep.subr.bf16.mxu0 0
      %945 = vmatpush1.bf16.msra.mxu0 0
      %946 = vmatprep.subr.bf16.mxu0 0
      %947 = vmatpush1.bf16.msra.mxu0 0
      %948 = vmatprep.subr.bf16.mxu0 0
      %949 = vmatpush1.bf16.msra.mxu0 0
      %950 = vmatprep.subr.bf16.mxu0 0
      %951 = vmatpush1.bf16.msra.mxu0 0
      %952 = vmatprep.subr.bf16.mxu0 0
      %953 = vmatpush1.bf16.msra.mxu0 0
      %954 = vmatprep.subr.bf16.mxu0 0
      %955 = vmatpush1.bf16.msra.mxu0 0
      %956 = vmatprep.subr.bf16.mxu0 0
      %957 = vmatpush1.bf16.msra.mxu0 0
      %958 = vmatprep.subr.bf16.mxu0 0
      %959 = vmatpush1.bf16.msra.mxu0 0
      %960 = vmatprep.subr.bf16.mxu0 0
      %961 = vmatpush1.bf16.msra.mxu0 0
      %962 = vmatprep.subr.bf16.mxu0 0
      %963 = vmatpush1.bf16.msra.mxu0 0
      %964 = vmatprep.subr.bf16.mxu0 0
      %965 = vmatpush1.bf16.msra.mxu0 0
      %966 = vmatprep.subr.bf16.mxu0 0
      %967 = vmatpush1.bf16.msra.mxu0 0
      %968 = vmatprep.subr.bf16.mxu0 0
      %969 = vmatpush1.bf16.msra.mxu0 0
      %970 = vmatprep.mubr.bf16.mxu0 0
      %971 = vmatmul.mubr.bf16.gmra.mrb[0].mxu0 %v771
      %v972 = vpop.f32.mrb[0].mxu0
      %v973 = vadd.f32 %v475, %v972
      %v974 = vpop.f32.mrb[0].mxu0
      %v975 = vpop.f32.mrb[0].mxu0
      %v976 = vadd.f32 %v475, %v975
      %v977 = vpop.f32.mrb[0].mxu0
      %978 = vmatprep.mubr.bf16.mxu0 0
      %979 = vmatmul.mubr.bf16.gmra.mrb[0].mxu0 %v774
      %v980 = vpop.f32.mrb[0].mxu0
      %v981 = vadd.f32 %v475, %v980
      %v982 = vpop.f32.mrb[0].mxu0
      %v983 = vpop.f32.mrb[0].mxu0
      %v984 = vadd.f32 %v475, %v983
      %v985 = vpop.f32.mrb[0].mxu0
      %986 = vmatprep.mubr.bf16.mxu0 0
      %987 = vmatmul.mubr.bf16.gmra.mrb[0].mxu0 %v777
      %v988 = vpop.f32.mrb[0].mxu0
      %v989 = vadd.f32 %v475, %v988
      %v990 = vpop.f32.mrb[0].mxu0
      %v991 = vpop.f32.mrb[0].mxu0
      %v992 = vadd.f32 %v475, %v991
      %v993 = vpop.f32.mrb[0].mxu0
      %994 = vmatprep.mubr.bf16.mxu0 0
      %995 = vmatmul.mubr.bf16.gmra.mrb[0].mxu0 %v780
      %v996 = vpop.f32.mrb[0].mxu0
      %v997 = vadd.f32 %v475, %v996
      %v998 = vpop.f32.mrb[0].mxu0
      %v999 = vpop.f32.mrb[0].mxu0
      %v1000 = vadd.f32 %v475, %v999
      %v1001 = vpop.f32.mrb[0].mxu0
      %1002 = vmatprep.mubr.bf16.mxu0 0
      %1003 = vmatmul.mubr.bf16.gmra.mrb[0].mxu0 %v783
      %v1004 = vpop.f32.mrb[0].mxu0
      %v1005 = vadd.f32 %v475, %v1004
      %v1006 = vpop.f32.mrb[0].mxu0
      %v1007 = vpop.f32.mrb[0].mxu0
      %v1008 = vadd.f32 %v475, %v1007
      %v1009 = vpop.f32.mrb[0].mxu0
      %1010 = vmatprep.mubr.bf16.mxu0 0
      %1011 = vmatmul.mubr.bf16.gmra.mrb[0].mxu0 %v786
      %v1012 = vpop.f32.mrb[0].mxu0
      %v1013 = vadd.f32 %v475, %v1012
      %v1014 = vpop.f32.mrb[0].mxu0
      %v1015 = vpop.f32.mrb[0].mxu0
      %v1016 = vadd.f32 %v475, %v1015
      %v1017 = vpop.f32.mrb[0].mxu0
      %1018 = vmatprep.mubr.bf16.mxu0 0
      %1019 = vmatmul.mubr.bf16.gmra.mrb[0].mxu0 %v789
      %v1020 = vpop.f32.mrb[0].mxu0
      %v1021 = vadd.f32 %v475, %v1020
      %v1022 = vpop.f32.mrb[0].mxu0
      %v1023 = vpop.f32.mrb[0].mxu0
      %v1024 = vadd.f32 %v475, %v1023
      %v1025 = vpop.f32.mrb[0].mxu0
      %1026 = vmatprep.mubr.bf16.mxu0 0
      %1027 = vmatmul.mubr.bf16.gmra.mrb[0].mxu0 %v792
      %v1028 = vpop.f32.mrb[0].mxu0
      %v1029 = vadd.f32 %v475, %v1028
      %v1030 = vpop.f32.mrb[0].mxu0
      %v1031 = vpop.f32.mrb[0].mxu0
      %v1032 = vadd.f32 %v475, %v1031
      %v1033 = vpop.f32.mrb[0].mxu0
      %1034 = vmatprep.mubr.bf16.mxu0 0
      %1035 = vmatmul.mubr.bf16.gmra.mrb[0].mxu0 %v795
      %v1036 = vpop.f32.mrb[0].mxu0
      %v1037 = vadd.f32 %v475, %v1036
      %v1038 = vpop.f32.mrb[0].mxu0
      %v1039 = vpop.f32.mrb[0].mxu0
      %v1040 = vadd.f32 %v475, %v1039
      %v1041 = vpop.f32.mrb[0].mxu0
      %1042 = vmatprep.mubr.bf16.mxu0 0
      %1043 = vmatmul.mubr.bf16.gmra.mrb[0].mxu0 %v798
      %v1044 = vpop.f32.mrb[0].mxu0
      %v1045 = vadd.f32 %v475, %v1044
      %v1046 = vpop.f32.mrb[0].mxu0
      %v1047 = vpop.f32.mrb[0].mxu0
      %v1048 = vadd.f32 %v475, %v1047
      %v1049 = vpop.f32.mrb[0].mxu0
      %1050 = vmatprep.mubr.bf16.mxu0 0
      %1051 = vmatmul.mubr.bf16.gmra.mrb[0].mxu0 %v801
      %v1052 = vpop.f32.mrb[0].mxu0
      %v1053 = vadd.f32 %v475, %v1052
      %v1054 = vpop.f32.mrb[0].mxu0
      %v1055 = vpop.f32.mrb[0].mxu0
      %v1056 = vadd.f32 %v475, %v1055
      %v1057 = vpop.f32.mrb[0].mxu0
      %1058 = vmatprep.mubr.bf16.mxu0 0
      %1059 = vmatmul.mubr.bf16.gmra.mrb[0].mxu0 %v804
      %v1060 = vpop.f32.mrb[0].mxu0
      %v1061 = vadd.f32 %v475, %v1060
      %v1062 = vpop.f32.mrb[0].mxu0
      %v1063 = vpop.f32.mrb[0].mxu0
      %v1064 = vadd.f32 %v475, %v1063
      %v1065 = vpop.f32.mrb[0].mxu0
      %1066 = vmatprep.mubr.bf16.mxu0 0
      %1067 = vmatmul.mubr.bf16.gmra.mrb[0].mxu0 %v807
      %v1068 = vpop.f32.mrb[0].mxu0
      %v1069 = vadd.f32 %v475, %v1068
      %v1070 = vpop.f32.mrb[0].mxu0
      %v1071 = vpop.f32.mrb[0].mxu0
      %v1072 = vadd.f32 %v475, %v1071
      %v1073 = vpop.f32.mrb[0].mxu0
      %1074 = vmatprep.mubr.bf16.mxu0 0
      %1075 = vmatmul.mubr.bf16.gmra.mrb[0].mxu0 %v810
      %v1076 = vpop.f32.mrb[0].mxu0
      %v1077 = vadd.f32 %v475, %v1076
      %v1078 = vpop.f32.mrb[0].mxu0
      %v1079 = vpop.f32.mrb[0].mxu0
      %v1080 = vadd.f32 %v475, %v1079
      %v1081 = vpop.f32.mrb[0].mxu0
      %1082 = vmatprep.mubr.bf16.mxu0 0
      %1083 = vmatmul.mubr.bf16.gmra.mrb[0].mxu0 %v813
      %v1084 = vpop.f32.mrb[0].mxu0
      %v1085 = vadd.f32 %v475, %v1084
      %v1086 = vpop.f32.mrb[0].mxu0
      %v1087 = vpop.f32.mrb[0].mxu0
      %v1088 = vadd.f32 %v475, %v1087
      %v1089 = vpop.f32.mrb[0].mxu0
      %1090 = vmatprep.mubr.bf16.mxu0 0
      %1091 = vmatmul.mubr.bf16.gmra.mrb[0].mxu0 %v816
      %v1092 = vpop.f32.mrb[0].mxu0
      %v1093 = vadd.f32 %v475, %v1092
      %v1094 = vpop.f32.mrb[0].mxu0
      %v1095 = vpop.f32.mrb[0].mxu0
      %v1096 = vadd.f32 %v475, %v1095
      %v1097 = vpop.f32.mrb[0].mxu0
      %1098 = vmatprep.mubr.bf16.mxu0 0
      %1099 = vmatmul.mubr.bf16.gmra.mrb[0].mxu0 %v819
      %v1100 = vpop.f32.mrb[0].mxu0
      %v1101 = vadd.f32 %v475, %v1100
      %v1102 = vpop.f32.mrb[0].mxu0
      %v1103 = vpop.f32.mrb[0].mxu0
      %v1104 = vadd.f32 %v475, %v1103
      %v1105 = vpop.f32.mrb[0].mxu0
      %1106 = vmatprep.mubr.bf16.mxu0 0
      %1107 = vmatmul.mubr.bf16.gmra.mrb[0].mxu0 %v822
      %v1108 = vpop.f32.mrb[0].mxu0
      %v1109 = vadd.f32 %v475, %v1108
      %v1110 = vpop.f32.mrb[0].mxu0
      %v1111 = vpop.f32.mrb[0].mxu0
      %v1112 = vadd.f32 %v475, %v1111
      %v1113 = vpop.f32.mrb[0].mxu0
      %1114 = vmatprep.mubr.bf16.mxu0 0
      %1115 = vmatmul.mubr.bf16.gmra.mrb[0].mxu0 %v825
      %v1116 = vpop.f32.mrb[0].mxu0
      %v1117 = vadd.f32 %v475, %v1116
      %v1118 = vpop.f32.mrb[0].mxu0
      %v1119 = vpop.f32.mrb[0].mxu0
      %v1120 = vadd.f32 %v475, %v1119
      %v1121 = vpop.f32.mrb[0].mxu0
      %1122 = vmatprep.mubr.bf16.mxu0 0
      %1123 = vmatmul.mubr.bf16.gmra.mrb[0].mxu0 %v828
      %v1124 = vpop.f32.mrb[0].mxu0
      %v1125 = vadd.f32 %v475, %v1124
      %v1126 = vpop.f32.mrb[0].mxu0
      %v1127 = vpop.f32.mrb[0].mxu0
      %v1128 = vadd.f32 %v475, %v1127
      %v1129 = vpop.f32.mrb[0].mxu0
      %1130 = vmatprep.mubr.bf16.mxu0 0
      %1131 = vmatmul.mubr.bf16.gmra.mrb[0].mxu0 %v831
      %v1132 = vpop.f32.mrb[0].mxu0
      %v1133 = vadd.f32 %v475, %v1132
      %v1134 = vpop.f32.mrb[0].mxu0
      %v1135 = vpop.f32.mrb[0].mxu0
      %v1136 = vadd.f32 %v475, %v1135
      %v1137 = vpop.f32.mrb[0].mxu0
      %1138 = vmatprep.mubr.bf16.mxu0 0
      %1139 = vmatmul.mubr.bf16.gmra.mrb[0].mxu0 %v834
      %v1140 = vpop.f32.mrb[0].mxu0
      %v1141 = vadd.f32 %v475, %v1140
      %v1142 = vpop.f32.mrb[0].mxu0
      %v1143 = vpop.f32.mrb[0].mxu0
      %v1144 = vadd.f32 %v475, %v1143
      %v1145 = vpop.f32.mrb[0].mxu0
      %1146 = vmatprep.mubr.bf16.mxu0 0
      %1147 = vmatmul.mubr.bf16.gmra.mrb[0].mxu0 %v837
      %v1148 = vpop.f32.mrb[0].mxu0
      %v1149 = vadd.f32 %v475, %v1148
      %v1150 = vpop.f32.mrb[0].mxu0
      %v1151 = vpop.f32.mrb[0].mxu0
      %v1152 = vadd.f32 %v475, %v1151
      %v1153 = vpop.f32.mrb[0].mxu0
      %1154 = vmatprep.mubr.bf16.mxu0 0
      %1155 = vmatmul.mubr.bf16.gmra.mrb[0].mxu0 %v840
      %v1156 = vpop.f32.mrb[0].mxu0
      %v1157 = vadd.f32 %v475, %v1156
      %v1158 = vpop.f32.mrb[0].mxu0
      %v1159 = vpop.f32.mrb[0].mxu0
      %v1160 = vadd.f32 %v475, %v1159
      %v1161 = vpop.f32.mrb[0].mxu0
      %1162 = vmatprep.mubr.bf16.mxu0 0
      %1163 = vmatmul.mubr.bf16.gmra.mrb[0].mxu0 %v843
      %v1164 = vpop.f32.mrb[0].mxu0
      %v1165 = vadd.f32 %v475, %v1164
      %v1166 = vpop.f32.mrb[0].mxu0
      %v1167 = vpop.f32.mrb[0].mxu0
      %v1168 = vadd.f32 %v475, %v1167
      %v1169 = vpop.f32.mrb[0].mxu0
      %1170 = vmatprep.mubr.bf16.mxu0 0
      %1171 = vmatmul.mubr.bf16.gmra.mrb[0].mxu0 %v846
      %v1172 = vpop.f32.mrb[0].mxu0
      %v1173 = vadd.f32 %v475, %v1172
      %v1174 = vpop.f32.mrb[0].mxu0
      %v1175 = vpop.f32.mrb[0].mxu0
      %v1176 = vadd.f32 %v475, %v1175
      %v1177 = vpop.f32.mrb[0].mxu0
      %1178 = vmatprep.mubr.bf16.mxu0 0
      %1179 = vmatmul.mubr.bf16.gmra.mrb[0].mxu0 %v849
      %v1180 = vpop.f32.mrb[0].mxu0
      %v1181 = vadd.f32 %v475, %v1180
      %v1182 = vpop.f32.mrb[0].mxu0
      %v1183 = vpop.f32.mrb[0].mxu0
      %v1184 = vadd.f32 %v475, %v1183
      %v1185 = vpop.f32.mrb[0].mxu0
      %1186 = vmatprep.mubr.bf16.mxu0 0
      %1187 = vmatmul.mubr.bf16.gmra.mrb[0].mxu0 %v852
      %v1188 = vpop.f32.mrb[0].mxu0
      %v1189 = vadd.f32 %v475, %v1188
      %v1190 = vpop.f32.mrb[0].mxu0
      %v1191 = vpop.f32.mrb[0].mxu0
      %v1192 = vadd.f32 %v475, %v1191
      %v1193 = vpop.f32.mrb[0].mxu0
      %1194 = vmatprep.mubr.bf16.mxu0 0
      %1195 = vmatmul.mubr.bf16.gmra.mrb[0].mxu0 %v855
      %v1196 = vpop.f32.mrb[0].mxu0
      %v1197 = vadd.f32 %v475, %v1196
      %v1198 = vpop.f32.mrb[0].mxu0
      %v1199 = vpop.f32.mrb[0].mxu0
      %v1200 = vadd.f32 %v475, %v1199
      %v1201 = vpop.f32.mrb[0].mxu0
      %1202 = vmatprep.mubr.bf16.mxu0 0
      %1203 = vmatmul.mubr.bf16.gmra.mrb[0].mxu0 %v858
      %v1204 = vpop.f32.mrb[0].mxu0
      %v1205 = vadd.f32 %v475, %v1204
      %v1206 = vpop.f32.mrb[0].mxu0
      %v1207 = vpop.f32.mrb[0].mxu0
      %v1208 = vadd.f32 %v475, %v1207
      %v1209 = vpop.f32.mrb[0].mxu0
      %1210 = vmatprep.mubr.bf16.mxu0 0
      %1211 = vmatmul.mubr.bf16.gmra.mrb[0].mxu0 %v861
      %v1212 = vpop.f32.mrb[0].mxu0
      %v1213 = vadd.f32 %v475, %v1212
      %v1214 = vpop.f32.mrb[0].mxu0
      %v1215 = vpop.f32.mrb[0].mxu0
      %v1216 = vadd.f32 %v475, %v1215
      %v1217 = vpop.f32.mrb[0].mxu0
      %1218 = vmatprep.mubr.bf16.mxu0 0
      %1219 = vmatmul.mubr.bf16.gmra.mrb[0].mxu0 %v864
      %v1220 = vpop.f32.mrb[0].mxu0
      %v1221 = vadd.f32 %v475, %v1220
      %v1222 = vpop.f32.mrb[0].mxu0
      %v1223 = vpop.f32.mrb[0].mxu0
      %v1224 = vadd.f32 %v475, %v1223
      %v1225 = vpop.f32.mrb[0].mxu0
      %1226 = vmatprep.mubr.bf16.mxu0 0
      %1227 = vmatmul.mubr.bf16.gmra.mrb[0].mxu0 %v867
      %v1228 = vpop.f32.mrb[0].mxu0
      %v1229 = vadd.f32 %v475, %v1228
      %v1230 = vpop.f32.mrb[0].mxu0
      %v1231 = vpop.f32.mrb[0].mxu0
      %v1232 = vadd.f32 %v475, %v1231
      %v1233 = vpop.f32.mrb[0].mxu0
      %1234 = vmatprep.mubr.bf16.mxu0 0
      %1235 = vmatmul.mubr.bf16.gmra.mrb[0].mxu0 %v870
      %v1236 = vpop.f32.mrb[0].mxu0
      %v1237 = vadd.f32 %v475, %v1236
      %v1238 = vpop.f32.mrb[0].mxu0
      %v1239 = vpop.f32.mrb[0].mxu0
      %v1240 = vadd.f32 %v475, %v1239
      %v1241 = vpop.f32.mrb[0].mxu0
      %1242 = vmatprep.mubr.bf16.mxu0 0
      %1243 = vmatmul.mubr.bf16.gmra.mrb[0].mxu0 %v873
      %v1244 = vpop.f32.mrb[0].mxu0
      %v1245 = vadd.f32 %v475, %v1244
      %v1246 = vpop.f32.mrb[0].mxu0
      %v1247 = vpop.f32.mrb[0].mxu0
      %v1248 = vadd.f32 %v475, %v1247
      %v1249 = vpop.f32.mrb[0].mxu0
      %1250 = vmatprep.mubr.bf16.mxu0 0
      %1251 = vmatmul.mubr.bf16.gmra.mrb[0].mxu0 %v876
      %v1252 = vpop.f32.mrb[0].mxu0
      %v1253 = vadd.f32 %v475, %v1252
      %v1254 = vpop.f32.mrb[0].mxu0
      %v1255 = vpop.f32.mrb[0].mxu0
      %v1256 = vadd.f32 %v475, %v1255
      %v1257 = vpop.f32.mrb[0].mxu0
      %1258 = vmatprep.mubr.bf16.mxu0 0
      %1259 = vmatmul.mubr.bf16.gmra.mrb[0].mxu0 %v879
      %v1260 = vpop.f32.mrb[0].mxu0
      %v1261 = vadd.f32 %v475, %v1260
      %v1262 = vpop.f32.mrb[0].mxu0
      %v1263 = vpop.f32.mrb[0].mxu0
      %v1264 = vadd.f32 %v475, %v1263
      %v1265 = vpop.f32.mrb[0].mxu0
      %1266 = vmatprep.mubr.bf16.mxu0 0
      %1267 = vmatmul.mubr.bf16.gmra.mrb[0].mxu0 %v882
      %v1268 = vpop.f32.mrb[0].mxu0
      %v1269 = vadd.f32 %v475, %v1268
      %v1270 = vpop.f32.mrb[0].mxu0
      %v1271 = vpop.f32.mrb[0].mxu0
      %v1272 = vadd.f32 %v475, %v1271
      %v1273 = vpop.f32.mrb[0].mxu0
      %1274 = vmatprep.mubr.bf16.mxu0 0
      %1275 = vmatmul.mubr.bf16.gmra.mrb[0].mxu0 %v885
      %v1276 = vpop.f32.mrb[0].mxu0
      %v1277 = vadd.f32 %v475, %v1276
      %v1278 = vpop.f32.mrb[0].mxu0
      %v1279 = vpop.f32.mrb[0].mxu0
      %v1280 = vadd.f32 %v475, %v1279
      %v1281 = vpop.f32.mrb[0].mxu0
      %1282 = vmatprep.mubr.bf16.mxu0 0
      %1283 = vmatmul.mubr.bf16.gmra.mrb[0].mxu0 %v888
      %v1284 = vpop.f32.mrb[0].mxu0
      %v1285 = vadd.f32 %v475, %v1284
      %v1286 = vpop.f32.mrb[0].mxu0
      %v1287 = vpop.f32.mrb[0].mxu0
      %v1288 = vadd.f32 %v475, %v1287
      %v1289 = vpop.f32.mrb[0].mxu0
      %1290 = vmatprep.mubr.bf16.mxu0 0
      %1291 = vmatmul.mubr.bf16.gmra.mrb[0].mxu0 %v891
      %v1292 = vpop.f32.mrb[0].mxu0
      %v1293 = vadd.f32 %v475, %v1292
      %v1294 = vpop.f32.mrb[0].mxu0
      %v1295 = vpop.f32.mrb[0].mxu0
      %v1296 = vadd.f32 %v475, %v1295
      %v1297 = vpop.f32.mrb[0].mxu0
      %1298 = vmatprep.mubr.bf16.mxu0 0
      %1299 = vmatmul.mubr.bf16.gmra.mrb[0].mxu0 %v894
      %v1300 = vpop.f32.mrb[0].mxu0
      %v1301 = vadd.f32 %v475, %v1300
      %v1302 = vpop.f32.mrb[0].mxu0
      %v1303 = vpop.f32.mrb[0].mxu0
      %v1304 = vadd.f32 %v475, %v1303
      %v1305 = vpop.f32.mrb[0].mxu0
      %1306 = vmatprep.mubr.bf16.mxu0 0
      %1307 = vmatmul.mubr.bf16.gmra.mrb[0].mxu0 %v897
      %v1308 = vpop.f32.mrb[0].mxu0
      %v1309 = vadd.f32 %v475, %v1308
      %v1310 = vpop.f32.mrb[0].mxu0
      %v1311 = vpop.f32.mrb[0].mxu0
      %v1312 = vadd.f32 %v475, %v1311
      %v1313 = vpop.f32.mrb[0].mxu0
      %1314 = vmatprep.mubr.bf16.mxu0 0
      %1315 = vmatmul.mubr.bf16.gmra.mrb[0].mxu0 %v900
      %v1316 = vpop.f32.mrb[0].mxu0
      %v1317 = vadd.f32 %v475, %v1316
      %v1318 = vpop.f32.mrb[0].mxu0
      %v1319 = vpop.f32.mrb[0].mxu0
      %v1320 = vadd.f32 %v475, %v1319
      %v1321 = vpop.f32.mrb[0].mxu0
      %1322 = vmatprep.mubr.bf16.mxu0 0
      %1323 = vmatmul.mubr.bf16.gmra.mrb[0].mxu0 %v903
      %v1324 = vpop.f32.mrb[0].mxu0
      %v1325 = vadd.f32 %v475, %v1324
      %v1326 = vpop.f32.mrb[0].mxu0
      %v1327 = vpop.f32.mrb[0].mxu0
      %v1328 = vadd.f32 %v475, %v1327
      %v1329 = vpop.f32.mrb[0].mxu0
      %1330 = vmatprep.mubr.bf16.mxu0 0
      %1331 = vmatmul.mubr.bf16.gmra.mrb[0].mxu0 %v906
      %v1332 = vpop.f32.mrb[0].mxu0
      %v1333 = vadd.f32 %v475, %v1332
      %v1334 = vpop.f32.mrb[0].mxu0
      %v1335 = vpop.f32.mrb[0].mxu0
      %v1336 = vadd.f32 %v475, %v1335
      %v1337 = vpop.f32.mrb[0].mxu0
      %1338 = vmatprep.mubr.bf16.mxu0 0
      %1339 = vmatmul.mubr.bf16.gmra.mrb[0].mxu0 %v909
      %v1340 = vpop.f32.mrb[0].mxu0
      %v1341 = vadd.f32 %v475, %v1340
      %v1342 = vpop.f32.mrb[0].mxu0
      %v1343 = vpop.f32.mrb[0].mxu0
      %v1344 = vadd.f32 %v475, %v1343
      %v1345 = vpop.f32.mrb[0].mxu0
      %1346 = vmatprep.mubr.bf16.mxu0 0
      %1347 = vmatmul.mubr.bf16.gmra.mrb[0].mxu0 %v912
      %v1348 = vpop.f32.mrb[0].mxu0
      %v1349 = vadd.f32 %v475, %v1348
      %v1350 = vpop.f32.mrb[0].mxu0
      %v1351 = vpop.f32.mrb[0].mxu0
      %v1352 = vadd.f32 %v475, %v1351
      %v1353 = vpop.f32.mrb[0].mxu0
      %1354 = vmatprep.mubr.bf16.mxu0 0
      %1355 = vmatmul.mubr.bf16.gmra.mrb[0].mxu0 %v915
      %v1356 = vpop.f32.mrb[0].mxu0
      %v1357 = vadd.f32 %v475, %v1356
      %v1358 = vpop.f32.mrb[0].mxu0
      %v1359 = vpop.f32.mrb[0].mxu0
      %v1360 = vadd.f32 %v475, %v1359
      %v1361 = vpop.f32.mrb[0].mxu0
      %1362 = vmatprep.mubr.bf16.mxu0 0
      %1363 = vmatmul.mubr.bf16.gmra.mrb[0].mxu0 %v918
      %v1364 = vpop.f32.mrb[0].mxu0
      %v1365 = vadd.f32 %v475, %v1364
      %v1366 = vpop.f32.mrb[0].mxu0
      %v1367 = vpop.f32.mrb[0].mxu0
      %v1368 = vadd.f32 %v475, %v1367
      %v1369 = vpop.f32.mrb[0].mxu0
      %1370 = vmatprep.mubr.bf16.mxu0 0
      %1371 = vmatmul.mubr.bf16.gmra.mrb[0].mxu0 %v921
      %v1372 = vpop.f32.mrb[0].mxu0
      %v1373 = vadd.f32 %v475, %v1372
      %v1374 = vpop.f32.mrb[0].mxu0
      %v1375 = vpop.f32.mrb[0].mxu0
      %v1376 = vadd.f32 %v475, %v1375
      %v1377 = vpop.f32.mrb[0].mxu0
      %1378 = vmatprep.mubr.bf16.mxu0 0
      %1379 = vmatmul.mubr.bf16.gmra.mrb[0].mxu0 %v924
      %v1380 = vpop.f32.mrb[0].mxu0
      %v1381 = vadd.f32 %v475, %v1380
      %v1382 = vpop.f32.mrb[0].mxu0
      %v1383 = vpop.f32.mrb[0].mxu0
      %v1384 = vadd.f32 %v475, %v1383
      %v1385 = vpop.f32.mrb[0].mxu0
      %1386 = vmatprep.mubr.bf16.mxu0 0
      %1387 = vmatmul.mubr.bf16.gmra.mrb[0].mxu0 %v927
      %v1388 = vpop.f32.mrb[0].mxu0
      %v1389 = vadd.f32 %v475, %v1388
      %v1390 = vpop.f32.mrb[0].mxu0
      %v1391 = vpop.f32.mrb[0].mxu0
      %v1392 = vadd.f32 %v475, %v1391
      %v1393 = vpop.f32.mrb[0].mxu0
      %1394 = vmatprep.mubr.bf16.mxu0 0
      %1395 = vmatmul.mubr.bf16.gmra.mrb[0].mxu0 %v930
      %v1396 = vpop.f32.mrb[0].mxu0
      %v1397 = vadd.f32 %v475, %v1396
      %v1398 = vpop.f32.mrb[0].mxu0
      %v1399 = vpop.f32.mrb[0].mxu0
      %v1400 = vadd.f32 %v475, %v1399
      %v1401 = vpop.f32.mrb[0].mxu0
      %1402 = vmatprep.mubr.bf16.mxu0 0
      %1403 = vmatmul.mubr.bf16.gmra.mrb[0].mxu0 %v933
      %v1404 = vpop.f32.mrb[0].mxu0
      %v1405 = vadd.f32 %v475, %v1404
      %v1406 = vpop.f32.mrb[0].mxu0
      %v1407 = vpop.f32.mrb[0].mxu0
      %v1408 = vadd.f32 %v475, %v1407
      %v1409 = vpop.f32.mrb[0].mxu0
      %1410 = vmatprep.mubr.bf16.mxu0 0
      %1411 = vmatmul.mubr.bf16.gmra.mrb[0].mxu0 %v936
      %v1412 = vpop.f32.mrb[0].mxu0
      %v1413 = vadd.f32 %v475, %v1412
      %v1414 = vpop.f32.mrb[0].mxu0
      %v1415 = vpop.f32.mrb[0].mxu0
      %v1416 = vadd.f32 %v475, %v1415
      %v1417 = vpop.f32.mrb[0].mxu0
      %1418 = vdwg.mxu0
      %v1419 = vmax.f32 %v973, 0.0
      %v1420 = vmax.f32 %v976, 0.0
      %v1421 = vmax.f32 %v981, 0.0
      %v1422 = vmax.f32 %v984, 0.0
      %v1423 = vmax.f32 %v989, 0.0
      %v1424 = vmax.f32 %v992, 0.0
      %v1425 = vmax.f32 %v997, 0.0
      %v1426 = vmax.f32 %v1000, 0.0
      %v1427 = vmax.f32 %v1005, 0.0
      %v1428 = vmax.f32 %v1008, 0.0
      %v1429 = vmax.f32 %v1013, 0.0
      %v1430 = vmax.f32 %v1016, 0.0
      %v1431 = vmax.f32 %v1021, 0.0
      %v1432 = vmax.f32 %v1024, 0.0
      %v1433 = vmax.f32 %v1029, 0.0
      %v1434 = vmax.f32 %v1032, 0.0
      %v1435 = vmax.f32 %v1037, 0.0
      %v1436 = vmax.f32 %v1040, 0.0
      %v1437 = vmax.f32 %v1045, 0.0
      %v1438 = vmax.f32 %v1048, 0.0
      %v1439 = vmax.f32 %v1053, 0.0
      %v1440 = vmax.f32 %v1056, 0.0
      %v1441 = vmax.f32 %v1061, 0.0
      %v1442 = vmax.f32 %v1064, 0.0
      %v1443 = vmax.f32 %v1069, 0.0
      %v1444 = vmax.f32 %v1072, 0.0
      %v1445 = vmax.f32 %v1077, 0.0
      %v1446 = vmax.f32 %v1080, 0.0
      %v1447 = vmax.f32 %v1085, 0.0
      %v1448 = vmax.f32 %v1088, 0.0
      %v1449 = vmax.f32 %v1093, 0.0
      %v1450 = vmax.f32 %v1096, 0.0
      %v1451 = vmax.f32 %v1101, 0.0
      %v1452 = vmax.f32 %v1104, 0.0
      %v1453 = vmax.f32 %v1109, 0.0
      %v1454 = vmax.f32 %v1112, 0.0
      %v1455 = vmax.f32 %v1117, 0.0
      %v1456 = vmax.f32 %v1120, 0.0
      %v1457 = vmax.f32 %v1125, 0.0
      %v1458 = vmax.f32 %v1128, 0.0
      %v1459 = vmax.f32 %v1133, 0.0
      %v1460 = vmax.f32 %v1136, 0.0
      %v1461 = vmax.f32 %v1141, 0.0
      %v1462 = vmax.f32 %v1144, 0.0
      %v1463 = vmax.f32 %v1149, 0.0
      %v1464 = vmax.f32 %v1152, 0.0
      %v1465 = vmax.f32 %v1157, 0.0
      %v1466 = vmax.f32 %v1160, 0.0
      %v1467 = vmax.f32 %v1165, 0.0
      %v1468 = vmax.f32 %v1168, 0.0
      %v1469 = vmax.f32 %v1173, 0.0
      %v1470 = vmax.f32 %v1176, 0.0
      %v1471 = vmax.f32 %v1181, 0.0
      %v1472 = vmax.f32 %v1184, 0.0
      %v1473 = vmax.f32 %v1189, 0.0
      %v1474 = vmax.f32 %v1192, 0.0
      %v1475 = vmax.f32 %v1197, 0.0
      %v1476 = vmax.f32 %v1200, 0.0
      %v1477 = vmax.f32 %v1205, 0.0
      %v1478 = vmax.f32 %v1208, 0.0
      %v1479 = vmax.f32 %v1213, 0.0
      %v1480 = vmax.f32 %v1216, 0.0
      %v1481 = vmax.f32 %v1221, 0.0
      %v1482 = vmax.f32 %v1224, 0.0
      %v1483 = vmax.f32 %v1229, 0.0
      %v1484 = vmax.f32 %v1232, 0.0
      %v1485 = vmax.f32 %v1237, 0.0
      %v1486 = vmax.f32 %v1240, 0.0
      %v1487 = vmax.f32 %v1245, 0.0
      %v1488 = vmax.f32 %v1248, 0.0
      %v1489 = vmax.f32 %v1253, 0.0
      %v1490 = vmax.f32 %v1256, 0.0
      %v1491 = vmax.f32 %v1261, 0.0
      %v1492 = vmax.f32 %v1264, 0.0
      %v1493 = vmax.f32 %v1269, 0.0
      %v1494 = vmax.f32 %v1272, 0.0
      %v1495 = vmax.f32 %v1277, 0.0
      %v1496 = vmax.f32 %v1280, 0.0
      %v1497 = vmax.f32 %v1285, 0.0
      %v1498 = vmax.f32 %v1288, 0.0
      %v1499 = vmax.f32 %v1293, 0.0
      %v1500 = vmax.f32 %v1296, 0.0
      %v1501 = vmax.f32 %v1301, 0.0
      %v1502 = vmax.f32 %v1304, 0.0
      %v1503 = vmax.f32 %v1309, 0.0
      %v1504 = vmax.f32 %v1312, 0.0
      %v1505 = vmax.f32 %v1317, 0.0
      %v1506 = vmax.f32 %v1320, 0.0
      %v1507 = vmax.f32 %v1325, 0.0
      %v1508 = vmax.f32 %v1328, 0.0
      %v1509 = vmax.f32 %v1333, 0.0
      %v1510 = vmax.f32 %v1336, 0.0
      %v1511 = vmax.f32 %v1341, 0.0
      %v1512 = vmax.f32 %v1344, 0.0
      %v1513 = vmax.f32 %v1349, 0.0
      %v1514 = vmax.f32 %v1352, 0.0
      %v1515 = vmax.f32 %v1357, 0.0
      %v1516 = vmax.f32 %v1360, 0.0
      %v1517 = vmax.f32 %v1365, 0.0
      %v1518 = vmax.f32 %v1368, 0.0
      %v1519 = vmax.f32 %v1373, 0.0
      %v1520 = vmax.f32 %v1376, 0.0
      %v1521 = vmax.f32 %v1381, 0.0
      %v1522 = vmax.f32 %v1384, 0.0
      %v1523 = vmax.f32 %v1389, 0.0
      %v1524 = vmax.f32 %v1392, 0.0
      %v1525 = vmax.f32 %v1397, 0.0
      %v1526 = vmax.f32 %v1400, 0.0
      %v1527 = vmax.f32 %v1405, 0.0
      %v1528 = vmax.f32 %v1408, 0.0
      %v1529 = vmax.f32 %v1413, 0.0
      %v1530 = vmax.f32 %v1416, 0.0
      %v1531 = vld [vmem:[%s345] sm:$0xff]
      %v1532 = vld [vmem:[%s345 + $0x8] sm:$0xff]
      %v1533 = vld [vmem:[%s345 + $0x10] sm:$0xff]
      %v1534 = vld [vmem:[%s345 + $0x18] sm:$0xff]
      %v1535 = vld [vmem:[%s345 + $0x20] sm:$0xff]
      %v1536 = vld [vmem:[%s345 + $0x28] sm:$0xff]
      %v1537 = vld [vmem:[%s345 + $0x30] sm:$0xff]
      %v1538 = vld [vmem:[%s345 + $0x38] sm:$0xff]
      %v1539 = vld [vmem:[%s345 + $0x40] sm:$0xff]
      %v1540 = vld [vmem:[%s345 + $0x48] sm:$0xff]
      %v1541 = vld [vmem:[%s345 + $0x50] sm:$0xff]
      %v1542 = vld [vmem:[%s345 + $0x58] sm:$0xff]
      %v1543 = vld [vmem:[%s345 + $0x60] sm:$0xff]
      %v1544 = vld [vmem:[%s345 + $0x68] sm:$0xff]
      %v1545 = vld [vmem:[%s345 + $0x70] sm:$0xff]
      %v1546 = vld [vmem:[%s345 + $0x78] sm:$0xff]
      %v1547 = vld [vmem:[%s345 + $0x80] sm:$0xff]
      %v1548 = vld [vmem:[%s345 + $0x88] sm:$0xff]
      %v1549 = vld [vmem:[%s345 + $0x90] sm:$0xff]
      %v1550 = vld [vmem:[%s345 + $0x98] sm:$0xff]
      %v1551 = vld [vmem:[%s345 + $0xa0] sm:$0xff]
      %v1552 = vld [vmem:[%s345 + $0xa8] sm:$0xff]
      %v1553 = vld [vmem:[%s345 + $0xb0] sm:$0xff]
      %v1554 = vld [vmem:[%s345 + $0xb8] sm:$0xff]
      %v1555 = vld [vmem:[%s345 + $0xc0] sm:$0xff]
      %v1556 = vld [vmem:[%s345 + $0xc8] sm:$0xff]
      %v1557 = vld [vmem:[%s345 + $0xd0] sm:$0xff]
      %v1558 = vld [vmem:[%s345 + $0xd8] sm:$0xff]
      %v1559 = vld [vmem:[%s345 + $0xe0] sm:$0xff]
      %v1560 = vld [vmem:[%s345 + $0xe8] sm:$0xff]
      %v1561 = vld [vmem:[%s345 + $0xf0] sm:$0xff]
      %v1562 = vld [vmem:[%s345 + $0xf8] sm:$0xff]
      %v1563 = vld [vmem:[%s345 + $0x100] sm:$0xff]
      %v1564 = vld [vmem:[%s345 + $0x108] sm:$0xff]
      %v1565 = vld [vmem:[%s345 + $0x110] sm:$0xff]
      %v1566 = vld [vmem:[%s345 + $0x118] sm:$0xff]
      %v1567 = vld [vmem:[%s345 + $0x120] sm:$0xff]
      %v1568 = vld [vmem:[%s345 + $0x128] sm:$0xff]
      %v1569 = vld [vmem:[%s345 + $0x130] sm:$0xff]
      %v1570 = vld [vmem:[%s345 + $0x138] sm:$0xff]
      %v1571 = vld [vmem:[%s345 + $0x140] sm:$0xff]
      %v1572 = vld [vmem:[%s345 + $0x148] sm:$0xff]
      %v1573 = vld [vmem:[%s345 + $0x150] sm:$0xff]
      %v1574 = vld [vmem:[%s345 + $0x158] sm:$0xff]
      %v1575 = vld [vmem:[%s345 + $0x160] sm:$0xff]
      %v1576 = vld [vmem:[%s345 + $0x168] sm:$0xff]
      %v1577 = vld [vmem:[%s345 + $0x170] sm:$0xff]
      %v1578 = vld [vmem:[%s345 + $0x178] sm:$0xff]
      %v1579 = vld [vmem:[%s345 + $0x180] sm:$0xff]
      %v1580 = vld [vmem:[%s345 + $0x188] sm:$0xff]
      %v1581 = vld [vmem:[%s345 + $0x190] sm:$0xff]
      %v1582 = vld [vmem:[%s345 + $0x198] sm:$0xff]
      %v1583 = vld [vmem:[%s345 + $0x1a0] sm:$0xff]
      %v1584 = vld [vmem:[%s345 + $0x1a8] sm:$0xff]
      %v1585 = vld [vmem:[%s345 + $0x1b0] sm:$0xff]
      %v1586 = vld [vmem:[%s345 + $0x1b8] sm:$0xff]
      %v1587 = vld [vmem:[%s345 + $0x1c0] sm:$0xff]
      %v1588 = vld [vmem:[%s345 + $0x1c8] sm:$0xff]
      %v1589 = vld [vmem:[%s345 + $0x1d0] sm:$0xff]
      %v1590 = vld [vmem:[%s345 + $0x1d8] sm:$0xff]
      %v1591 = vld [vmem:[%s345 + $0x1e0] sm:$0xff]
      %v1592 = vld [vmem:[%s345 + $0x1e8] sm:$0xff]
      %v1593 = vld [vmem:[%s345 + $0x1f0] sm:$0xff]
      %v1594 = vld [vmem:[%s345 + $0x1f8] sm:$0xff]
      %v1595 = vld [vmem:[%s345 + $0x200] sm:$0xff]
      %v1596 = vld [vmem:[%s345 + $0x208] sm:$0xff]
      %v1597 = vld [vmem:[%s345 + $0x210] sm:$0xff]
      %v1598 = vld [vmem:[%s345 + $0x218] sm:$0xff]
      %v1599 = vld [vmem:[%s345 + $0x220] sm:$0xff]
      %v1600 = vld [vmem:[%s345 + $0x228] sm:$0xff]
      %v1601 = vld [vmem:[%s345 + $0x230] sm:$0xff]
      %v1602 = vld [vmem:[%s345 + $0x238] sm:$0xff]
      %v1603 = vld [vmem:[%s345 + $0x240] sm:$0xff]
      %v1604 = vld [vmem:[%s345 + $0x248] sm:$0xff]
      %v1605 = vld [vmem:[%s345 + $0x250] sm:$0xff]
      %v1606 = vld [vmem:[%s345 + $0x258] sm:$0xff]
      %v1607 = vld [vmem:[%s345 + $0x260] sm:$0xff]
      %v1608 = vld [vmem:[%s345 + $0x268] sm:$0xff]
      %v1609 = vld [vmem:[%s345 + $0x270] sm:$0xff]
      %v1610 = vld [vmem:[%s345 + $0x278] sm:$0xff]
      %v1611 = vld [vmem:[%s345 + $0x280] sm:$0xff]
      %v1612 = vld [vmem:[%s345 + $0x288] sm:$0xff]
      %v1613 = vld [vmem:[%s345 + $0x290] sm:$0xff]
      %v1614 = vld [vmem:[%s345 + $0x298] sm:$0xff]
      %v1615 = vld [vmem:[%s345 + $0x2a0] sm:$0xff]
      %v1616 = vld [vmem:[%s345 + $0x2a8] sm:$0xff]
      %v1617 = vld [vmem:[%s345 + $0x2b0] sm:$0xff]
      %v1618 = vld [vmem:[%s345 + $0x2b8] sm:$0xff]
      %v1619 = vld [vmem:[%s345 + $0x2c0] sm:$0xff]
      %v1620 = vld [vmem:[%s345 + $0x2c8] sm:$0xff]
      %v1621 = vld [vmem:[%s345 + $0x2d0] sm:$0xff]
      %v1622 = vld [vmem:[%s345 + $0x2d8] sm:$0xff]
      %v1623 = vld [vmem:[%s345 + $0x2e0] sm:$0xff]
      %v1624 = vld [vmem:[%s345 + $0x2e8] sm:$0xff]
      %v1625 = vld [vmem:[%s345 + $0x2f0] sm:$0xff]
      %v1626 = vld [vmem:[%s345 + $0x2f8] sm:$0xff]
      %v1627 = vld [vmem:[%s345 + $0x300] sm:$0xff]
      %v1628 = vld [vmem:[%s345 + $0x308] sm:$0xff]
      %v1629 = vld [vmem:[%s345 + $0x310] sm:$0xff]
      %v1630 = vld [vmem:[%s345 + $0x318] sm:$0xff]
      %v1631 = vld [vmem:[%s345 + $0x320] sm:$0xff]
      %v1632 = vld [vmem:[%s345 + $0x328] sm:$0xff]
      %v1633 = vld [vmem:[%s345 + $0x330] sm:$0xff]
      %v1634 = vld [vmem:[%s345 + $0x338] sm:$0xff]
      %v1635 = vld [vmem:[%s345 + $0x340] sm:$0xff]
      %v1636 = vld [vmem:[%s345 + $0x348] sm:$0xff]
      %v1637 = vld [vmem:[%s345 + $0x350] sm:$0xff]
      %v1638 = vld [vmem:[%s345 + $0x358] sm:$0xff]
      %v1639 = vld [vmem:[%s345 + $0x360] sm:$0xff]
      %v1640 = vld [vmem:[%s345 + $0x368] sm:$0xff]
      %v1641 = vld [vmem:[%s345 + $0x370] sm:$0xff]
      %v1642 = vld [vmem:[%s345 + $0x378] sm:$0xff]
      %1644 = vset.pattern.permute.xlu0 0
      %1645 = vperm.xlu0 %1644, %v1531
      %v1646 = vpop.permute.xlu0 %1645
      %1649 = vset.pattern.permute.xlu0 0
      %1650 = vperm.xlu0 %1649, %v1532
      %v1651 = vpop.permute.xlu0 %1650
      %1654 = vset.pattern.permute.xlu0 0
      %1655 = vperm.xlu0 %1654, %v1533
      %v1656 = vpop.permute.xlu0 %1655
      %1659 = vset.pattern.permute.xlu0 0
      %1660 = vperm.xlu0 %1659, %v1534
      %v1661 = vpop.permute.xlu0 %1660
      %1664 = vset.pattern.permute.xlu0 0
      %1665 = vperm.xlu0 %1664, %v1535
      %v1666 = vpop.permute.xlu0 %1665
      %1669 = vset.pattern.permute.xlu0 0
      %1670 = vperm.xlu0 %1669, %v1536
      %v1671 = vpop.permute.xlu0 %1670
      %1674 = vset.pattern.permute.xlu0 0
      %1675 = vperm.xlu0 %1674, %v1537
      %v1676 = vpop.permute.xlu0 %1675
      %1679 = vset.pattern.permute.xlu0 0
      %1680 = vperm.xlu0 %1679, %v1538
      %v1681 = vpop.permute.xlu0 %1680
      %1684 = vset.pattern.permute.xlu0 0
      %1685 = vperm.xlu0 %1684, %v1539
      %v1686 = vpop.permute.xlu0 %1685
      %1689 = vset.pattern.permute.xlu0 0
      %1690 = vperm.xlu0 %1689, %v1540
      %v1691 = vpop.permute.xlu0 %1690
      %1694 = vset.pattern.permute.xlu0 0
      %1695 = vperm.xlu0 %1694, %v1541
      %v1696 = vpop.permute.xlu0 %1695
      %1699 = vset.pattern.permute.xlu0 0
      %1700 = vperm.xlu0 %1699, %v1542
      %v1701 = vpop.permute.xlu0 %1700
      %1704 = vset.pattern.permute.xlu0 0
      %1705 = vperm.xlu0 %1704, %v1543
      %v1706 = vpop.permute.xlu0 %1705
      %1709 = vset.pattern.permute.xlu0 0
      %1710 = vperm.xlu0 %1709, %v1544
      %v1711 = vpop.permute.xlu0 %1710
      %1714 = vset.pattern.permute.xlu0 0
      %1715 = vperm.xlu0 %1714, %v1545
      %v1716 = vpop.permute.xlu0 %1715
      %1719 = vset.pattern.permute.xlu0 0
      %1720 = vperm.xlu0 %1719, %v1546
      %v1721 = vpop.permute.xlu0 %1720
      %1724 = vset.pattern.permute.xlu0 0
      %1725 = vperm.xlu0 %1724, %v1547
      %v1726 = vpop.permute.xlu0 %1725
      %1729 = vset.pattern.permute.xlu0 0
      %1730 = vperm.xlu0 %1729, %v1548
      %v1731 = vpop.permute.xlu0 %1730
      %1734 = vset.pattern.permute.xlu0 0
      %1735 = vperm.xlu0 %1734, %v1549
      %v1736 = vpop.permute.xlu0 %1735
      %1739 = vset.pattern.permute.xlu0 0
      %1740 = vperm.xlu0 %1739, %v1550
      %v1741 = vpop.permute.xlu0 %1740
      %1744 = vset.pattern.permute.xlu0 0
      %1745 = vperm.xlu0 %1744, %v1551
      %v1746 = vpop.permute.xlu0 %1745
      %1749 = vset.pattern.permute.xlu0 0
      %1750 = vperm.xlu0 %1749, %v1552
      %v1751 = vpop.permute.xlu0 %1750
      %1754 = vset.pattern.permute.xlu0 0
      %1755 = vperm.xlu0 %1754, %v1553
      %v1756 = vpop.permute.xlu0 %1755
      %1759 = vset.pattern.permute.xlu0 0
      %1760 = vperm.xlu0 %1759, %v1554
      %v1761 = vpop.permute.xlu0 %1760
      %1764 = vset.pattern.permute.xlu0 0
      %1765 = vperm.xlu0 %1764, %v1555
      %v1766 = vpop.permute.xlu0 %1765
      %1769 = vset.pattern.permute.xlu0 0
      %1770 = vperm.xlu0 %1769, %v1556
      %v1771 = vpop.permute.xlu0 %1770
      %1774 = vset.pattern.permute.xlu0 0
      %1775 = vperm.xlu0 %1774, %v1557
      %v1776 = vpop.permute.xlu0 %1775
      %1779 = vset.pattern.permute.xlu0 0
      %1780 = vperm.xlu0 %1779, %v1558
      %v1781 = vpop.permute.xlu0 %1780
      %1784 = vset.pattern.permute.xlu0 0
      %1785 = vperm.xlu0 %1784, %v1559
      %v1786 = vpop.permute.xlu0 %1785
      %1789 = vset.pattern.permute.xlu0 0
      %1790 = vperm.xlu0 %1789, %v1560
      %v1791 = vpop.permute.xlu0 %1790
      %1794 = vset.pattern.permute.xlu0 0
      %1795 = vperm.xlu0 %1794, %v1561
      %v1796 = vpop.permute.xlu0 %1795
      %1799 = vset.pattern.permute.xlu0 0
      %1800 = vperm.xlu0 %1799, %v1562
      %v1801 = vpop.permute.xlu0 %1800
      %1804 = vset.pattern.permute.xlu0 0
      %1805 = vperm.xlu0 %1804, %v1563
      %v1806 = vpop.permute.xlu0 %1805
      %1809 = vset.pattern.permute.xlu0 0
      %1810 = vperm.xlu0 %1809, %v1564
      %v1811 = vpop.permute.xlu0 %1810
      %1814 = vset.pattern.permute.xlu0 0
      %1815 = vperm.xlu0 %1814, %v1565
      %v1816 = vpop.permute.xlu0 %1815
      %1819 = vset.pattern.permute.xlu0 0
      %1820 = vperm.xlu0 %1819, %v1566
      %v1821 = vpop.permute.xlu0 %1820
      %1824 = vset.pattern.permute.xlu0 0
      %1825 = vperm.xlu0 %1824, %v1567
      %v1826 = vpop.permute.xlu0 %1825
      %1829 = vset.pattern.permute.xlu0 0
      %1830 = vperm.xlu0 %1829, %v1568
      %v1831 = vpop.permute.xlu0 %1830
      %1834 = vset.pattern.permute.xlu0 0
      %1835 = vperm.xlu0 %1834, %v1569
      %v1836 = vpop.permute.xlu0 %1835
      %1839 = vset.pattern.permute.xlu0 0
      %1840 = vperm.xlu0 %1839, %v1570
      %v1841 = vpop.permute.xlu0 %1840
      %1844 = vset.pattern.permute.xlu0 0
      %1845 = vperm.xlu0 %1844, %v1571
      %v1846 = vpop.permute.xlu0 %1845
      %1849 = vset.pattern.permute.xlu0 0
      %1850 = vperm.xlu0 %1849, %v1572
      %v1851 = vpop.permute.xlu0 %1850
      %1854 = vset.pattern.permute.xlu0 0
      %1855 = vperm.xlu0 %1854, %v1573
      %v1856 = vpop.permute.xlu0 %1855
      %1859 = vset.pattern.permute.xlu0 0
      %1860 = vperm.xlu0 %1859, %v1574
      %v1861 = vpop.permute.xlu0 %1860
      %1864 = vset.pattern.permute.xlu0 0
      %1865 = vperm.xlu0 %1864, %v1575
      %v1866 = vpop.permute.xlu0 %1865
      %1869 = vset.pattern.permute.xlu0 0
      %1870 = vperm.xlu0 %1869, %v1576
      %v1871 = vpop.permute.xlu0 %1870
      %1874 = vset.pattern.permute.xlu0 0
      %1875 = vperm.xlu0 %1874, %v1577
      %v1876 = vpop.permute.xlu0 %1875
      %1879 = vset.pattern.permute.xlu0 0
      %1880 = vperm.xlu0 %1879, %v1578
      %v1881 = vpop.permute.xlu0 %1880
      %1884 = vset.pattern.permute.xlu0 0
      %1885 = vperm.xlu0 %1884, %v1579
      %v1886 = vpop.permute.xlu0 %1885
      %1889 = vset.pattern.permute.xlu0 0
      %1890 = vperm.xlu0 %1889, %v1580
      %v1891 = vpop.permute.xlu0 %1890
      %1894 = vset.pattern.permute.xlu0 0
      %1895 = vperm.xlu0 %1894, %v1581
      %v1896 = vpop.permute.xlu0 %1895
      %1899 = vset.pattern.permute.xlu0 0
      %1900 = vperm.xlu0 %1899, %v1582
      %v1901 = vpop.permute.xlu0 %1900
      %1904 = vset.pattern.permute.xlu0 0
      %1905 = vperm.xlu0 %1904, %v1583
      %v1906 = vpop.permute.xlu0 %1905
      %1909 = vset.pattern.permute.xlu0 0
      %1910 = vperm.xlu0 %1909, %v1584
      %v1911 = vpop.permute.xlu0 %1910
      %1914 = vset.pattern.permute.xlu0 0
      %1915 = vperm.xlu0 %1914, %v1585
      %v1916 = vpop.permute.xlu0 %1915
      %1919 = vset.pattern.permute.xlu0 0
      %1920 = vperm.xlu0 %1919, %v1586
      %v1921 = vpop.permute.xlu0 %1920
      %1924 = vset.pattern.permute.xlu0 0
      %1925 = vperm.xlu0 %1924, %v1587
      %v1926 = vpop.permute.xlu0 %1925
      %1929 = vset.pattern.permute.xlu0 0
      %1930 = vperm.xlu0 %1929, %v1588
      %v1931 = vpop.permute.xlu0 %1930
      %1934 = vset.pattern.permute.xlu0 0
      %1935 = vperm.xlu0 %1934, %v1589
      %v1936 = vpop.permute.xlu0 %1935
      %1939 = vset.pattern.permute.xlu0 0
      %1940 = vperm.xlu0 %1939, %v1590
      %v1941 = vpop.permute.xlu0 %1940
      %1944 = vset.pattern.permute.xlu0 0
      %1945 = vperm.xlu0 %1944, %v1591
      %v1946 = vpop.permute.xlu0 %1945
      %1949 = vset.pattern.permute.xlu0 0
      %1950 = vperm.xlu0 %1949, %v1592
      %v1951 = vpop.permute.xlu0 %1950
      %1954 = vset.pattern.permute.xlu0 0
      %1955 = vperm.xlu0 %1954, %v1593
      %v1956 = vpop.permute.xlu0 %1955
      %1959 = vset.pattern.permute.xlu0 0
      %1960 = vperm.xlu0 %1959, %v1594
      %v1961 = vpop.permute.xlu0 %1960
      %1964 = vset.pattern.permute.xlu0 0
      %1965 = vperm.xlu0 %1964, %v1595
      %v1966 = vpop.permute.xlu0 %1965
      %1969 = vset.pattern.permute.xlu0 0
      %1970 = vperm.xlu0 %1969, %v1596
      %v1971 = vpop.permute.xlu0 %1970
      %1974 = vset.pattern.permute.xlu0 0
      %1975 = vperm.xlu0 %1974, %v1597
      %v1976 = vpop.permute.xlu0 %1975
      %1979 = vset.pattern.permute.xlu0 0
      %1980 = vperm.xlu0 %1979, %v1598
      %v1981 = vpop.permute.xlu0 %1980
      %1984 = vset.pattern.permute.xlu0 0
      %1985 = vperm.xlu0 %1984, %v1599
      %v1986 = vpop.permute.xlu0 %1985
      %1989 = vset.pattern.permute.xlu0 0
      %1990 = vperm.xlu0 %1989, %v1600
      %v1991 = vpop.permute.xlu0 %1990
      %1994 = vset.pattern.permute.xlu0 0
      %1995 = vperm.xlu0 %1994, %v1601
      %v1996 = vpop.permute.xlu0 %1995
      %1999 = vset.pattern.permute.xlu0 0
      %2000 = vperm.xlu0 %1999, %v1602
      %v2001 = vpop.permute.xlu0 %2000
      %2004 = vset.pattern.permute.xlu0 0
      %2005 = vperm.xlu0 %2004, %v1603
      %v2006 = vpop.permute.xlu0 %2005
      %2009 = vset.pattern.permute.xlu0 0
      %2010 = vperm.xlu0 %2009, %v1604
      %v2011 = vpop.permute.xlu0 %2010
      %2014 = vset.pattern.permute.xlu0 0
      %2015 = vperm.xlu0 %2014, %v1605
      %v2016 = vpop.permute.xlu0 %2015
      %2019 = vset.pattern.permute.xlu0 0
      %2020 = vperm.xlu0 %2019, %v1606
      %v2021 = vpop.permute.xlu0 %2020
      %2024 = vset.pattern.permute.xlu0 0
      %2025 = vperm.xlu0 %2024, %v1607
      %v2026 = vpop.permute.xlu0 %2025
      %2029 = vset.pattern.permute.xlu0 0
      %2030 = vperm.xlu0 %2029, %v1608
      %v2031 = vpop.permute.xlu0 %2030
      %2034 = vset.pattern.permute.xlu0 0
      %2035 = vperm.xlu0 %2034, %v1609
      %v2036 = vpop.permute.xlu0 %2035
      %2039 = vset.pattern.permute.xlu0 0
      %2040 = vperm.xlu0 %2039, %v1610
      %v2041 = vpop.permute.xlu0 %2040
      %2044 = vset.pattern.permute.xlu0 0
      %2045 = vperm.xlu0 %2044, %v1611
      %v2046 = vpop.permute.xlu0 %2045
      %2049 = vset.pattern.permute.xlu0 0
      %2050 = vperm.xlu0 %2049, %v1612
      %v2051 = vpop.permute.xlu0 %2050
      %2054 = vset.pattern.permute.xlu0 0
      %2055 = vperm.xlu0 %2054, %v1613
      %v2056 = vpop.permute.xlu0 %2055
      %2059 = vset.pattern.permute.xlu0 0
      %2060 = vperm.xlu0 %2059, %v1614
      %v2061 = vpop.permute.xlu0 %2060
      %2064 = vset.pattern.permute.xlu0 0
      %2065 = vperm.xlu0 %2064, %v1615
      %v2066 = vpop.permute.xlu0 %2065
      %2069 = vset.pattern.permute.xlu0 0
      %2070 = vperm.xlu0 %2069, %v1616
      %v2071 = vpop.permute.xlu0 %2070
      %2074 = vset.pattern.permute.xlu0 0
      %2075 = vperm.xlu0 %2074, %v1617
      %v2076 = vpop.permute.xlu0 %2075
      %2079 = vset.pattern.permute.xlu0 0
      %2080 = vperm.xlu0 %2079, %v1618
      %v2081 = vpop.permute.xlu0 %2080
      %2084 = vset.pattern.permute.xlu0 0
      %2085 = vperm.xlu0 %2084, %v1619
      %v2086 = vpop.permute.xlu0 %2085
      %2089 = vset.pattern.permute.xlu0 0
      %2090 = vperm.xlu0 %2089, %v1620
      %v2091 = vpop.permute.xlu0 %2090
      %2094 = vset.pattern.permute.xlu0 0
      %2095 = vperm.xlu0 %2094, %v1621
      %v2096 = vpop.permute.xlu0 %2095
      %2099 = vset.pattern.permute.xlu0 0
      %2100 = vperm.xlu0 %2099, %v1622
      %v2101 = vpop.permute.xlu0 %2100
      %2104 = vset.pattern.permute.xlu0 0
      %2105 = vperm.xlu0 %2104, %v1623
      %v2106 = vpop.permute.xlu0 %2105
      %2109 = vset.pattern.permute.xlu0 0
      %2110 = vperm.xlu0 %2109, %v1624
      %v2111 = vpop.permute.xlu0 %2110
      %2114 = vset.pattern.permute.xlu0 0
      %2115 = vperm.xlu0 %2114, %v1625
      %v2116 = vpop.permute.xlu0 %2115
      %2119 = vset.pattern.permute.xlu0 0
      %2120 = vperm.xlu0 %2119, %v1626
      %v2121 = vpop.permute.xlu0 %2120
      %2124 = vset.pattern.permute.xlu0 0
      %2125 = vperm.xlu0 %2124, %v1627
      %v2126 = vpop.permute.xlu0 %2125
      %2129 = vset.pattern.permute.xlu0 0
      %2130 = vperm.xlu0 %2129, %v1628
      %v2131 = vpop.permute.xlu0 %2130
      %2134 = vset.pattern.permute.xlu0 0
      %2135 = vperm.xlu0 %2134, %v1629
      %v2136 = vpop.permute.xlu0 %2135
      %2139 = vset.pattern.permute.xlu0 0
      %2140 = vperm.xlu0 %2139, %v1630
      %v2141 = vpop.permute.xlu0 %2140
      %2144 = vset.pattern.permute.xlu0 0
      %2145 = vperm.xlu0 %2144, %v1631
      %v2146 = vpop.permute.xlu0 %2145
      %2149 = vset.pattern.permute.xlu0 0
      %2150 = vperm.xlu0 %2149, %v1632
      %v2151 = vpop.permute.xlu0 %2150
      %2154 = vset.pattern.permute.xlu0 0
      %2155 = vperm.xlu0 %2154, %v1633
      %v2156 = vpop.permute.xlu0 %2155
      %2159 = vset.pattern.permute.xlu0 0
      %2160 = vperm.xlu0 %2159, %v1634
      %v2161 = vpop.permute.xlu0 %2160
      %2164 = vset.pattern.permute.xlu0 0
      %2165 = vperm.xlu0 %2164, %v1635
      %v2166 = vpop.permute.xlu0 %2165
      %2169 = vset.pattern.permute.xlu0 0
      %2170 = vperm.xlu0 %2169, %v1636
      %v2171 = vpop.permute.xlu0 %2170
      %2174 = vset.pattern.permute.xlu0 0
      %2175 = vperm.xlu0 %2174, %v1637
      %v2176 = vpop.permute.xlu0 %2175
      %2179 = vset.pattern.permute.xlu0 0
      %2180 = vperm.xlu0 %2179, %v1638
      %v2181 = vpop.permute.xlu0 %2180
      %2184 = vset.pattern.permute.xlu0 0
      %2185 = vperm.xlu0 %2184, %v1639
      %v2186 = vpop.permute.xlu0 %2185
      %2189 = vset.pattern.permute.xlu0 0
      %2190 = vperm.xlu0 %2189, %v1640
      %v2191 = vpop.permute.xlu0 %2190
      %2194 = vset.pattern.permute.xlu0 0
      %2195 = vperm.xlu0 %2194, %v1641
      %v2196 = vpop.permute.xlu0 %2195
      %2199 = vset.pattern.permute.xlu0 0
      %2200 = vperm.xlu0 %2199, %v1642
      %v2201 = vpop.permute.xlu0 %2200
      %v2203 = vmul.f32 %v1419, %v1646
      %v2204 = vmul.f32 %v1420, %v1651
      %v2205 = vmul.f32 %v1421, %v1656
      %v2206 = vmul.f32 %v1422, %v1661
      %v2207 = vmul.f32 %v1423, %v1666
      %v2208 = vmul.f32 %v1424, %v1671
      %v2209 = vmul.f32 %v1425, %v1676
      %v2210 = vmul.f32 %v1426, %v1681
      %v2211 = vmul.f32 %v1427, %v1686
      %v2212 = vmul.f32 %v1428, %v1691
      %v2213 = vmul.f32 %v1429, %v1696
      %v2214 = vmul.f32 %v1430, %v1701
      %v2215 = vmul.f32 %v1431, %v1706
      %v2216 = vmul.f32 %v1432, %v1711
      %v2217 = vmul.f32 %v1433, %v1716
      %v2218 = vmul.f32 %v1434, %v1721
      %v2219 = vmul.f32 %v1435, %v1726
      %v2220 = vmul.f32 %v1436, %v1731
      %v2221 = vmul.f32 %v1437, %v1736
      %v2222 = vmul.f32 %v1438, %v1741
      %v2223 = vmul.f32 %v1439, %v1746
      %v2224 = vmul.f32 %v1440, %v1751
      %v2225 = vmul.f32 %v1441, %v1756
      %v2226 = vmul.f32 %v1442, %v1761
      %v2227 = vmul.f32 %v1443, %v1766
      %v2228 = vmul.f32 %v1444, %v1771
      %v2229 = vmul.f32 %v1445, %v1776
      %v2230 = vmul.f32 %v1446, %v1781
      %v2231 = vmul.f32 %v1447, %v1786
      %v2232 = vmul.f32 %v1448, %v1791
      %v2233 = vmul.f32 %v1449, %v1796
      %v2234 = vmul.f32 %v1450, %v1801
      %v2235 = vmul.f32 %v1451, %v1806
      %v2236 = vmul.f32 %v1452, %v1811
      %v2237 = vmul.f32 %v1453, %v1816
      %v2238 = vmul.f32 %v1454, %v1821
      %v2239 = vmul.f32 %v1455, %v1826
      %v2240 = vmul.f32 %v1456, %v1831
      %v2241 = vmul.f32 %v1457, %v1836
      %v2242 = vmul.f32 %v1458, %v1841
      %v2243 = vmul.f32 %v1459, %v1846
      %v2244 = vmul.f32 %v1460, %v1851
      %v2245 = vmul.f32 %v1461, %v1856
      %v2246 = vmul.f32 %v1462, %v1861
      %v2247 = vmul.f32 %v1463, %v1866
      %v2248 = vmul.f32 %v1464, %v1871
      %v2249 = vmul.f32 %v1465, %v1876
      %v2250 = vmul.f32 %v1466, %v1881
      %v2251 = vmul.f32 %v1467, %v1886
      %v2252 = vmul.f32 %v1468, %v1891
      %v2253 = vmul.f32 %v1469, %v1896
      %v2254 = vmul.f32 %v1470, %v1901
      %v2255 = vmul.f32 %v1471, %v1906
      %v2256 = vmul.f32 %v1472, %v1911
      %v2257 = vmul.f32 %v1473, %v1916
      %v2258 = vmul.f32 %v1474, %v1921
      %v2259 = vmul.f32 %v1475, %v1926
      %v2260 = vmul.f32 %v1476, %v1931
      %v2261 = vmul.f32 %v1477, %v1936
      %v2262 = vmul.f32 %v1478, %v1941
      %v2263 = vmul.f32 %v1479, %v1946
      %v2264 = vmul.f32 %v1480, %v1951
      %v2265 = vmul.f32 %v1481, %v1956
      %v2266 = vmul.f32 %v1482, %v1961
      %v2267 = vmul.f32 %v1483, %v1966
      %v2268 = vmul.f32 %v1484, %v1971
      %v2269 = vmul.f32 %v1485, %v1976
      %v2270 = vmul.f32 %v1486, %v1981
      %v2271 = vmul.f32 %v1487, %v1986
      %v2272 = vmul.f32 %v1488, %v1991
      %v2273 = vmul.f32 %v1489, %v1996
      %v2274 = vmul.f32 %v1490, %v2001
      %v2275 = vmul.f32 %v1491, %v2006
      %v2276 = vmul.f32 %v1492, %v2011
      %v2277 = vmul.f32 %v1493, %v2016
      %v2278 = vmul.f32 %v1494, %v2021
      %v2279 = vmul.f32 %v1495, %v2026
      %v2280 = vmul.f32 %v1496, %v2031
      %v2281 = vmul.f32 %v1497, %v2036
      %v2282 = vmul.f32 %v1498, %v2041
      %v2283 = vmul.f32 %v1499, %v2046
      %v2284 = vmul.f32 %v1500, %v2051
      %v2285 = vmul.f32 %v1501, %v2056
      %v2286 = vmul.f32 %v1502, %v2061
      %v2287 = vmul.f32 %v1503, %v2066
      %v2288 = vmul.f32 %v1504, %v2071
      %v2289 = vmul.f32 %v1505, %v2076
      %v2290 = vmul.f32 %v1506, %v2081
      %v2291 = vmul.f32 %v1507, %v2086
      %v2292 = vmul.f32 %v1508, %v2091
      %v2293 = vmul.f32 %v1509, %v2096
      %v2294 = vmul.f32 %v1510, %v2101
      %v2295 = vmul.f32 %v1511, %v2106
      %v2296 = vmul.f32 %v1512, %v2111
      %v2297 = vmul.f32 %v1513, %v2116
      %v2298 = vmul.f32 %v1514, %v2121
      %v2299 = vmul.f32 %v1515, %v2126
      %v2300 = vmul.f32 %v1516, %v2131
      %v2301 = vmul.f32 %v1517, %v2136
      %v2302 = vmul.f32 %v1518, %v2141
      %v2303 = vmul.f32 %v1519, %v2146
      %v2304 = vmul.f32 %v1520, %v2151
      %v2305 = vmul.f32 %v1521, %v2156
      %v2306 = vmul.f32 %v1522, %v2161
      %v2307 = vmul.f32 %v1523, %v2166
      %v2308 = vmul.f32 %v1524, %v2171
      %v2309 = vmul.f32 %v1525, %v2176
      %v2310 = vmul.f32 %v1526, %v2181
      %v2311 = vmul.f32 %v1527, %v2186
      %v2312 = vmul.f32 %v1528, %v2191
      %v2313 = vmul.f32 %v1529, %v2196
      %v2314 = vmul.f32 %v1530, %v2201
      %v2315 = vrot.slane %v2203, 4
      %v2316 = vadd.f32 %v2203, %v2315
      %v2317 = vrot.slane %v2316, 2
      %v2318 = vadd.f32 %v2316, %v2317
      %v2319 = vrot.slane %v2318, 1
      %v2320 = vadd.f32 %v2318, %v2319
      %v2321 = vrot.slane %v2204, 4
      %v2322 = vadd.f32 %v2204, %v2321
      %v2323 = vrot.slane %v2322, 2
      %v2324 = vadd.f32 %v2322, %v2323
      %v2325 = vrot.slane %v2324, 1
      %v2326 = vadd.f32 %v2324, %v2325
      %v2327 = vrot.slane %v2205, 4
      %v2328 = vadd.f32 %v2205, %v2327
      %v2329 = vrot.slane %v2328, 2
      %v2330 = vadd.f32 %v2328, %v2329
      %v2331 = vrot.slane %v2330, 1
      %v2332 = vadd.f32 %v2330, %v2331
      %v2333 = vrot.slane %v2206, 4
      %v2334 = vadd.f32 %v2206, %v2333
      %v2335 = vrot.slane %v2334, 2
      %v2336 = vadd.f32 %v2334, %v2335
      %v2337 = vrot.slane %v2336, 1
      %v2338 = vadd.f32 %v2336, %v2337
      %v2339 = vrot.slane %v2207, 4
      %v2340 = vadd.f32 %v2207, %v2339
      %v2341 = vrot.slane %v2340, 2
      %v2342 = vadd.f32 %v2340, %v2341
      %v2343 = vrot.slane %v2342, 1
      %v2344 = vadd.f32 %v2342, %v2343
      %v2345 = vrot.slane %v2208, 4
      %v2346 = vadd.f32 %v2208, %v2345
      %v2347 = vrot.slane %v2346, 2
      %v2348 = vadd.f32 %v2346, %v2347
      %v2349 = vrot.slane %v2348, 1
      %v2350 = vadd.f32 %v2348, %v2349
      %v2351 = vrot.slane %v2209, 4
      %v2352 = vadd.f32 %v2209, %v2351
      %v2353 = vrot.slane %v2352, 2
      %v2354 = vadd.f32 %v2352, %v2353
      %v2355 = vrot.slane %v2354, 1
      %v2356 = vadd.f32 %v2354, %v2355
      %v2357 = vrot.slane %v2210, 4
      %v2358 = vadd.f32 %v2210, %v2357
      %v2359 = vrot.slane %v2358, 2
      %v2360 = vadd.f32 %v2358, %v2359
      %v2361 = vrot.slane %v2360, 1
      %v2362 = vadd.f32 %v2360, %v2361
      %v2363 = vrot.slane %v2211, 4
      %v2364 = vadd.f32 %v2211, %v2363
      %v2365 = vrot.slane %v2364, 2
      %v2366 = vadd.f32 %v2364, %v2365
      %v2367 = vrot.slane %v2366, 1
      %v2368 = vadd.f32 %v2366, %v2367
      %v2369 = vrot.slane %v2212, 4
      %v2370 = vadd.f32 %v2212, %v2369
      %v2371 = vrot.slane %v2370, 2
      %v2372 = vadd.f32 %v2370, %v2371
      %v2373 = vrot.slane %v2372, 1
      %v2374 = vadd.f32 %v2372, %v2373
      %v2375 = vrot.slane %v2213, 4
      %v2376 = vadd.f32 %v2213, %v2375
      %v2377 = vrot.slane %v2376, 2
      %v2378 = vadd.f32 %v2376, %v2377
      %v2379 = vrot.slane %v2378, 1
      %v2380 = vadd.f32 %v2378, %v2379
      %v2381 = vrot.slane %v2214, 4
      %v2382 = vadd.f32 %v2214, %v2381
      %v2383 = vrot.slane %v2382, 2
      %v2384 = vadd.f32 %v2382, %v2383
      %v2385 = vrot.slane %v2384, 1
      %v2386 = vadd.f32 %v2384, %v2385
      %v2387 = vrot.slane %v2215, 4
      %v2388 = vadd.f32 %v2215, %v2387
      %v2389 = vrot.slane %v2388, 2
      %v2390 = vadd.f32 %v2388, %v2389
      %v2391 = vrot.slane %v2390, 1
      %v2392 = vadd.f32 %v2390, %v2391
      %v2393 = vrot.slane %v2216, 4
      %v2394 = vadd.f32 %v2216, %v2393
      %v2395 = vrot.slane %v2394, 2
      %v2396 = vadd.f32 %v2394, %v2395
      %v2397 = vrot.slane %v2396, 1
      %v2398 = vadd.f32 %v2396, %v2397
      %v2399 = vrot.slane %v2217, 4
      %v2400 = vadd.f32 %v2217, %v2399
      %v2401 = vrot.slane %v2400, 2
      %v2402 = vadd.f32 %v2400, %v2401
      %v2403 = vrot.slane %v2402, 1
      %v2404 = vadd.f32 %v2402, %v2403
      %v2405 = vrot.slane %v2218, 4
      %v2406 = vadd.f32 %v2218, %v2405
      %v2407 = vrot.slane %v2406, 2
      %v2408 = vadd.f32 %v2406, %v2407
      %v2409 = vrot.slane %v2408, 1
      %v2410 = vadd.f32 %v2408, %v2409
      %v2411 = vrot.slane %v2219, 4
      %v2412 = vadd.f32 %v2219, %v2411
      %v2413 = vrot.slane %v2412, 2
      %v2414 = vadd.f32 %v2412, %v2413
      %v2415 = vrot.slane %v2414, 1
      %v2416 = vadd.f32 %v2414, %v2415
      %v2417 = vrot.slane %v2220, 4
      %v2418 = vadd.f32 %v2220, %v2417
      %v2419 = vrot.slane %v2418, 2
      %v2420 = vadd.f32 %v2418, %v2419
      %v2421 = vrot.slane %v2420, 1
      %v2422 = vadd.f32 %v2420, %v2421
      %v2423 = vrot.slane %v2221, 4
      %v2424 = vadd.f32 %v2221, %v2423
      %v2425 = vrot.slane %v2424, 2
      %v2426 = vadd.f32 %v2424, %v2425
      %v2427 = vrot.slane %v2426, 1
      %v2428 = vadd.f32 %v2426, %v2427
      %v2429 = vrot.slane %v2222, 4
      %v2430 = vadd.f32 %v2222, %v2429
      %v2431 = vrot.slane %v2430, 2
      %v2432 = vadd.f32 %v2430, %v2431
      %v2433 = vrot.slane %v2432, 1
      %v2434 = vadd.f32 %v2432, %v2433
      %v2435 = vrot.slane %v2223, 4
      %v2436 = vadd.f32 %v2223, %v2435
      %v2437 = vrot.slane %v2436, 2
      %v2438 = vadd.f32 %v2436, %v2437
      %v2439 = vrot.slane %v2438, 1
      %v2440 = vadd.f32 %v2438, %v2439
      %v2441 = vrot.slane %v2224, 4
      %v2442 = vadd.f32 %v2224, %v2441
      %v2443 = vrot.slane %v2442, 2
      %v2444 = vadd.f32 %v2442, %v2443
      %v2445 = vrot.slane %v2444, 1
      %v2446 = vadd.f32 %v2444, %v2445
      %v2447 = vrot.slane %v2225, 4
      %v2448 = vadd.f32 %v2225, %v2447
      %v2449 = vrot.slane %v2448, 2
      %v2450 = vadd.f32 %v2448, %v2449
      %v2451 = vrot.slane %v2450, 1
      %v2452 = vadd.f32 %v2450, %v2451
      %v2453 = vrot.slane %v2226, 4
      %v2454 = vadd.f32 %v2226, %v2453
      %v2455 = vrot.slane %v2454, 2
      %v2456 = vadd.f32 %v2454, %v2455
      %v2457 = vrot.slane %v2456, 1
      %v2458 = vadd.f32 %v2456, %v2457
      %v2459 = vrot.slane %v2227, 4
      %v2460 = vadd.f32 %v2227, %v2459
      %v2461 = vrot.slane %v2460, 2
      %v2462 = vadd.f32 %v2460, %v2461
      %v2463 = vrot.slane %v2462, 1
      %v2464 = vadd.f32 %v2462, %v2463
      %v2465 = vrot.slane %v2228, 4
      %v2466 = vadd.f32 %v2228, %v2465
      %v2467 = vrot.slane %v2466, 2
      %v2468 = vadd.f32 %v2466, %v2467
      %v2469 = vrot.slane %v2468, 1
      %v2470 = vadd.f32 %v2468, %v2469
      %v2471 = vrot.slane %v2229, 4
      %v2472 = vadd.f32 %v2229, %v2471
      %v2473 = vrot.slane %v2472, 2
      %v2474 = vadd.f32 %v2472, %v2473
      %v2475 = vrot.slane %v2474, 1
      %v2476 = vadd.f32 %v2474, %v2475
      %v2477 = vrot.slane %v2230, 4
      %v2478 = vadd.f32 %v2230, %v2477
      %v2479 = vrot.slane %v2478, 2
      %v2480 = vadd.f32 %v2478, %v2479
      %v2481 = vrot.slane %v2480, 1
      %v2482 = vadd.f32 %v2480, %v2481
      %v2483 = vrot.slane %v2231, 4
      %v2484 = vadd.f32 %v2231, %v2483
      %v2485 = vrot.slane %v2484, 2
      %v2486 = vadd.f32 %v2484, %v2485
      %v2487 = vrot.slane %v2486, 1
      %v2488 = vadd.f32 %v2486, %v2487
      %v2489 = vrot.slane %v2232, 4
      %v2490 = vadd.f32 %v2232, %v2489
      %v2491 = vrot.slane %v2490, 2
      %v2492 = vadd.f32 %v2490, %v2491
      %v2493 = vrot.slane %v2492, 1
      %v2494 = vadd.f32 %v2492, %v2493
      %v2495 = vrot.slane %v2233, 4
      %v2496 = vadd.f32 %v2233, %v2495
      %v2497 = vrot.slane %v2496, 2
      %v2498 = vadd.f32 %v2496, %v2497
      %v2499 = vrot.slane %v2498, 1
      %v2500 = vadd.f32 %v2498, %v2499
      %v2501 = vrot.slane %v2234, 4
      %v2502 = vadd.f32 %v2234, %v2501
      %v2503 = vrot.slane %v2502, 2
      %v2504 = vadd.f32 %v2502, %v2503
      %v2505 = vrot.slane %v2504, 1
      %v2506 = vadd.f32 %v2504, %v2505
      %v2507 = vrot.slane %v2235, 4
      %v2508 = vadd.f32 %v2235, %v2507
      %v2509 = vrot.slane %v2508, 2
      %v2510 = vadd.f32 %v2508, %v2509
      %v2511 = vrot.slane %v2510, 1
      %v2512 = vadd.f32 %v2510, %v2511
      %v2513 = vrot.slane %v2236, 4
      %v2514 = vadd.f32 %v2236, %v2513
      %v2515 = vrot.slane %v2514, 2
      %v2516 = vadd.f32 %v2514, %v2515
      %v2517 = vrot.slane %v2516, 1
      %v2518 = vadd.f32 %v2516, %v2517
      %v2519 = vrot.slane %v2237, 4
      %v2520 = vadd.f32 %v2237, %v2519
      %v2521 = vrot.slane %v2520, 2
      %v2522 = vadd.f32 %v2520, %v2521
      %v2523 = vrot.slane %v2522, 1
      %v2524 = vadd.f32 %v2522, %v2523
      %v2525 = vrot.slane %v2238, 4
      %v2526 = vadd.f32 %v2238, %v2525
      %v2527 = vrot.slane %v2526, 2
      %v2528 = vadd.f32 %v2526, %v2527
      %v2529 = vrot.slane %v2528, 1
      %v2530 = vadd.f32 %v2528, %v2529
      %v2531 = vrot.slane %v2239, 4
      %v2532 = vadd.f32 %v2239, %v2531
      %v2533 = vrot.slane %v2532, 2
      %v2534 = vadd.f32 %v2532, %v2533
      %v2535 = vrot.slane %v2534, 1
      %v2536 = vadd.f32 %v2534, %v2535
      %v2537 = vrot.slane %v2240, 4
      %v2538 = vadd.f32 %v2240, %v2537
      %v2539 = vrot.slane %v2538, 2
      %v2540 = vadd.f32 %v2538, %v2539
      %v2541 = vrot.slane %v2540, 1
      %v2542 = vadd.f32 %v2540, %v2541
      %v2543 = vrot.slane %v2241, 4
      %v2544 = vadd.f32 %v2241, %v2543
      %v2545 = vrot.slane %v2544, 2
      %v2546 = vadd.f32 %v2544, %v2545
      %v2547 = vrot.slane %v2546, 1
      %v2548 = vadd.f32 %v2546, %v2547
      %v2549 = vrot.slane %v2242, 4
      %v2550 = vadd.f32 %v2242, %v2549
      %v2551 = vrot.slane %v2550, 2
      %v2552 = vadd.f32 %v2550, %v2551
      %v2553 = vrot.slane %v2552, 1
      %v2554 = vadd.f32 %v2552, %v2553
      %v2555 = vrot.slane %v2243, 4
      %v2556 = vadd.f32 %v2243, %v2555
      %v2557 = vrot.slane %v2556, 2
      %v2558 = vadd.f32 %v2556, %v2557
      %v2559 = vrot.slane %v2558, 1
      %v2560 = vadd.f32 %v2558, %v2559
      %v2561 = vrot.slane %v2244, 4
      %v2562 = vadd.f32 %v2244, %v2561
      %v2563 = vrot.slane %v2562, 2
      %v2564 = vadd.f32 %v2562, %v2563
      %v2565 = vrot.slane %v2564, 1
      %v2566 = vadd.f32 %v2564, %v2565
      %v2567 = vrot.slane %v2245, 4
      %v2568 = vadd.f32 %v2245, %v2567
      %v2569 = vrot.slane %v2568, 2
      %v2570 = vadd.f32 %v2568, %v2569
      %v2571 = vrot.slane %v2570, 1
      %v2572 = vadd.f32 %v2570, %v2571
      %v2573 = vrot.slane %v2246, 4
      %v2574 = vadd.f32 %v2246, %v2573
      %v2575 = vrot.slane %v2574, 2
      %v2576 = vadd.f32 %v2574, %v2575
      %v2577 = vrot.slane %v2576, 1
      %v2578 = vadd.f32 %v2576, %v2577
      %v2579 = vrot.slane %v2247, 4
      %v2580 = vadd.f32 %v2247, %v2579
      %v2581 = vrot.slane %v2580, 2
      %v2582 = vadd.f32 %v2580, %v2581
      %v2583 = vrot.slane %v2582, 1
      %v2584 = vadd.f32 %v2582, %v2583
      %v2585 = vrot.slane %v2248, 4
      %v2586 = vadd.f32 %v2248, %v2585
      %v2587 = vrot.slane %v2586, 2
      %v2588 = vadd.f32 %v2586, %v2587
      %v2589 = vrot.slane %v2588, 1
      %v2590 = vadd.f32 %v2588, %v2589
      %v2591 = vrot.slane %v2249, 4
      %v2592 = vadd.f32 %v2249, %v2591
      %v2593 = vrot.slane %v2592, 2
      %v2594 = vadd.f32 %v2592, %v2593
      %v2595 = vrot.slane %v2594, 1
      %v2596 = vadd.f32 %v2594, %v2595
      %v2597 = vrot.slane %v2250, 4
      %v2598 = vadd.f32 %v2250, %v2597
      %v2599 = vrot.slane %v2598, 2
      %v2600 = vadd.f32 %v2598, %v2599
      %v2601 = vrot.slane %v2600, 1
      %v2602 = vadd.f32 %v2600, %v2601
      %v2603 = vrot.slane %v2251, 4
      %v2604 = vadd.f32 %v2251, %v2603
      %v2605 = vrot.slane %v2604, 2
      %v2606 = vadd.f32 %v2604, %v2605
      %v2607 = vrot.slane %v2606, 1
      %v2608 = vadd.f32 %v2606, %v2607
      %v2609 = vrot.slane %v2252, 4
      %v2610 = vadd.f32 %v2252, %v2609
      %v2611 = vrot.slane %v2610, 2
      %v2612 = vadd.f32 %v2610, %v2611
      %v2613 = vrot.slane %v2612, 1
      %v2614 = vadd.f32 %v2612, %v2613
      %v2615 = vrot.slane %v2253, 4
      %v2616 = vadd.f32 %v2253, %v2615
      %v2617 = vrot.slane %v2616, 2
      %v2618 = vadd.f32 %v2616, %v2617
      %v2619 = vrot.slane %v2618, 1
      %v2620 = vadd.f32 %v2618, %v2619
      %v2621 = vrot.slane %v2254, 4
      %v2622 = vadd.f32 %v2254, %v2621
      %v2623 = vrot.slane %v2622, 2
      %v2624 = vadd.f32 %v2622, %v2623
      %v2625 = vrot.slane %v2624, 1
      %v2626 = vadd.f32 %v2624, %v2625
      %v2627 = vrot.slane %v2255, 4
      %v2628 = vadd.f32 %v2255, %v2627
      %v2629 = vrot.slane %v2628, 2
      %v2630 = vadd.f32 %v2628, %v2629
      %v2631 = vrot.slane %v2630, 1
      %v2632 = vadd.f32 %v2630, %v2631
      %v2633 = vrot.slane %v2256, 4
      %v2634 = vadd.f32 %v2256, %v2633
      %v2635 = vrot.slane %v2634, 2
      %v2636 = vadd.f32 %v2634, %v2635
      %v2637 = vrot.slane %v2636, 1
      %v2638 = vadd.f32 %v2636, %v2637
      %v2639 = vrot.slane %v2257, 4
      %v2640 = vadd.f32 %v2257, %v2639
      %v2641 = vrot.slane %v2640, 2
      %v2642 = vadd.f32 %v2640, %v2641
      %v2643 = vrot.slane %v2642, 1
      %v2644 = vadd.f32 %v2642, %v2643
      %v2645 = vrot.slane %v2258, 4
      %v2646 = vadd.f32 %v2258, %v2645
      %v2647 = vrot.slane %v2646, 2
      %v2648 = vadd.f32 %v2646, %v2647
      %v2649 = vrot.slane %v2648, 1
      %v2650 = vadd.f32 %v2648, %v2649
      %v2651 = vrot.slane %v2259, 4
      %v2652 = vadd.f32 %v2259, %v2651
      %v2653 = vrot.slane %v2652, 2
      %v2654 = vadd.f32 %v2652, %v2653
      %v2655 = vrot.slane %v2654, 1
      %v2656 = vadd.f32 %v2654, %v2655
      %v2657 = vrot.slane %v2260, 4
      %v2658 = vadd.f32 %v2260, %v2657
      %v2659 = vrot.slane %v2658, 2
      %v2660 = vadd.f32 %v2658, %v2659
      %v2661 = vrot.slane %v2660, 1
      %v2662 = vadd.f32 %v2660, %v2661
      %v2663 = vrot.slane %v2261, 4
      %v2664 = vadd.f32 %v2261, %v2663
      %v2665 = vrot.slane %v2664, 2
      %v2666 = vadd.f32 %v2664, %v2665
      %v2667 = vrot.slane %v2666, 1
      %v2668 = vadd.f32 %v2666, %v2667
      %v2669 = vrot.slane %v2262, 4
      %v2670 = vadd.f32 %v2262, %v2669
      %v2671 = vrot.slane %v2670, 2
      %v2672 = vadd.f32 %v2670, %v2671
      %v2673 = vrot.slane %v2672, 1
      %v2674 = vadd.f32 %v2672, %v2673
      %v2675 = vrot.slane %v2263, 4
      %v2676 = vadd.f32 %v2263, %v2675
      %v2677 = vrot.slane %v2676, 2
      %v2678 = vadd.f32 %v2676, %v2677
      %v2679 = vrot.slane %v2678, 1
      %v2680 = vadd.f32 %v2678, %v2679
      %v2681 = vrot.slane %v2264, 4
      %v2682 = vadd.f32 %v2264, %v2681
      %v2683 = vrot.slane %v2682, 2
      %v2684 = vadd.f32 %v2682, %v2683
      %v2685 = vrot.slane %v2684, 1
      %v2686 = vadd.f32 %v2684, %v2685
      %v2687 = vrot.slane %v2265, 4
      %v2688 = vadd.f32 %v2265, %v2687
      %v2689 = vrot.slane %v2688, 2
      %v2690 = vadd.f32 %v2688, %v2689
      %v2691 = vrot.slane %v2690, 1
      %v2692 = vadd.f32 %v2690, %v2691
      %v2693 = vrot.slane %v2266, 4
      %v2694 = vadd.f32 %v2266, %v2693
      %v2695 = vrot.slane %v2694, 2
      %v2696 = vadd.f32 %v2694, %v2695
      %v2697 = vrot.slane %v2696, 1
      %v2698 = vadd.f32 %v2696, %v2697
      %v2699 = vrot.slane %v2267, 4
      %v2700 = vadd.f32 %v2267, %v2699
      %v2701 = vrot.slane %v2700, 2
      %v2702 = vadd.f32 %v2700, %v2701
      %v2703 = vrot.slane %v2702, 1
      %v2704 = vadd.f32 %v2702, %v2703
      %v2705 = vrot.slane %v2268, 4
      %v2706 = vadd.f32 %v2268, %v2705
      %v2707 = vrot.slane %v2706, 2
      %v2708 = vadd.f32 %v2706, %v2707
      %v2709 = vrot.slane %v2708, 1
      %v2710 = vadd.f32 %v2708, %v2709
      %v2711 = vrot.slane %v2269, 4
      %v2712 = vadd.f32 %v2269, %v2711
      %v2713 = vrot.slane %v2712, 2
      %v2714 = vadd.f32 %v2712, %v2713
      %v2715 = vrot.slane %v2714, 1
      %v2716 = vadd.f32 %v2714, %v2715
      %v2717 = vrot.slane %v2270, 4
      %v2718 = vadd.f32 %v2270, %v2717
      %v2719 = vrot.slane %v2718, 2
      %v2720 = vadd.f32 %v2718, %v2719
      %v2721 = vrot.slane %v2720, 1
      %v2722 = vadd.f32 %v2720, %v2721
      %v2723 = vrot.slane %v2271, 4
      %v2724 = vadd.f32 %v2271, %v2723
      %v2725 = vrot.slane %v2724, 2
      %v2726 = vadd.f32 %v2724, %v2725
      %v2727 = vrot.slane %v2726, 1
      %v2728 = vadd.f32 %v2726, %v2727
      %v2729 = vrot.slane %v2272, 4
      %v2730 = vadd.f32 %v2272, %v2729
      %v2731 = vrot.slane %v2730, 2
      %v2732 = vadd.f32 %v2730, %v2731
      %v2733 = vrot.slane %v2732, 1
      %v2734 = vadd.f32 %v2732, %v2733
      %v2735 = vrot.slane %v2273, 4
      %v2736 = vadd.f32 %v2273, %v2735
      %v2737 = vrot.slane %v2736, 2
      %v2738 = vadd.f32 %v2736, %v2737
      %v2739 = vrot.slane %v2738, 1
      %v2740 = vadd.f32 %v2738, %v2739
      %v2741 = vrot.slane %v2274, 4
      %v2742 = vadd.f32 %v2274, %v2741
      %v2743 = vrot.slane %v2742, 2
      %v2744 = vadd.f32 %v2742, %v2743
      %v2745 = vrot.slane %v2744, 1
      %v2746 = vadd.f32 %v2744, %v2745
      %v2747 = vrot.slane %v2275, 4
      %v2748 = vadd.f32 %v2275, %v2747
      %v2749 = vrot.slane %v2748, 2
      %v2750 = vadd.f32 %v2748, %v2749
      %v2751 = vrot.slane %v2750, 1
      %v2752 = vadd.f32 %v2750, %v2751
      %v2753 = vrot.slane %v2276, 4
      %v2754 = vadd.f32 %v2276, %v2753
      %v2755 = vrot.slane %v2754, 2
      %v2756 = vadd.f32 %v2754, %v2755
      %v2757 = vrot.slane %v2756, 1
      %v2758 = vadd.f32 %v2756, %v2757
      %v2759 = vrot.slane %v2277, 4
      %v2760 = vadd.f32 %v2277, %v2759
      %v2761 = vrot.slane %v2760, 2
      %v2762 = vadd.f32 %v2760, %v2761
      %v2763 = vrot.slane %v2762, 1
      %v2764 = vadd.f32 %v2762, %v2763
      %v2765 = vrot.slane %v2278, 4
      %v2766 = vadd.f32 %v2278, %v2765
      %v2767 = vrot.slane %v2766, 2
      %v2768 = vadd.f32 %v2766, %v2767
      %v2769 = vrot.slane %v2768, 1
      %v2770 = vadd.f32 %v2768, %v2769
      %v2771 = vrot.slane %v2279, 4
      %v2772 = vadd.f32 %v2279, %v2771
      %v2773 = vrot.slane %v2772, 2
      %v2774 = vadd.f32 %v2772, %v2773
      %v2775 = vrot.slane %v2774, 1
      %v2776 = vadd.f32 %v2774, %v2775
      %v2777 = vrot.slane %v2280, 4
      %v2778 = vadd.f32 %v2280, %v2777
      %v2779 = vrot.slane %v2778, 2
      %v2780 = vadd.f32 %v2778, %v2779
      %v2781 = vrot.slane %v2780, 1
      %v2782 = vadd.f32 %v2780, %v2781
      %v2783 = vrot.slane %v2281, 4
      %v2784 = vadd.f32 %v2281, %v2783
      %v2785 = vrot.slane %v2784, 2
      %v2786 = vadd.f32 %v2784, %v2785
      %v2787 = vrot.slane %v2786, 1
      %v2788 = vadd.f32 %v2786, %v2787
      %v2789 = vrot.slane %v2282, 4
      %v2790 = vadd.f32 %v2282, %v2789
      %v2791 = vrot.slane %v2790, 2
      %v2792 = vadd.f32 %v2790, %v2791
      %v2793 = vrot.slane %v2792, 1
      %v2794 = vadd.f32 %v2792, %v2793
      %v2795 = vrot.slane %v2283, 4
      %v2796 = vadd.f32 %v2283, %v2795
      %v2797 = vrot.slane %v2796, 2
      %v2798 = vadd.f32 %v2796, %v2797
      %v2799 = vrot.slane %v2798, 1
      %v2800 = vadd.f32 %v2798, %v2799
      %v2801 = vrot.slane %v2284, 4
      %v2802 = vadd.f32 %v2284, %v2801
      %v2803 = vrot.slane %v2802, 2
      %v2804 = vadd.f32 %v2802, %v2803
      %v2805 = vrot.slane %v2804, 1
      %v2806 = vadd.f32 %v2804, %v2805
      %v2807 = vrot.slane %v2285, 4
      %v2808 = vadd.f32 %v2285, %v2807
      %v2809 = vrot.slane %v2808, 2
      %v2810 = vadd.f32 %v2808, %v2809
      %v2811 = vrot.slane %v2810, 1
      %v2812 = vadd.f32 %v2810, %v2811
      %v2813 = vrot.slane %v2286, 4
      %v2814 = vadd.f32 %v2286, %v2813
      %v2815 = vrot.slane %v2814, 2
      %v2816 = vadd.f32 %v2814, %v2815
      %v2817 = vrot.slane %v2816, 1
      %v2818 = vadd.f32 %v2816, %v2817
      %v2819 = vrot.slane %v2287, 4
      %v2820 = vadd.f32 %v2287, %v2819
      %v2821 = vrot.slane %v2820, 2
      %v2822 = vadd.f32 %v2820, %v2821
      %v2823 = vrot.slane %v2822, 1
      %v2824 = vadd.f32 %v2822, %v2823
      %v2825 = vrot.slane %v2288, 4
      %v2826 = vadd.f32 %v2288, %v2825
      %v2827 = vrot.slane %v2826, 2
      %v2828 = vadd.f32 %v2826, %v2827
      %v2829 = vrot.slane %v2828, 1
      %v2830 = vadd.f32 %v2828, %v2829
      %v2831 = vrot.slane %v2289, 4
      %v2832 = vadd.f32 %v2289, %v2831
      %v2833 = vrot.slane %v2832, 2
      %v2834 = vadd.f32 %v2832, %v2833
      %v2835 = vrot.slane %v2834, 1
      %v2836 = vadd.f32 %v2834, %v2835
      %v2837 = vrot.slane %v2290, 4
      %v2838 = vadd.f32 %v2290, %v2837
      %v2839 = vrot.slane %v2838, 2
      %v2840 = vadd.f32 %v2838, %v2839
      %v2841 = vrot.slane %v2840, 1
      %v2842 = vadd.f32 %v2840, %v2841
      %v2843 = vrot.slane %v2291, 4
      %v2844 = vadd.f32 %v2291, %v2843
      %v2845 = vrot.slane %v2844, 2
      %v2846 = vadd.f32 %v2844, %v2845
      %v2847 = vrot.slane %v2846, 1
      %v2848 = vadd.f32 %v2846, %v2847
      %v2849 = vrot.slane %v2292, 4
      %v2850 = vadd.f32 %v2292, %v2849
      %v2851 = vrot.slane %v2850, 2
      %v2852 = vadd.f32 %v2850, %v2851
      %v2853 = vrot.slane %v2852, 1
      %v2854 = vadd.f32 %v2852, %v2853
      %v2855 = vrot.slane %v2293, 4
      %v2856 = vadd.f32 %v2293, %v2855
      %v2857 = vrot.slane %v2856, 2
      %v2858 = vadd.f32 %v2856, %v2857
      %v2859 = vrot.slane %v2858, 1
      %v2860 = vadd.f32 %v2858, %v2859
      %v2861 = vrot.slane %v2294, 4
      %v2862 = vadd.f32 %v2294, %v2861
      %v2863 = vrot.slane %v2862, 2
      %v2864 = vadd.f32 %v2862, %v2863
      %v2865 = vrot.slane %v2864, 1
      %v2866 = vadd.f32 %v2864, %v2865
      %v2867 = vrot.slane %v2295, 4
      %v2868 = vadd.f32 %v2295, %v2867
      %v2869 = vrot.slane %v2868, 2
      %v2870 = vadd.f32 %v2868, %v2869
      %v2871 = vrot.slane %v2870, 1
      %v2872 = vadd.f32 %v2870, %v2871
      %v2873 = vrot.slane %v2296, 4
      %v2874 = vadd.f32 %v2296, %v2873
      %v2875 = vrot.slane %v2874, 2
      %v2876 = vadd.f32 %v2874, %v2875
      %v2877 = vrot.slane %v2876, 1
      %v2878 = vadd.f32 %v2876, %v2877
      %v2879 = vrot.slane %v2297, 4
      %v2880 = vadd.f32 %v2297, %v2879
      %v2881 = vrot.slane %v2880, 2
      %v2882 = vadd.f32 %v2880, %v2881
      %v2883 = vrot.slane %v2882, 1
      %v2884 = vadd.f32 %v2882, %v2883
      %v2885 = vrot.slane %v2298, 4
      %v2886 = vadd.f32 %v2298, %v2885
      %v2887 = vrot.slane %v2886, 2
      %v2888 = vadd.f32 %v2886, %v2887
      %v2889 = vrot.slane %v2888, 1
      %v2890 = vadd.f32 %v2888, %v2889
      %v2891 = vrot.slane %v2299, 4
      %v2892 = vadd.f32 %v2299, %v2891
      %v2893 = vrot.slane %v2892, 2
      %v2894 = vadd.f32 %v2892, %v2893
      %v2895 = vrot.slane %v2894, 1
      %v2896 = vadd.f32 %v2894, %v2895
      %v2897 = vrot.slane %v2300, 4
      %v2898 = vadd.f32 %v2300, %v2897
      %v2899 = vrot.slane %v2898, 2
      %v2900 = vadd.f32 %v2898, %v2899
      %v2901 = vrot.slane %v2900, 1
      %v2902 = vadd.f32 %v2900, %v2901
      %v2903 = vrot.slane %v2301, 4
      %v2904 = vadd.f32 %v2301, %v2903
      %v2905 = vrot.slane %v2904, 2
      %v2906 = vadd.f32 %v2904, %v2905
      %v2907 = vrot.slane %v2906, 1
      %v2908 = vadd.f32 %v2906, %v2907
      %v2909 = vrot.slane %v2302, 4
      %v2910 = vadd.f32 %v2302, %v2909
      %v2911 = vrot.slane %v2910, 2
      %v2912 = vadd.f32 %v2910, %v2911
      %v2913 = vrot.slane %v2912, 1
      %v2914 = vadd.f32 %v2912, %v2913
      %v2915 = vrot.slane %v2303, 4
      %v2916 = vadd.f32 %v2303, %v2915
      %v2917 = vrot.slane %v2916, 2
      %v2918 = vadd.f32 %v2916, %v2917
      %v2919 = vrot.slane %v2918, 1
      %v2920 = vadd.f32 %v2918, %v2919
      %v2921 = vrot.slane %v2304, 4
      %v2922 = vadd.f32 %v2304, %v2921
      %v2923 = vrot.slane %v2922, 2
      %v2924 = vadd.f32 %v2922, %v2923
      %v2925 = vrot.slane %v2924, 1
      %v2926 = vadd.f32 %v2924, %v2925
      %v2927 = vrot.slane %v2305, 4
      %v2928 = vadd.f32 %v2305, %v2927
      %v2929 = vrot.slane %v2928, 2
      %v2930 = vadd.f32 %v2928, %v2929
      %v2931 = vrot.slane %v2930, 1
      %v2932 = vadd.f32 %v2930, %v2931
      %v2933 = vrot.slane %v2306, 4
      %v2934 = vadd.f32 %v2306, %v2933
      %v2935 = vrot.slane %v2934, 2
      %v2936 = vadd.f32 %v2934, %v2935
      %v2937 = vrot.slane %v2936, 1
      %v2938 = vadd.f32 %v2936, %v2937
      %v2939 = vrot.slane %v2307, 4
      %v2940 = vadd.f32 %v2307, %v2939
      %v2941 = vrot.slane %v2940, 2
      %v2942 = vadd.f32 %v2940, %v2941
      %v2943 = vrot.slane %v2942, 1
      %v2944 = vadd.f32 %v2942, %v2943
      %v2945 = vrot.slane %v2308, 4
      %v2946 = vadd.f32 %v2308, %v2945
      %v2947 = vrot.slane %v2946, 2
      %v2948 = vadd.f32 %v2946, %v2947
      %v2949 = vrot.slane %v2948, 1
      %v2950 = vadd.f32 %v2948, %v2949
      %v2951 = vrot.slane %v2309, 4
      %v2952 = vadd.f32 %v2309, %v2951
      %v2953 = vrot.slane %v2952, 2
      %v2954 = vadd.f32 %v2952, %v2953
      %v2955 = vrot.slane %v2954, 1
      %v2956 = vadd.f32 %v2954, %v2955
      %v2957 = vrot.slane %v2310, 4
      %v2958 = vadd.f32 %v2310, %v2957
      %v2959 = vrot.slane %v2958, 2
      %v2960 = vadd.f32 %v2958, %v2959
      %v2961 = vrot.slane %v2960, 1
      %v2962 = vadd.f32 %v2960, %v2961
      %v2963 = vrot.slane %v2311, 4
      %v2964 = vadd.f32 %v2311, %v2963
      %v2965 = vrot.slane %v2964, 2
      %v2966 = vadd.f32 %v2964, %v2965
      %v2967 = vrot.slane %v2966, 1
      %v2968 = vadd.f32 %v2966, %v2967
      %v2969 = vrot.slane %v2312, 4
      %v2970 = vadd.f32 %v2312, %v2969
      %v2971 = vrot.slane %v2970, 2
      %v2972 = vadd.f32 %v2970, %v2971
      %v2973 = vrot.slane %v2972, 1
      %v2974 = vadd.f32 %v2972, %v2973
      %v2975 = vrot.slane %v2313, 4
      %v2976 = vadd.f32 %v2313, %v2975
      %v2977 = vrot.slane %v2976, 2
      %v2978 = vadd.f32 %v2976, %v2977
      %v2979 = vrot.slane %v2978, 1
      %v2980 = vadd.f32 %v2978, %v2979
      %v2981 = vrot.slane %v2314, 4
      %v2982 = vadd.f32 %v2314, %v2981
      %v2983 = vrot.slane %v2982, 2
      %v2984 = vadd.f32 %v2982, %v2983
      %v2985 = vrot.slane %v2984, 1
      %v2986 = vadd.f32 %v2984, %v2985
      %v2987 = vlaneseq
      %v2988 = vand.u32 %v2987, 127
      %v2989 = vlaneseq
      %v2990 = vshrl.u32 %v2989, 7
      %v2991 = vsub.s32 %v2988, %v2990
      %v2992 = vrot.slane %v1646, %v2991
      %v2993 = vlaneseq
      %v2994 = vshrl.u32 %v2993, 7
      %v2995 = vsub.s32 %v2988, %v2994
      %v2996 = vrot.slane %v1651, %v2995
      %v2997 = vlaneseq
      %v2998 = vshrl.u32 %v2997, 7
      %v2999 = vsub.s32 %v2988, %v2998
      %v3000 = vrot.slane %v1656, %v2999
      %v3001 = vlaneseq
      %v3002 = vshrl.u32 %v3001, 7
      %v3003 = vsub.s32 %v2988, %v3002
      %v3004 = vrot.slane %v1661, %v3003
      %v3005 = vlaneseq
      %v3006 = vshrl.u32 %v3005, 7
      %v3007 = vsub.s32 %v2988, %v3006
      %v3008 = vrot.slane %v1666, %v3007
      %v3009 = vlaneseq
      %v3010 = vshrl.u32 %v3009, 7
      %v3011 = vsub.s32 %v2988, %v3010
      %v3012 = vrot.slane %v1671, %v3011
      %v3013 = vlaneseq
      %v3014 = vshrl.u32 %v3013, 7
      %v3015 = vsub.s32 %v2988, %v3014
      %v3016 = vrot.slane %v1676, %v3015
      %v3017 = vlaneseq
      %v3018 = vshrl.u32 %v3017, 7
      %v3019 = vsub.s32 %v2988, %v3018
      %v3020 = vrot.slane %v1681, %v3019
      %v3021 = vlaneseq
      %v3022 = vshrl.u32 %v3021, 7
      %v3023 = vsub.s32 %v2988, %v3022
      %v3024 = vrot.slane %v1686, %v3023
      %v3025 = vlaneseq
      %v3026 = vshrl.u32 %v3025, 7
      %v3027 = vsub.s32 %v2988, %v3026
      %v3028 = vrot.slane %v1691, %v3027
      %v3029 = vlaneseq
      %v3030 = vshrl.u32 %v3029, 7
      %v3031 = vsub.s32 %v2988, %v3030
      %v3032 = vrot.slane %v1696, %v3031
      %v3033 = vlaneseq
      %v3034 = vshrl.u32 %v3033, 7
      %v3035 = vsub.s32 %v2988, %v3034
      %v3036 = vrot.slane %v1701, %v3035
      %v3037 = vlaneseq
      %v3038 = vshrl.u32 %v3037, 7
      %v3039 = vsub.s32 %v2988, %v3038
      %v3040 = vrot.slane %v1706, %v3039
      %v3041 = vlaneseq
      %v3042 = vshrl.u32 %v3041, 7
      %v3043 = vsub.s32 %v2988, %v3042
      %v3044 = vrot.slane %v1711, %v3043
      %v3045 = vlaneseq
      %v3046 = vshrl.u32 %v3045, 7
      %v3047 = vsub.s32 %v2988, %v3046
      %v3048 = vrot.slane %v1716, %v3047
      %v3049 = vlaneseq
      %v3050 = vshrl.u32 %v3049, 7
      %v3051 = vsub.s32 %v2988, %v3050
      %v3052 = vrot.slane %v1721, %v3051
      %v3053 = vlaneseq
      %v3054 = vshrl.u32 %v3053, 7
      %v3055 = vsub.s32 %v2988, %v3054
      %v3056 = vrot.slane %v1726, %v3055
      %v3057 = vlaneseq
      %v3058 = vshrl.u32 %v3057, 7
      %v3059 = vsub.s32 %v2988, %v3058
      %v3060 = vrot.slane %v1731, %v3059
      %v3061 = vlaneseq
      %v3062 = vshrl.u32 %v3061, 7
      %v3063 = vsub.s32 %v2988, %v3062
      %v3064 = vrot.slane %v1736, %v3063
      %v3065 = vlaneseq
      %v3066 = vshrl.u32 %v3065, 7
      %v3067 = vsub.s32 %v2988, %v3066
      %v3068 = vrot.slane %v1741, %v3067
      %v3069 = vlaneseq
      %v3070 = vshrl.u32 %v3069, 7
      %v3071 = vsub.s32 %v2988, %v3070
      %v3072 = vrot.slane %v1746, %v3071
      %v3073 = vlaneseq
      %v3074 = vshrl.u32 %v3073, 7
      %v3075 = vsub.s32 %v2988, %v3074
      %v3076 = vrot.slane %v1751, %v3075
      %v3077 = vlaneseq
      %v3078 = vshrl.u32 %v3077, 7
      %v3079 = vsub.s32 %v2988, %v3078
      %v3080 = vrot.slane %v1756, %v3079
      %v3081 = vlaneseq
      %v3082 = vshrl.u32 %v3081, 7
      %v3083 = vsub.s32 %v2988, %v3082
      %v3084 = vrot.slane %v1761, %v3083
      %v3085 = vlaneseq
      %v3086 = vshrl.u32 %v3085, 7
      %v3087 = vsub.s32 %v2988, %v3086
      %v3088 = vrot.slane %v1766, %v3087
      %v3089 = vlaneseq
      %v3090 = vshrl.u32 %v3089, 7
      %v3091 = vsub.s32 %v2988, %v3090
      %v3092 = vrot.slane %v1771, %v3091
      %v3093 = vlaneseq
      %v3094 = vshrl.u32 %v3093, 7
      %v3095 = vsub.s32 %v2988, %v3094
      %v3096 = vrot.slane %v1776, %v3095
      %v3097 = vlaneseq
      %v3098 = vshrl.u32 %v3097, 7
      %v3099 = vsub.s32 %v2988, %v3098
      %v3100 = vrot.slane %v1781, %v3099
      %v3101 = vlaneseq
      %v3102 = vshrl.u32 %v3101, 7
      %v3103 = vsub.s32 %v2988, %v3102
      %v3104 = vrot.slane %v1786, %v3103
      %v3105 = vlaneseq
      %v3106 = vshrl.u32 %v3105, 7
      %v3107 = vsub.s32 %v2988, %v3106
      %v3108 = vrot.slane %v1791, %v3107
      %v3109 = vlaneseq
      %v3110 = vshrl.u32 %v3109, 7
      %v3111 = vsub.s32 %v2988, %v3110
      %v3112 = vrot.slane %v1796, %v3111
      %v3113 = vlaneseq
      %v3114 = vshrl.u32 %v3113, 7
      %v3115 = vsub.s32 %v2988, %v3114
      %v3116 = vrot.slane %v1801, %v3115
      %v3117 = vlaneseq
      %v3118 = vshrl.u32 %v3117, 7
      %v3119 = vsub.s32 %v2988, %v3118
      %v3120 = vrot.slane %v1806, %v3119
      %v3121 = vlaneseq
      %v3122 = vshrl.u32 %v3121, 7
      %v3123 = vsub.s32 %v2988, %v3122
      %v3124 = vrot.slane %v1811, %v3123
      %v3125 = vlaneseq
      %v3126 = vshrl.u32 %v3125, 7
      %v3127 = vsub.s32 %v2988, %v3126
      %v3128 = vrot.slane %v1816, %v3127
      %v3129 = vlaneseq
      %v3130 = vshrl.u32 %v3129, 7
      %v3131 = vsub.s32 %v2988, %v3130
      %v3132 = vrot.slane %v1821, %v3131
      %v3133 = vlaneseq
      %v3134 = vshrl.u32 %v3133, 7
      %v3135 = vsub.s32 %v2988, %v3134
      %v3136 = vrot.slane %v1826, %v3135
      %v3137 = vlaneseq
      %v3138 = vshrl.u32 %v3137, 7
      %v3139 = vsub.s32 %v2988, %v3138
      %v3140 = vrot.slane %v1831, %v3139
      %v3141 = vlaneseq
      %v3142 = vshrl.u32 %v3141, 7
      %v3143 = vsub.s32 %v2988, %v3142
      %v3144 = vrot.slane %v1836, %v3143
      %v3145 = vlaneseq
      %v3146 = vshrl.u32 %v3145, 7
      %v3147 = vsub.s32 %v2988, %v3146
      %v3148 = vrot.slane %v1841, %v3147
      %v3149 = vlaneseq
      %v3150 = vshrl.u32 %v3149, 7
      %v3151 = vsub.s32 %v2988, %v3150
      %v3152 = vrot.slane %v1846, %v3151
      %v3153 = vlaneseq
      %v3154 = vshrl.u32 %v3153, 7
      %v3155 = vsub.s32 %v2988, %v3154
      %v3156 = vrot.slane %v1851, %v3155
      %v3157 = vlaneseq
      %v3158 = vshrl.u32 %v3157, 7
      %v3159 = vsub.s32 %v2988, %v3158
      %v3160 = vrot.slane %v1856, %v3159
      %v3161 = vlaneseq
      %v3162 = vshrl.u32 %v3161, 7
      %v3163 = vsub.s32 %v2988, %v3162
      %v3164 = vrot.slane %v1861, %v3163
      %v3165 = vlaneseq
      %v3166 = vshrl.u32 %v3165, 7
      %v3167 = vsub.s32 %v2988, %v3166
      %v3168 = vrot.slane %v1866, %v3167
      %v3169 = vlaneseq
      %v3170 = vshrl.u32 %v3169, 7
      %v3171 = vsub.s32 %v2988, %v3170
      %v3172 = vrot.slane %v1871, %v3171
      %v3173 = vlaneseq
      %v3174 = vshrl.u32 %v3173, 7
      %v3175 = vsub.s32 %v2988, %v3174
      %v3176 = vrot.slane %v1876, %v3175
      %v3177 = vlaneseq
      %v3178 = vshrl.u32 %v3177, 7
      %v3179 = vsub.s32 %v2988, %v3178
      %v3180 = vrot.slane %v1881, %v3179
      %v3181 = vlaneseq
      %v3182 = vshrl.u32 %v3181, 7
      %v3183 = vsub.s32 %v2988, %v3182
      %v3184 = vrot.slane %v1886, %v3183
      %v3185 = vlaneseq
      %v3186 = vshrl.u32 %v3185, 7
      %v3187 = vsub.s32 %v2988, %v3186
      %v3188 = vrot.slane %v1891, %v3187
      %v3189 = vlaneseq
      %v3190 = vshrl.u32 %v3189, 7
      %v3191 = vsub.s32 %v2988, %v3190
      %v3192 = vrot.slane %v1896, %v3191
      %v3193 = vlaneseq
      %v3194 = vshrl.u32 %v3193, 7
      %v3195 = vsub.s32 %v2988, %v3194
      %v3196 = vrot.slane %v1901, %v3195
      %v3197 = vlaneseq
      %v3198 = vshrl.u32 %v3197, 7
      %v3199 = vsub.s32 %v2988, %v3198
      %v3200 = vrot.slane %v1906, %v3199
      %v3201 = vlaneseq
      %v3202 = vshrl.u32 %v3201, 7
      %v3203 = vsub.s32 %v2988, %v3202
      %v3204 = vrot.slane %v1911, %v3203
      %v3205 = vlaneseq
      %v3206 = vshrl.u32 %v3205, 7
      %v3207 = vsub.s32 %v2988, %v3206
      %v3208 = vrot.slane %v1916, %v3207
      %v3209 = vlaneseq
      %v3210 = vshrl.u32 %v3209, 7
      %v3211 = vsub.s32 %v2988, %v3210
      %v3212 = vrot.slane %v1921, %v3211
      %v3213 = vlaneseq
      %v3214 = vshrl.u32 %v3213, 7
      %v3215 = vsub.s32 %v2988, %v3214
      %v3216 = vrot.slane %v1926, %v3215
      %v3217 = vlaneseq
      %v3218 = vshrl.u32 %v3217, 7
      %v3219 = vsub.s32 %v2988, %v3218
      %v3220 = vrot.slane %v1931, %v3219
      %v3221 = vlaneseq
      %v3222 = vshrl.u32 %v3221, 7
      %v3223 = vsub.s32 %v2988, %v3222
      %v3224 = vrot.slane %v1936, %v3223
      %v3225 = vlaneseq
      %v3226 = vshrl.u32 %v3225, 7
      %v3227 = vsub.s32 %v2988, %v3226
      %v3228 = vrot.slane %v1941, %v3227
      %v3229 = vlaneseq
      %v3230 = vshrl.u32 %v3229, 7
      %v3231 = vsub.s32 %v2988, %v3230
      %v3232 = vrot.slane %v1946, %v3231
      %v3233 = vlaneseq
      %v3234 = vshrl.u32 %v3233, 7
      %v3235 = vsub.s32 %v2988, %v3234
      %v3236 = vrot.slane %v1951, %v3235
      %v3237 = vlaneseq
      %v3238 = vshrl.u32 %v3237, 7
      %v3239 = vsub.s32 %v2988, %v3238
      %v3240 = vrot.slane %v1956, %v3239
      %v3241 = vlaneseq
      %v3242 = vshrl.u32 %v3241, 7
      %v3243 = vsub.s32 %v2988, %v3242
      %v3244 = vrot.slane %v1961, %v3243
      %v3245 = vlaneseq
      %v3246 = vshrl.u32 %v3245, 7
      %v3247 = vsub.s32 %v2988, %v3246
      %v3248 = vrot.slane %v1966, %v3247
      %v3249 = vlaneseq
      %v3250 = vshrl.u32 %v3249, 7
      %v3251 = vsub.s32 %v2988, %v3250
      %v3252 = vrot.slane %v1971, %v3251
      %v3253 = vlaneseq
      %v3254 = vshrl.u32 %v3253, 7
      %v3255 = vsub.s32 %v2988, %v3254
      %v3256 = vrot.slane %v1976, %v3255
      %v3257 = vlaneseq
      %v3258 = vshrl.u32 %v3257, 7
      %v3259 = vsub.s32 %v2988, %v3258
      %v3260 = vrot.slane %v1981, %v3259
      %v3261 = vlaneseq
      %v3262 = vshrl.u32 %v3261, 7
      %v3263 = vsub.s32 %v2988, %v3262
      %v3264 = vrot.slane %v1986, %v3263
      %v3265 = vlaneseq
      %v3266 = vshrl.u32 %v3265, 7
      %v3267 = vsub.s32 %v2988, %v3266
      %v3268 = vrot.slane %v1991, %v3267
      %v3269 = vlaneseq
      %v3270 = vshrl.u32 %v3269, 7
      %v3271 = vsub.s32 %v2988, %v3270
      %v3272 = vrot.slane %v1996, %v3271
      %v3273 = vlaneseq
      %v3274 = vshrl.u32 %v3273, 7
      %v3275 = vsub.s32 %v2988, %v3274
      %v3276 = vrot.slane %v2001, %v3275
      %v3277 = vlaneseq
      %v3278 = vshrl.u32 %v3277, 7
      %v3279 = vsub.s32 %v2988, %v3278
      %v3280 = vrot.slane %v2006, %v3279
      %v3281 = vlaneseq
      %v3282 = vshrl.u32 %v3281, 7
      %v3283 = vsub.s32 %v2988, %v3282
      %v3284 = vrot.slane %v2011, %v3283
      %v3285 = vlaneseq
      %v3286 = vshrl.u32 %v3285, 7
      %v3287 = vsub.s32 %v2988, %v3286
      %v3288 = vrot.slane %v2016, %v3287
      %v3289 = vlaneseq
      %v3290 = vshrl.u32 %v3289, 7
      %v3291 = vsub.s32 %v2988, %v3290
      %v3292 = vrot.slane %v2021, %v3291
      %v3293 = vlaneseq
      %v3294 = vshrl.u32 %v3293, 7
      %v3295 = vsub.s32 %v2988, %v3294
      %v3296 = vrot.slane %v2026, %v3295
      %v3297 = vlaneseq
      %v3298 = vshrl.u32 %v3297, 7
      %v3299 = vsub.s32 %v2988, %v3298
      %v3300 = vrot.slane %v2031, %v3299
      %v3301 = vlaneseq
      %v3302 = vshrl.u32 %v3301, 7
      %v3303 = vsub.s32 %v2988, %v3302
      %v3304 = vrot.slane %v2036, %v3303
      %v3305 = vlaneseq
      %v3306 = vshrl.u32 %v3305, 7
      %v3307 = vsub.s32 %v2988, %v3306
      %v3308 = vrot.slane %v2041, %v3307
      %v3309 = vlaneseq
      %v3310 = vshrl.u32 %v3309, 7
      %v3311 = vsub.s32 %v2988, %v3310
      %v3312 = vrot.slane %v2046, %v3311
      %v3313 = vlaneseq
      %v3314 = vshrl.u32 %v3313, 7
      %v3315 = vsub.s32 %v2988, %v3314
      %v3316 = vrot.slane %v2051, %v3315
      %v3317 = vlaneseq
      %v3318 = vshrl.u32 %v3317, 7
      %v3319 = vsub.s32 %v2988, %v3318
      %v3320 = vrot.slane %v2056, %v3319
      %v3321 = vlaneseq
      %v3322 = vshrl.u32 %v3321, 7
      %v3323 = vsub.s32 %v2988, %v3322
      %v3324 = vrot.slane %v2061, %v3323
      %v3325 = vlaneseq
      %v3326 = vshrl.u32 %v3325, 7
      %v3327 = vsub.s32 %v2988, %v3326
      %v3328 = vrot.slane %v2066, %v3327
      %v3329 = vlaneseq
      %v3330 = vshrl.u32 %v3329, 7
      %v3331 = vsub.s32 %v2988, %v3330
      %v3332 = vrot.slane %v2071, %v3331
      %v3333 = vlaneseq
      %v3334 = vshrl.u32 %v3333, 7
      %v3335 = vsub.s32 %v2988, %v3334
      %v3336 = vrot.slane %v2076, %v3335
      %v3337 = vlaneseq
      %v3338 = vshrl.u32 %v3337, 7
      %v3339 = vsub.s32 %v2988, %v3338
      %v3340 = vrot.slane %v2081, %v3339
      %v3341 = vlaneseq
      %v3342 = vshrl.u32 %v3341, 7
      %v3343 = vsub.s32 %v2988, %v3342
      %v3344 = vrot.slane %v2086, %v3343
      %v3345 = vlaneseq
      %v3346 = vshrl.u32 %v3345, 7
      %v3347 = vsub.s32 %v2988, %v3346
      %v3348 = vrot.slane %v2091, %v3347
      %v3349 = vlaneseq
      %v3350 = vshrl.u32 %v3349, 7
      %v3351 = vsub.s32 %v2988, %v3350
      %v3352 = vrot.slane %v2096, %v3351
      %v3353 = vlaneseq
      %v3354 = vshrl.u32 %v3353, 7
      %v3355 = vsub.s32 %v2988, %v3354
      %v3356 = vrot.slane %v2101, %v3355
      %v3357 = vlaneseq
      %v3358 = vshrl.u32 %v3357, 7
      %v3359 = vsub.s32 %v2988, %v3358
      %v3360 = vrot.slane %v2106, %v3359
      %v3361 = vlaneseq
      %v3362 = vshrl.u32 %v3361, 7
      %v3363 = vsub.s32 %v2988, %v3362
      %v3364 = vrot.slane %v2111, %v3363
      %v3365 = vlaneseq
      %v3366 = vshrl.u32 %v3365, 7
      %v3367 = vsub.s32 %v2988, %v3366
      %v3368 = vrot.slane %v2116, %v3367
      %v3369 = vlaneseq
      %v3370 = vshrl.u32 %v3369, 7
      %v3371 = vsub.s32 %v2988, %v3370
      %v3372 = vrot.slane %v2121, %v3371
      %v3373 = vlaneseq
      %v3374 = vshrl.u32 %v3373, 7
      %v3375 = vsub.s32 %v2988, %v3374
      %v3376 = vrot.slane %v2126, %v3375
      %v3377 = vlaneseq
      %v3378 = vshrl.u32 %v3377, 7
      %v3379 = vsub.s32 %v2988, %v3378
      %v3380 = vrot.slane %v2131, %v3379
      %v3381 = vlaneseq
      %v3382 = vshrl.u32 %v3381, 7
      %v3383 = vsub.s32 %v2988, %v3382
      %v3384 = vrot.slane %v2136, %v3383
      %v3385 = vlaneseq
      %v3386 = vshrl.u32 %v3385, 7
      %v3387 = vsub.s32 %v2988, %v3386
      %v3388 = vrot.slane %v2141, %v3387
      %v3389 = vlaneseq
      %v3390 = vshrl.u32 %v3389, 7
      %v3391 = vsub.s32 %v2988, %v3390
      %v3392 = vrot.slane %v2146, %v3391
      %v3393 = vlaneseq
      %v3394 = vshrl.u32 %v3393, 7
      %v3395 = vsub.s32 %v2988, %v3394
      %v3396 = vrot.slane %v2151, %v3395
      %v3397 = vlaneseq
      %v3398 = vshrl.u32 %v3397, 7
      %v3399 = vsub.s32 %v2988, %v3398
      %v3400 = vrot.slane %v2156, %v3399
      %v3401 = vlaneseq
      %v3402 = vshrl.u32 %v3401, 7
      %v3403 = vsub.s32 %v2988, %v3402
      %v3404 = vrot.slane %v2161, %v3403
      %v3405 = vlaneseq
      %v3406 = vshrl.u32 %v3405, 7
      %v3407 = vsub.s32 %v2988, %v3406
      %v3408 = vrot.slane %v2166, %v3407
      %v3409 = vlaneseq
      %v3410 = vshrl.u32 %v3409, 7
      %v3411 = vsub.s32 %v2988, %v3410
      %v3412 = vrot.slane %v2171, %v3411
      %v3413 = vlaneseq
      %v3414 = vshrl.u32 %v3413, 7
      %v3415 = vsub.s32 %v2988, %v3414
      %v3416 = vrot.slane %v2176, %v3415
      %v3417 = vlaneseq
      %v3418 = vshrl.u32 %v3417, 7
      %v3419 = vsub.s32 %v2988, %v3418
      %v3420 = vrot.slane %v2181, %v3419
      %v3421 = vlaneseq
      %v3422 = vshrl.u32 %v3421, 7
      %v3423 = vsub.s32 %v2988, %v3422
      %v3424 = vrot.slane %v2186, %v3423
      %v3425 = vlaneseq
      %v3426 = vshrl.u32 %v3425, 7
      %v3427 = vsub.s32 %v2988, %v3426
      %v3428 = vrot.slane %v2191, %v3427
      %v3429 = vlaneseq
      %v3430 = vshrl.u32 %v3429, 7
      %v3431 = vsub.s32 %v2988, %v3430
      %v3432 = vrot.slane %v2196, %v3431
      %v3433 = vlaneseq
      %v3434 = vshrl.u32 %v3433, 7
      %v3435 = vsub.s32 %v2988, %v3434
      %v3436 = vrot.slane %v2201, %v3435
      %vm3437 = vcmask 1041409
      %v3438 = vsel %vm3437, %v2996, %v2992
      %vm3439 = vcmask 1042434
      %v3440 = vsel %vm3439, %v3000, %v3438
      %vm3441 = vcmask 1043459
      %v3442 = vsel %vm3441, %v3004, %v3440
      %vm3443 = vcmask 1044484
      %v3444 = vsel %vm3443, %v3008, %v3442
      %vm3445 = vcmask 1045509
      %v3446 = vsel %vm3445, %v3012, %v3444
      %vm3447 = vcmask 1046534
      %v3448 = vsel %vm3447, %v3016, %v3446
      %vm3449 = vcmask 1047559
      %v3450 = vsel %vm3449, %v3020, %v3448
      %v3451 = vsel %vm3437, %v3028, %v3024
      %v3452 = vsel %vm3439, %v3032, %v3451
      %v3453 = vsel %vm3441, %v3036, %v3452
      %v3454 = vsel %vm3443, %v3040, %v3453
      %v3455 = vsel %vm3445, %v3044, %v3454
      %v3456 = vsel %vm3447, %v3048, %v3455
      %v3457 = vsel %vm3449, %v3052, %v3456
      %v3458 = vsel %vm3437, %v3060, %v3056
      %v3459 = vsel %vm3439, %v3064, %v3458
      %v3460 = vsel %vm3441, %v3068, %v3459
      %v3461 = vsel %vm3443, %v3072, %v3460
      %v3462 = vsel %vm3445, %v3076, %v3461
      %v3463 = vsel %vm3447, %v3080, %v3462
      %v3464 = vsel %vm3449, %v3084, %v3463
      %v3465 = vsel %vm3437, %v3092, %v3088
      %v3466 = vsel %vm3439, %v3096, %v3465
      %v3467 = vsel %vm3441, %v3100, %v3466
      %v3468 = vsel %vm3443, %v3104, %v3467
      %v3469 = vsel %vm3445, %v3108, %v3468
      %v3470 = vsel %vm3447, %v3112, %v3469
      %v3471 = vsel %vm3449, %v3116, %v3470
      %v3472 = vsel %vm3437, %v3124, %v3120
      %v3473 = vsel %vm3439, %v3128, %v3472
      %v3474 = vsel %vm3441, %v3132, %v3473
      %v3475 = vsel %vm3443, %v3136, %v3474
      %v3476 = vsel %vm3445, %v3140, %v3475
      %v3477 = vsel %vm3447, %v3144, %v3476
      %v3478 = vsel %vm3449, %v3148, %v3477
      %v3479 = vsel %vm3437, %v3156, %v3152
      %v3480 = vsel %vm3439, %v3160, %v3479
      %v3481 = vsel %vm3441, %v3164, %v3480
      %v3482 = vsel %vm3443, %v3168, %v3481
      %v3483 = vsel %vm3445, %v3172, %v3482
      %v3484 = vsel %vm3447, %v3176, %v3483
      %v3485 = vsel %vm3449, %v3180, %v3484
      %v3486 = vsel %vm3437, %v3188, %v3184
      %v3487 = vsel %vm3439, %v3192, %v3486
      %v3488 = vsel %vm3441, %v3196, %v3487
      %v3489 = vsel %vm3443, %v3200, %v3488
      %v3490 = vsel %vm3445, %v3204, %v3489
      %v3491 = vsel %vm3447, %v3208, %v3490
      %v3492 = vsel %vm3449, %v3212, %v3491
      %v3493 = vsel %vm3437, %v3220, %v3216
      %v3494 = vsel %vm3439, %v3224, %v3493
      %v3495 = vsel %vm3441, %v3228, %v3494
      %v3496 = vsel %vm3443, %v3232, %v3495
      %v3497 = vsel %vm3445, %v3236, %v3496
      %v3498 = vsel %vm3447, %v3240, %v3497
      %v3499 = vsel %vm3449, %v3244, %v3498
      %v3500 = vsel %vm3437, %v3252, %v3248
      %v3501 = vsel %vm3439, %v3256, %v3500
      %v3502 = vsel %vm3441, %v3260, %v3501
      %v3503 = vsel %vm3443, %v3264, %v3502
      %v3504 = vsel %vm3445, %v3268, %v3503
      %v3505 = vsel %vm3447, %v3272, %v3504
      %v3506 = vsel %vm3449, %v3276, %v3505
      %v3507 = vsel %vm3437, %v3284, %v3280
      %v3508 = vsel %vm3439, %v3288, %v3507
      %v3509 = vsel %vm3441, %v3292, %v3508
      %v3510 = vsel %vm3443, %v3296, %v3509
      %v3511 = vsel %vm3445, %v3300, %v3510
      %v3512 = vsel %vm3447, %v3304, %v3511
      %v3513 = vsel %vm3449, %v3308, %v3512
      %v3514 = vsel %vm3437, %v3316, %v3312
      %v3515 = vsel %vm3439, %v3320, %v3514
      %v3516 = vsel %vm3441, %v3324, %v3515
      %v3517 = vsel %vm3443, %v3328, %v3516
      %v3518 = vsel %vm3445, %v3332, %v3517
      %v3519 = vsel %vm3447, %v3336, %v3518
      %v3520 = vsel %vm3449, %v3340, %v3519
      %v3521 = vsel %vm3437, %v3348, %v3344
      %v3522 = vsel %vm3439, %v3352, %v3521
      %v3523 = vsel %vm3441, %v3356, %v3522
      %v3524 = vsel %vm3443, %v3360, %v3523
      %v3525 = vsel %vm3445, %v3364, %v3524
      %v3526 = vsel %vm3447, %v3368, %v3525
      %v3527 = vsel %vm3449, %v3372, %v3526
      %v3528 = vsel %vm3437, %v3380, %v3376
      %v3529 = vsel %vm3439, %v3384, %v3528
      %v3530 = vsel %vm3441, %v3388, %v3529
      %v3531 = vsel %vm3443, %v3392, %v3530
      %v3532 = vsel %vm3445, %v3396, %v3531
      %v3533 = vsel %vm3447, %v3400, %v3532
      %v3534 = vsel %vm3449, %v3404, %v3533
      %v3535 = vsel %vm3437, %v3412, %v3408
      %v3536 = vsel %vm3439, %v3416, %v3535
      %v3537 = vsel %vm3441, %v3420, %v3536
      %v3538 = vsel %vm3443, %v3424, %v3537
      %v3539 = vsel %vm3445, %v3428, %v3538
      %v3540 = vsel %vm3447, %v3432, %v3539
      %v3541 = vsel %vm3449, %v3436, %v3540
      %vm3556 = vcmask 64512
      %v3557 = vsel %vm3556, %v3450, 0.0
      %3558 = vadd.xlane.f32.xlu0 %v3557
      %v3559 = vpop.xlane.xlu0 %3558
      %v3560 = vsel %vm3556, %v3457, 0.0
      %3561 = vadd.xlane.f32.xlu0 %v3560
      %v3562 = vpop.xlane.xlu0 %3561
      %v3563 = vsel %vm3556, %v3464, 0.0
      %3564 = vadd.xlane.f32.xlu0 %v3563
      %v3565 = vpop.xlane.xlu0 %3564
      %v3566 = vsel %vm3556, %v3471, 0.0
      %3567 = vadd.xlane.f32.xlu0 %v3566
      %v3568 = vpop.xlane.xlu0 %3567
      %v3569 = vsel %vm3556, %v3478, 0.0
      %3570 = vadd.xlane.f32.xlu0 %v3569
      %v3571 = vpop.xlane.xlu0 %3570
      %v3572 = vsel %vm3556, %v3485, 0.0
      %3573 = vadd.xlane.f32.xlu0 %v3572
      %v3574 = vpop.xlane.xlu0 %3573
      %v3575 = vsel %vm3556, %v3492, 0.0
      %3576 = vadd.xlane.f32.xlu0 %v3575
      %v3577 = vpop.xlane.xlu0 %3576
      %v3578 = vsel %vm3556, %v3499, 0.0
      %3579 = vadd.xlane.f32.xlu0 %v3578
      %v3580 = vpop.xlane.xlu0 %3579
      %v3581 = vsel %vm3556, %v3506, 0.0
      %3582 = vadd.xlane.f32.xlu0 %v3581
      %v3583 = vpop.xlane.xlu0 %3582
      %v3584 = vsel %vm3556, %v3513, 0.0
      %3585 = vadd.xlane.f32.xlu0 %v3584
      %v3586 = vpop.xlane.xlu0 %3585
      %v3587 = vsel %vm3556, %v3520, 0.0
      %3588 = vadd.xlane.f32.xlu0 %v3587
      %v3589 = vpop.xlane.xlu0 %3588
      %v3590 = vsel %vm3556, %v3527, 0.0
      %3591 = vadd.xlane.f32.xlu0 %v3590
      %v3592 = vpop.xlane.xlu0 %3591
      %v3593 = vsel %vm3556, %v3534, 0.0
      %3594 = vadd.xlane.f32.xlu0 %v3593
      %v3595 = vpop.xlane.xlu0 %3594
      %v3596 = vsel %vm3556, %v3541, 0.0
      %3597 = vadd.xlane.f32.xlu0 %v3596
      %v3598 = vpop.xlane.xlu0 %3597
      %v3599 = vrcp.pop %v3559
      %v3600 = vrcp.pop %v3562
      %v3601 = vrcp.pop %v3565
      %v3602 = vrcp.pop %v3568
      %v3603 = vrcp.pop %v3571
      %v3604 = vrcp.pop %v3574
      %v3605 = vrcp.pop %v3577
      %v3606 = vrcp.pop %v3580
      %v3607 = vrcp.pop %v3583
      %v3608 = vrcp.pop %v3586
      %v3609 = vrcp.pop %v3589
      %v3610 = vrcp.pop %v3592
      %v3611 = vrcp.pop %v3595
      %v3612 = vrcp.pop %v3598
      %v3627 = vrot.slane %v3599, 1
      %v3628 = vrot.slane %v3599, 2
      %v3629 = vrot.slane %v3599, 3
      %v3630 = vrot.slane %v3599, 4
      %v3631 = vrot.slane %v3599, 5
      %v3632 = vrot.slane %v3599, 6
      %v3633 = vrot.slane %v3599, 7
      %v3634 = vrot.slane %v3600, 1
      %v3635 = vrot.slane %v3600, 2
      %v3636 = vrot.slane %v3600, 3
      %v3637 = vrot.slane %v3600, 4
      %v3638 = vrot.slane %v3600, 5
      %v3639 = vrot.slane %v3600, 6
      %v3640 = vrot.slane %v3600, 7
      %v3641 = vrot.slane %v3601, 1
      %v3642 = vrot.slane %v3601, 2
      %v3643 = vrot.slane %v3601, 3
      %v3644 = vrot.slane %v3601, 4
      %v3645 = vrot.slane %v3601, 5
      %v3646 = vrot.slane %v3601, 6
      %v3647 = vrot.slane %v3601, 7
      %v3648 = vrot.slane %v3602, 1
      %v3649 = vrot.slane %v3602, 2
      %v3650 = vrot.slane %v3602, 3
      %v3651 = vrot.slane %v3602, 4
      %v3652 = vrot.slane %v3602, 5
      %v3653 = vrot.slane %v3602, 6
      %v3654 = vrot.slane %v3602, 7
      %v3655 = vrot.slane %v3603, 1
      %v3656 = vrot.slane %v3603, 2
      %v3657 = vrot.slane %v3603, 3
      %v3658 = vrot.slane %v3603, 4
      %v3659 = vrot.slane %v3603, 5
      %v3660 = vrot.slane %v3603, 6
      %v3661 = vrot.slane %v3603, 7
      %v3662 = vrot.slane %v3604, 1
      %v3663 = vrot.slane %v3604, 2
      %v3664 = vrot.slane %v3604, 3
      %v3665 = vrot.slane %v3604, 4
      %v3666 = vrot.slane %v3604, 5
      %v3667 = vrot.slane %v3604, 6
      %v3668 = vrot.slane %v3604, 7
      %v3669 = vrot.slane %v3605, 1
      %v3670 = vrot.slane %v3605, 2
      %v3671 = vrot.slane %v3605, 3
      %v3672 = vrot.slane %v3605, 4
      %v3673 = vrot.slane %v3605, 5
      %v3674 = vrot.slane %v3605, 6
      %v3675 = vrot.slane %v3605, 7
      %v3676 = vrot.slane %v3606, 1
      %v3677 = vrot.slane %v3606, 2
      %v3678 = vrot.slane %v3606, 3
      %v3679 = vrot.slane %v3606, 4
      %v3680 = vrot.slane %v3606, 5
      %v3681 = vrot.slane %v3606, 6
      %v3682 = vrot.slane %v3606, 7
      %v3683 = vrot.slane %v3607, 1
      %v3684 = vrot.slane %v3607, 2
      %v3685 = vrot.slane %v3607, 3
      %v3686 = vrot.slane %v3607, 4
      %v3687 = vrot.slane %v3607, 5
      %v3688 = vrot.slane %v3607, 6
      %v3689 = vrot.slane %v3607, 7
      %v3690 = vrot.slane %v3608, 1
      %v3691 = vrot.slane %v3608, 2
      %v3692 = vrot.slane %v3608, 3
      %v3693 = vrot.slane %v3608, 4
      %v3694 = vrot.slane %v3608, 5
      %v3695 = vrot.slane %v3608, 6
      %v3696 = vrot.slane %v3608, 7
      %v3697 = vrot.slane %v3609, 1
      %v3698 = vrot.slane %v3609, 2
      %v3699 = vrot.slane %v3609, 3
      %v3700 = vrot.slane %v3609, 4
      %v3701 = vrot.slane %v3609, 5
      %v3702 = vrot.slane %v3609, 6
      %v3703 = vrot.slane %v3609, 7
      %v3704 = vrot.slane %v3610, 1
      %v3705 = vrot.slane %v3610, 2
      %v3706 = vrot.slane %v3610, 3
      %v3707 = vrot.slane %v3610, 4
      %v3708 = vrot.slane %v3610, 5
      %v3709 = vrot.slane %v3610, 6
      %v3710 = vrot.slane %v3610, 7
      %v3711 = vrot.slane %v3611, 1
      %v3712 = vrot.slane %v3611, 2
      %v3713 = vrot.slane %v3611, 3
      %v3714 = vrot.slane %v3611, 4
      %v3715 = vrot.slane %v3611, 5
      %v3716 = vrot.slane %v3611, 6
      %v3717 = vrot.slane %v3611, 7
      %v3718 = vrot.slane %v3612, 1
      %v3719 = vrot.slane %v3612, 2
      %v3720 = vrot.slane %v3612, 3
      %v3721 = vrot.slane %v3612, 4
      %v3722 = vrot.slane %v3612, 5
      %v3723 = vrot.slane %v3612, 6
      %v3724 = vrot.slane %v3612, 7
      %v3837 = vmul.f32 %v2320, %v3599
      %v3838 = vmul.f32 %v2326, %v3627
      %v3839 = vmul.f32 %v2332, %v3628
      %v3840 = vmul.f32 %v2338, %v3629
      %v3841 = vmul.f32 %v2344, %v3630
      %v3842 = vmul.f32 %v2350, %v3631
      %v3843 = vmul.f32 %v2356, %v3632
      %v3844 = vmul.f32 %v2362, %v3633
      %v3845 = vmul.f32 %v2368, %v3600
      %v3846 = vmul.f32 %v2374, %v3634
      %v3847 = vmul.f32 %v2380, %v3635
      %v3848 = vmul.f32 %v2386, %v3636
      %v3849 = vmul.f32 %v2392, %v3637
      %v3850 = vmul.f32 %v2398, %v3638
      %v3851 = vmul.f32 %v2404, %v3639
      %v3852 = vmul.f32 %v2410, %v3640
      %v3853 = vmul.f32 %v2416, %v3601
      %v3854 = vmul.f32 %v2422, %v3641
      %v3855 = vmul.f32 %v2428, %v3642
      %v3856 = vmul.f32 %v2434, %v3643
      %v3857 = vmul.f32 %v2440, %v3644
      %v3858 = vmul.f32 %v2446, %v3645
      %v3859 = vmul.f32 %v2452, %v3646
      %v3860 = vmul.f32 %v2458, %v3647
      %v3861 = vmul.f32 %v2464, %v3602
      %v3862 = vmul.f32 %v2470, %v3648
      %v3863 = vmul.f32 %v2476, %v3649
      %v3864 = vmul.f32 %v2482, %v3650
      %v3865 = vmul.f32 %v2488, %v3651
      %v3866 = vmul.f32 %v2494, %v3652
      %v3867 = vmul.f32 %v2500, %v3653
      %v3868 = vmul.f32 %v2506, %v3654
      %v3869 = vmul.f32 %v2512, %v3603
      %v3870 = vmul.f32 %v2518, %v3655
      %v3871 = vmul.f32 %v2524, %v3656
      %v3872 = vmul.f32 %v2530, %v3657
      %v3873 = vmul.f32 %v2536, %v3658
      %v3874 = vmul.f32 %v2542, %v3659
      %v3875 = vmul.f32 %v2548, %v3660
      %v3876 = vmul.f32 %v2554, %v3661
      %v3877 = vmul.f32 %v2560, %v3604
      %v3878 = vmul.f32 %v2566, %v3662
      %v3879 = vmul.f32 %v2572, %v3663
      %v3880 = vmul.f32 %v2578, %v3664
      %v3881 = vmul.f32 %v2584, %v3665
      %v3882 = vmul.f32 %v2590, %v3666
      %v3883 = vmul.f32 %v2596, %v3667
      %v3884 = vmul.f32 %v2602, %v3668
      %v3885 = vmul.f32 %v2608, %v3605
      %v3886 = vmul.f32 %v2614, %v3669
      %v3887 = vmul.f32 %v2620, %v3670
      %v3888 = vmul.f32 %v2626, %v3671
      %v3889 = vmul.f32 %v2632, %v3672
      %v3890 = vmul.f32 %v2638, %v3673
      %v3891 = vmul.f32 %v2644, %v3674
      %v3892 = vmul.f32 %v2650, %v3675
      %v3893 = vmul.f32 %v2656, %v3606
      %v3894 = vmul.f32 %v2662, %v3676
      %v3895 = vmul.f32 %v2668, %v3677
      %v3896 = vmul.f32 %v2674, %v3678
      %v3897 = vmul.f32 %v2680, %v3679
      %v3898 = vmul.f32 %v2686, %v3680
      %v3899 = vmul.f32 %v2692, %v3681
      %v3900 = vmul.f32 %v2698, %v3682
      %v3901 = vmul.f32 %v2704, %v3607
      %v3902 = vmul.f32 %v2710, %v3683
      %v3903 = vmul.f32 %v2716, %v3684
      %v3904 = vmul.f32 %v2722, %v3685
      %v3905 = vmul.f32 %v2728, %v3686
      %v3906 = vmul.f32 %v2734, %v3687
      %v3907 = vmul.f32 %v2740, %v3688
      %v3908 = vmul.f32 %v2746, %v3689
      %v3909 = vmul.f32 %v2752, %v3608
      %v3910 = vmul.f32 %v2758, %v3690
      %v3911 = vmul.f32 %v2764, %v3691
      %v3912 = vmul.f32 %v2770, %v3692
      %v3913 = vmul.f32 %v2776, %v3693
      %v3914 = vmul.f32 %v2782, %v3694
      %v3915 = vmul.f32 %v2788, %v3695
      %v3916 = vmul.f32 %v2794, %v3696
      %v3917 = vmul.f32 %v2800, %v3609
      %v3918 = vmul.f32 %v2806, %v3697
      %v3919 = vmul.f32 %v2812, %v3698
      %v3920 = vmul.f32 %v2818, %v3699
      %v3921 = vmul.f32 %v2824, %v3700
      %v3922 = vmul.f32 %v2830, %v3701
      %v3923 = vmul.f32 %v2836, %v3702
      %v3924 = vmul.f32 %v2842, %v3703
      %v3925 = vmul.f32 %v2848, %v3610
      %v3926 = vmul.f32 %v2854, %v3704
      %v3927 = vmul.f32 %v2860, %v3705
      %v3928 = vmul.f32 %v2866, %v3706
      %v3929 = vmul.f32 %v2872, %v3707
      %v3930 = vmul.f32 %v2878, %v3708
      %v3931 = vmul.f32 %v2884, %v3709
      %v3932 = vmul.f32 %v2890, %v3710
      %v3933 = vmul.f32 %v2896, %v3611
      %v3934 = vmul.f32 %v2902, %v3711
      %v3935 = vmul.f32 %v2908, %v3712
      %v3936 = vmul.f32 %v2914, %v3713
      %v3937 = vmul.f32 %v2920, %v3714
      %v3938 = vmul.f32 %v2926, %v3715
      %v3939 = vmul.f32 %v2932, %v3716
      %v3940 = vmul.f32 %v2938, %v3717
      %v3941 = vmul.f32 %v2944, %v3612
      %v3942 = vmul.f32 %v2950, %v3718
      %v3943 = vmul.f32 %v2956, %v3719
      %v3944 = vmul.f32 %v2962, %v3720
      %v3945 = vmul.f32 %v2968, %v3721
      %v3946 = vmul.f32 %v2974, %v3722
      %v3947 = vmul.f32 %v2980, %v3723
      %v3948 = vmul.f32 %v2986, %v3724
      %v3949 = vld [vmem:[%s333] sm:$0xf]
      %v3950 = vld [vmem:[%s333 + $0x4] sm:$0xf]
      %v3951 = vld [vmem:[%s333 + $0x8] sm:$0xf]
      %v3952 = vld [vmem:[%s333 + $0xc] sm:$0xf]
      %v3953 = vld [vmem:[%s333 + $0x10] sm:$0xf]
      %v3954 = vld [vmem:[%s333 + $0x14] sm:$0xf]
      %v3955 = vld [vmem:[%s333 + $0x18] sm:$0xf]
      %v3956 = vld [vmem:[%s333 + $0x1c] sm:$0xf]
      %v3957 = vld [vmem:[%s333 + $0x20] sm:$0xf]
      %v3958 = vld [vmem:[%s333 + $0x24] sm:$0xf]
      %v3959 = vld [vmem:[%s333 + $0x28] sm:$0xf]
      %v3960 = vld [vmem:[%s333 + $0x2c] sm:$0xf]
      %v3961 = vld [vmem:[%s333 + $0x30] sm:$0xf]
      %v3962 = vld [vmem:[%s333 + $0x34] sm:$0xf]
      %v3963 = vld [vmem:[%s5] sm:$0xf]
      %v3964 = vld [vmem:[%s5 + $0x4] sm:$0xf]
      %v3965 = vld [vmem:[%s5 + $0x8] sm:$0xf]
      %v3966 = vld [vmem:[%s5 + $0xc] sm:$0xf]
      %v3967 = vpack.c.bf16 %v3837, %v3837
      %v3968 = vpack.c.bf16 %v3838, %v3838
      %v3969 = vpack.c.bf16 %v3839, %v3839
      %v3970 = vpack.c.bf16 %v3840, %v3840
      %v3971 = vpack.c.bf16 %v3841, %v3841
      %v3972 = vpack.c.bf16 %v3842, %v3842
      %v3973 = vpack.c.bf16 %v3843, %v3843
      %v3974 = vpack.c.bf16 %v3844, %v3844
      %v3975 = vpack.c.bf16 %v3845, %v3845
      %v3976 = vpack.c.bf16 %v3846, %v3846
      %v3977 = vpack.c.bf16 %v3847, %v3847
      %v3978 = vpack.c.bf16 %v3848, %v3848
      %v3979 = vpack.c.bf16 %v3849, %v3849
      %v3980 = vpack.c.bf16 %v3850, %v3850
      %v3981 = vpack.c.bf16 %v3851, %v3851
      %v3982 = vpack.c.bf16 %v3852, %v3852
      %v3983 = vpack.c.bf16 %v3853, %v3853
      %v3984 = vpack.c.bf16 %v3854, %v3854
      %v3985 = vpack.c.bf16 %v3855, %v3855
      %v3986 = vpack.c.bf16 %v3856, %v3856
      %v3987 = vpack.c.bf16 %v3857, %v3857
      %v3988 = vpack.c.bf16 %v3858, %v3858
      %v3989 = vpack.c.bf16 %v3859, %v3859
      %v3990 = vpack.c.bf16 %v3860, %v3860
      %v3991 = vpack.c.bf16 %v3861, %v3861
      %v3992 = vpack.c.bf16 %v3862, %v3862
      %v3993 = vpack.c.bf16 %v3863, %v3863
      %v3994 = vpack.c.bf16 %v3864, %v3864
      %v3995 = vpack.c.bf16 %v3865, %v3865
      %v3996 = vpack.c.bf16 %v3866, %v3866
      %v3997 = vpack.c.bf16 %v3867, %v3867
      %v3998 = vpack.c.bf16 %v3868, %v3868
      %v3999 = vpack.c.bf16 %v3869, %v3869
      %v4000 = vpack.c.bf16 %v3870, %v3870
      %v4001 = vpack.c.bf16 %v3871, %v3871
      %v4002 = vpack.c.bf16 %v3872, %v3872
      %v4003 = vpack.c.bf16 %v3873, %v3873
      %v4004 = vpack.c.bf16 %v3874, %v3874
      %v4005 = vpack.c.bf16 %v3875, %v3875
      %v4006 = vpack.c.bf16 %v3876, %v3876
      %v4007 = vpack.c.bf16 %v3877, %v3877
      %v4008 = vpack.c.bf16 %v3878, %v3878
      %v4009 = vpack.c.bf16 %v3879, %v3879
      %v4010 = vpack.c.bf16 %v3880, %v3880
      %v4011 = vpack.c.bf16 %v3881, %v3881
      %v4012 = vpack.c.bf16 %v3882, %v3882
      %v4013 = vpack.c.bf16 %v3883, %v3883
      %v4014 = vpack.c.bf16 %v3884, %v3884
      %v4015 = vpack.c.bf16 %v3885, %v3885
      %v4016 = vpack.c.bf16 %v3886, %v3886
      %v4017 = vpack.c.bf16 %v3887, %v3887
      %v4018 = vpack.c.bf16 %v3888, %v3888
      %v4019 = vpack.c.bf16 %v3889, %v3889
      %v4020 = vpack.c.bf16 %v3890, %v3890
      %v4021 = vpack.c.bf16 %v3891, %v3891
      %v4022 = vpack.c.bf16 %v3892, %v3892
      %v4023 = vpack.c.bf16 %v3893, %v3893
      %v4024 = vpack.c.bf16 %v3894, %v3894
      %v4025 = vpack.c.bf16 %v3895, %v3895
      %v4026 = vpack.c.bf16 %v3896, %v3896
      %v4027 = vpack.c.bf16 %v3897, %v3897
      %v4028 = vpack.c.bf16 %v3898, %v3898
      %v4029 = vpack.c.bf16 %v3899, %v3899
      %v4030 = vpack.c.bf16 %v3900, %v3900
      %v4031 = vpack.c.bf16 %v3901, %v3901
      %v4032 = vpack.c.bf16 %v3902, %v3902
      %v4033 = vpack.c.bf16 %v3903, %v3903
      %v4034 = vpack.c.bf16 %v3904, %v3904
      %v4035 = vpack.c.bf16 %v3905, %v3905
      %v4036 = vpack.c.bf16 %v3906, %v3906
      %v4037 = vpack.c.bf16 %v3907, %v3907
      %v4038 = vpack.c.bf16 %v3908, %v3908
      %v4039 = vpack.c.bf16 %v3909, %v3909
      %v4040 = vpack.c.bf16 %v3910, %v3910
      %v4041 = vpack.c.bf16 %v3911, %v3911
      %v4042 = vpack.c.bf16 %v3912, %v3912
      %v4043 = vpack.c.bf16 %v3913, %v3913
      %v4044 = vpack.c.bf16 %v3914, %v3914
      %v4045 = vpack.c.bf16 %v3915, %v3915
      %v4046 = vpack.c.bf16 %v3916, %v3916
      %v4047 = vpack.c.bf16 %v3917, %v3917
      %v4048 = vpack.c.bf16 %v3918, %v3918
      %v4049 = vpack.c.bf16 %v3919, %v3919
      %v4050 = vpack.c.bf16 %v3920, %v3920
      %v4051 = vpack.c.bf16 %v3921, %v3921
      %v4052 = vpack.c.bf16 %v3922, %v3922
      %v4053 = vpack.c.bf16 %v3923, %v3923
      %v4054 = vpack.c.bf16 %v3924, %v3924
      %v4055 = vpack.c.bf16 %v3925, %v3925
      %v4056 = vpack.c.bf16 %v3926, %v3926
      %v4057 = vpack.c.bf16 %v3927, %v3927
      %v4058 = vpack.c.bf16 %v3928, %v3928
      %v4059 = vpack.c.bf16 %v3929, %v3929
      %v4060 = vpack.c.bf16 %v3930, %v3930
      %v4061 = vpack.c.bf16 %v3931, %v3931
      %v4062 = vpack.c.bf16 %v3932, %v3932
      %v4063 = vpack.c.bf16 %v3933, %v3933
      %v4064 = vpack.c.bf16 %v3934, %v3934
      %v4065 = vpack.c.bf16 %v3935, %v3935
      %v4066 = vpack.c.bf16 %v3936, %v3936
      %v4067 = vpack.c.bf16 %v3937, %v3937
      %v4068 = vpack.c.bf16 %v3938, %v3938
      %v4069 = vpack.c.bf16 %v3939, %v3939
      %v4070 = vpack.c.bf16 %v3940, %v3940
      %v4071 = vpack.c.bf16 %v3941, %v3941
      %v4072 = vpack.c.bf16 %v3942, %v3942
      %v4073 = vpack.c.bf16 %v3943, %v3943
      %v4074 = vpack.c.bf16 %v3944, %v3944
      %v4075 = vpack.c.bf16 %v3945, %v3945
      %v4076 = vpack.c.bf16 %v3946, %v3946
      %v4077 = vpack.c.bf16 %v3947, %v3947
      %v4078 = vpack.c.bf16 %v3948, %v3948
      %v4079 = vld [vmem:[%s6] sm:$0xf]
      %v4080 = vld [vmem:[%s6 + $0x4] sm:$0xf]
      %v4081 = vld [vmem:[%s6 + $0x8] sm:$0xf]
      %v4082 = vld [vmem:[%s6 + $0xc] sm:$0xf]
      %v4083 = vld [vmem:[%s6 + $0x10] sm:$0xf]
      %v4084 = vld [vmem:[%s6 + $0x14] sm:$0xf]
      %v4085 = vld [vmem:[%s6 + $0x18] sm:$0xf]
      %v4086 = vld [vmem:[%s6 + $0x1c] sm:$0xf]
      %v4087 = vld [vmem:[%s6 + $0x20] sm:$0xf]
      %v4088 = vld [vmem:[%s6 + $0x24] sm:$0xf]
      %v4089 = vld [vmem:[%s6 + $0x28] sm:$0xf]
      %v4090 = vld [vmem:[%s6 + $0x2c] sm:$0xf]
      %v4091 = vld [vmem:[%s6 + $0x30] sm:$0xf]
      %v4092 = vld [vmem:[%s6 + $0x34] sm:$0xf]
      %v4093 = vld [vmem:[%s6 + $0x38] sm:$0xf]
      %v4094 = vld [vmem:[%s6 + $0x3c] sm:$0xf]
      %v4207 = vunpack.c.l.b16 %v3967
      %v4208 = vunpack.c.l.b16 %v3968
      %v4209 = vunpack.c.l.b16 %v3969
      %v4210 = vunpack.c.l.b16 %v3970
      %v4211 = vunpack.c.l.b16 %v3971
      %v4212 = vunpack.c.l.b16 %v3972
      %v4213 = vunpack.c.l.b16 %v3973
      %v4214 = vunpack.c.l.b16 %v3974
      %v4215 = vunpack.c.l.b16 %v3975
      %v4216 = vunpack.c.l.b16 %v3976
      %v4217 = vunpack.c.l.b16 %v3977
      %v4218 = vunpack.c.l.b16 %v3978
      %v4219 = vunpack.c.l.b16 %v3979
      %v4220 = vunpack.c.l.b16 %v3980
      %v4221 = vunpack.c.l.b16 %v3981
      %v4222 = vunpack.c.l.b16 %v3982
      %v4223 = vunpack.c.l.b16 %v3983
      %v4224 = vunpack.c.l.b16 %v3984
      %v4225 = vunpack.c.l.b16 %v3985
      %v4226 = vunpack.c.l.b16 %v3986
      %v4227 = vunpack.c.l.b16 %v3987
      %v4228 = vunpack.c.l.b16 %v3988
      %v4229 = vunpack.c.l.b16 %v3989
      %v4230 = vunpack.c.l.b16 %v3990
      %v4231 = vunpack.c.l.b16 %v3991
      %v4232 = vunpack.c.l.b16 %v3992
      %v4233 = vunpack.c.l.b16 %v3993
      %v4234 = vunpack.c.l.b16 %v3994
      %v4235 = vunpack.c.l.b16 %v3995
      %v4236 = vunpack.c.l.b16 %v3996
      %v4237 = vunpack.c.l.b16 %v3997
      %v4238 = vunpack.c.l.b16 %v3998
      %v4239 = vunpack.c.l.b16 %v3999
      %v4240 = vunpack.c.l.b16 %v4000
      %v4241 = vunpack.c.l.b16 %v4001
      %v4242 = vunpack.c.l.b16 %v4002
      %v4243 = vunpack.c.l.b16 %v4003
      %v4244 = vunpack.c.l.b16 %v4004
      %v4245 = vunpack.c.l.b16 %v4005
      %v4246 = vunpack.c.l.b16 %v4006
      %v4247 = vunpack.c.l.b16 %v4007
      %v4248 = vunpack.c.l.b16 %v4008
      %v4249 = vunpack.c.l.b16 %v4009
      %v4250 = vunpack.c.l.b16 %v4010
      %v4251 = vunpack.c.l.b16 %v4011
      %v4252 = vunpack.c.l.b16 %v4012
      %v4253 = vunpack.c.l.b16 %v4013
      %v4254 = vunpack.c.l.b16 %v4014
      %v4255 = vunpack.c.l.b16 %v4015
      %v4256 = vunpack.c.l.b16 %v4016
      %v4257 = vunpack.c.l.b16 %v4017
      %v4258 = vunpack.c.l.b16 %v4018
      %v4259 = vunpack.c.l.b16 %v4019
      %v4260 = vunpack.c.l.b16 %v4020
      %v4261 = vunpack.c.l.b16 %v4021
      %v4262 = vunpack.c.l.b16 %v4022
      %v4263 = vunpack.c.l.b16 %v4023
      %v4264 = vunpack.c.l.b16 %v4024
      %v4265 = vunpack.c.l.b16 %v4025
      %v4266 = vunpack.c.l.b16 %v4026
      %v4267 = vunpack.c.l.b16 %v4027
      %v4268 = vunpack.c.l.b16 %v4028
      %v4269 = vunpack.c.l.b16 %v4029
      %v4270 = vunpack.c.l.b16 %v4030
      %v4271 = vunpack.c.l.b16 %v4031
      %v4272 = vunpack.c.l.b16 %v4032
      %v4273 = vunpack.c.l.b16 %v4033
      %v4274 = vunpack.c.l.b16 %v4034
      %v4275 = vunpack.c.l.b16 %v4035
      %v4276 = vunpack.c.l.b16 %v4036
      %v4277 = vunpack.c.l.b16 %v4037
      %v4278 = vunpack.c.l.b16 %v4038
      %v4279 = vunpack.c.l.b16 %v4039
      %v4280 = vunpack.c.l.b16 %v4040
      %v4281 = vunpack.c.l.b16 %v4041
      %v4282 = vunpack.c.l.b16 %v4042
      %v4283 = vunpack.c.l.b16 %v4043
      %v4284 = vunpack.c.l.b16 %v4044
      %v4285 = vunpack.c.l.b16 %v4045
      %v4286 = vunpack.c.l.b16 %v4046
      %v4287 = vunpack.c.l.b16 %v4047
      %v4288 = vunpack.c.l.b16 %v4048
      %v4289 = vunpack.c.l.b16 %v4049
      %v4290 = vunpack.c.l.b16 %v4050
      %v4291 = vunpack.c.l.b16 %v4051
      %v4292 = vunpack.c.l.b16 %v4052
      %v4293 = vunpack.c.l.b16 %v4053
      %v4294 = vunpack.c.l.b16 %v4054
      %v4295 = vunpack.c.l.b16 %v4055
      %v4296 = vunpack.c.l.b16 %v4056
      %v4297 = vunpack.c.l.b16 %v4057
      %v4298 = vunpack.c.l.b16 %v4058
      %v4299 = vunpack.c.l.b16 %v4059
      %v4300 = vunpack.c.l.b16 %v4060
      %v4301 = vunpack.c.l.b16 %v4061
      %v4302 = vunpack.c.l.b16 %v4062
      %v4303 = vunpack.c.l.b16 %v4063
      %v4304 = vunpack.c.l.b16 %v4064
      %v4305 = vunpack.c.l.b16 %v4065
      %v4306 = vunpack.c.l.b16 %v4066
      %v4307 = vunpack.c.l.b16 %v4067
      %v4308 = vunpack.c.l.b16 %v4068
      %v4309 = vunpack.c.l.b16 %v4069
      %v4310 = vunpack.c.l.b16 %v4070
      %v4311 = vunpack.c.l.b16 %v4071
      %v4312 = vunpack.c.l.b16 %v4072
      %v4313 = vunpack.c.l.b16 %v4073
      %v4314 = vunpack.c.l.b16 %v4074
      %v4315 = vunpack.c.l.b16 %v4075
      %v4316 = vunpack.c.l.b16 %v4076
      %v4317 = vunpack.c.l.b16 %v4077
      %v4318 = vunpack.c.l.b16 %v4078
      %v4319 = vrot.slane %v4208, 7
      %v4320 = vsel %vm3437, %v4319, %v4207
      %v4321 = vrot.slane %v4209, 6
      %v4322 = vsel %vm3439, %v4321, %v4320
      %v4323 = vrot.slane %v4210, 5
      %v4324 = vsel %vm3441, %v4323, %v4322
      %v4325 = vrot.slane %v4211, 4
      %v4326 = vsel %vm3443, %v4325, %v4324
      %v4327 = vrot.slane %v4212, 3
      %v4328 = vsel %vm3445, %v4327, %v4326
      %v4329 = vrot.slane %v4213, 2
      %v4330 = vsel %vm3447, %v4329, %v4328
      %v4331 = vrot.slane %v4214, 1
      %v4332 = vsel %vm3449, %v4331, %v4330
      %v4333 = vrot.slane %v4216, 7
      %v4334 = vsel %vm3437, %v4333, %v4215
      %v4335 = vrot.slane %v4217, 6
      %v4336 = vsel %vm3439, %v4335, %v4334
      %v4337 = vrot.slane %v4218, 5
      %v4338 = vsel %vm3441, %v4337, %v4336
      %v4339 = vrot.slane %v4219, 4
      %v4340 = vsel %vm3443, %v4339, %v4338
      %v4341 = vrot.slane %v4220, 3
      %v4342 = vsel %vm3445, %v4341, %v4340
      %v4343 = vrot.slane %v4221, 2
      %v4344 = vsel %vm3447, %v4343, %v4342
      %v4345 = vrot.slane %v4222, 1
      %v4346 = vsel %vm3449, %v4345, %v4344
      %v4347 = vrot.slane %v4224, 7
      %v4348 = vsel %vm3437, %v4347, %v4223
      %v4349 = vrot.slane %v4225, 6
      %v4350 = vsel %vm3439, %v4349, %v4348
      %v4351 = vrot.slane %v4226, 5
      %v4352 = vsel %vm3441, %v4351, %v4350
      %v4353 = vrot.slane %v4227, 4
      %v4354 = vsel %vm3443, %v4353, %v4352
      %v4355 = vrot.slane %v4228, 3
      %v4356 = vsel %vm3445, %v4355, %v4354
      %v4357 = vrot.slane %v4229, 2
      %v4358 = vsel %vm3447, %v4357, %v4356
      %v4359 = vrot.slane %v4230, 1
      %v4360 = vsel %vm3449, %v4359, %v4358
      %v4361 = vrot.slane %v4232, 7
      %v4362 = vsel %vm3437, %v4361, %v4231
      %v4363 = vrot.slane %v4233, 6
      %v4364 = vsel %vm3439, %v4363, %v4362
      %v4365 = vrot.slane %v4234, 5
      %v4366 = vsel %vm3441, %v4365, %v4364
      %v4367 = vrot.slane %v4235, 4
      %v4368 = vsel %vm3443, %v4367, %v4366
      %v4369 = vrot.slane %v4236, 3
      %v4370 = vsel %vm3445, %v4369, %v4368
      %v4371 = vrot.slane %v4237, 2
      %v4372 = vsel %vm3447, %v4371, %v4370
      %v4373 = vrot.slane %v4238, 1
      %v4374 = vsel %vm3449, %v4373, %v4372
      %v4375 = vrot.slane %v4240, 7
      %v4376 = vsel %vm3437, %v4375, %v4239
      %v4377 = vrot.slane %v4241, 6
      %v4378 = vsel %vm3439, %v4377, %v4376
      %v4379 = vrot.slane %v4242, 5
      %v4380 = vsel %vm3441, %v4379, %v4378
      %v4381 = vrot.slane %v4243, 4
      %v4382 = vsel %vm3443, %v4381, %v4380
      %v4383 = vrot.slane %v4244, 3
      %v4384 = vsel %vm3445, %v4383, %v4382
      %v4385 = vrot.slane %v4245, 2
      %v4386 = vsel %vm3447, %v4385, %v4384
      %v4387 = vrot.slane %v4246, 1
      %v4388 = vsel %vm3449, %v4387, %v4386
      %v4389 = vrot.slane %v4248, 7
      %v4390 = vsel %vm3437, %v4389, %v4247
      %v4391 = vrot.slane %v4249, 6
      %v4392 = vsel %vm3439, %v4391, %v4390
      %v4393 = vrot.slane %v4250, 5
      %v4394 = vsel %vm3441, %v4393, %v4392
      %v4395 = vrot.slane %v4251, 4
      %v4396 = vsel %vm3443, %v4395, %v4394
      %v4397 = vrot.slane %v4252, 3
      %v4398 = vsel %vm3445, %v4397, %v4396
      %v4399 = vrot.slane %v4253, 2
      %v4400 = vsel %vm3447, %v4399, %v4398
      %v4401 = vrot.slane %v4254, 1
      %v4402 = vsel %vm3449, %v4401, %v4400
      %v4403 = vrot.slane %v4256, 7
      %v4404 = vsel %vm3437, %v4403, %v4255
      %v4405 = vrot.slane %v4257, 6
      %v4406 = vsel %vm3439, %v4405, %v4404
      %v4407 = vrot.slane %v4258, 5
      %v4408 = vsel %vm3441, %v4407, %v4406
      %v4409 = vrot.slane %v4259, 4
      %v4410 = vsel %vm3443, %v4409, %v4408
      %v4411 = vrot.slane %v4260, 3
      %v4412 = vsel %vm3445, %v4411, %v4410
      %v4413 = vrot.slane %v4261, 2
      %v4414 = vsel %vm3447, %v4413, %v4412
      %v4415 = vrot.slane %v4262, 1
      %v4416 = vsel %vm3449, %v4415, %v4414
      %v4417 = vrot.slane %v4264, 7
      %v4418 = vsel %vm3437, %v4417, %v4263
      %v4419 = vrot.slane %v4265, 6
      %v4420 = vsel %vm3439, %v4419, %v4418
      %v4421 = vrot.slane %v4266, 5
      %v4422 = vsel %vm3441, %v4421, %v4420
      %v4423 = vrot.slane %v4267, 4
      %v4424 = vsel %vm3443, %v4423, %v4422
      %v4425 = vrot.slane %v4268, 3
      %v4426 = vsel %vm3445, %v4425, %v4424
      %v4427 = vrot.slane %v4269, 2
      %v4428 = vsel %vm3447, %v4427, %v4426
      %v4429 = vrot.slane %v4270, 1
      %v4430 = vsel %vm3449, %v4429, %v4428
      %v4431 = vrot.slane %v4272, 7
      %v4432 = vsel %vm3437, %v4431, %v4271
      %v4433 = vrot.slane %v4273, 6
      %v4434 = vsel %vm3439, %v4433, %v4432
      %v4435 = vrot.slane %v4274, 5
      %v4436 = vsel %vm3441, %v4435, %v4434
      %v4437 = vrot.slane %v4275, 4
      %v4438 = vsel %vm3443, %v4437, %v4436
      %v4439 = vrot.slane %v4276, 3
      %v4440 = vsel %vm3445, %v4439, %v4438
      %v4441 = vrot.slane %v4277, 2
      %v4442 = vsel %vm3447, %v4441, %v4440
      %v4443 = vrot.slane %v4278, 1
      %v4444 = vsel %vm3449, %v4443, %v4442
      %v4445 = vrot.slane %v4280, 7
      %v4446 = vsel %vm3437, %v4445, %v4279
      %v4447 = vrot.slane %v4281, 6
      %v4448 = vsel %vm3439, %v4447, %v4446
      %v4449 = vrot.slane %v4282, 5
      %v4450 = vsel %vm3441, %v4449, %v4448
      %v4451 = vrot.slane %v4283, 4
      %v4452 = vsel %vm3443, %v4451, %v4450
      %v4453 = vrot.slane %v4284, 3
      %v4454 = vsel %vm3445, %v4453, %v4452
      %v4455 = vrot.slane %v4285, 2
      %v4456 = vsel %vm3447, %v4455, %v4454
      %v4457 = vrot.slane %v4286, 1
      %v4458 = vsel %vm3449, %v4457, %v4456
      %v4459 = vrot.slane %v4288, 7
      %v4460 = vsel %vm3437, %v4459, %v4287
      %v4461 = vrot.slane %v4289, 6
      %v4462 = vsel %vm3439, %v4461, %v4460
      %v4463 = vrot.slane %v4290, 5
      %v4464 = vsel %vm3441, %v4463, %v4462
      %v4465 = vrot.slane %v4291, 4
      %v4466 = vsel %vm3443, %v4465, %v4464
      %v4467 = vrot.slane %v4292, 3
      %v4468 = vsel %vm3445, %v4467, %v4466
      %v4469 = vrot.slane %v4293, 2
      %v4470 = vsel %vm3447, %v4469, %v4468
      %v4471 = vrot.slane %v4294, 1
      %v4472 = vsel %vm3449, %v4471, %v4470
      %v4473 = vrot.slane %v4296, 7
      %v4474 = vsel %vm3437, %v4473, %v4295
      %v4475 = vrot.slane %v4297, 6
      %v4476 = vsel %vm3439, %v4475, %v4474
      %v4477 = vrot.slane %v4298, 5
      %v4478 = vsel %vm3441, %v4477, %v4476
      %v4479 = vrot.slane %v4299, 4
      %v4480 = vsel %vm3443, %v4479, %v4478
      %v4481 = vrot.slane %v4300, 3
      %v4482 = vsel %vm3445, %v4481, %v4480
      %v4483 = vrot.slane %v4301, 2
      %v4484 = vsel %vm3447, %v4483, %v4482
      %v4485 = vrot.slane %v4302, 1
      %v4486 = vsel %vm3449, %v4485, %v4484
      %v4487 = vrot.slane %v4304, 7
      %v4488 = vsel %vm3437, %v4487, %v4303
      %v4489 = vrot.slane %v4305, 6
      %v4490 = vsel %vm3439, %v4489, %v4488
      %v4491 = vrot.slane %v4306, 5
      %v4492 = vsel %vm3441, %v4491, %v4490
      %v4493 = vrot.slane %v4307, 4
      %v4494 = vsel %vm3443, %v4493, %v4492
      %v4495 = vrot.slane %v4308, 3
      %v4496 = vsel %vm3445, %v4495, %v4494
      %v4497 = vrot.slane %v4309, 2
      %v4498 = vsel %vm3447, %v4497, %v4496
      %v4499 = vrot.slane %v4310, 1
      %v4500 = vsel %vm3449, %v4499, %v4498
      %v4501 = vrot.slane %v4312, 7
      %v4502 = vsel %vm3437, %v4501, %v4311
      %v4503 = vrot.slane %v4313, 6
      %v4504 = vsel %vm3439, %v4503, %v4502
      %v4505 = vrot.slane %v4314, 5
      %v4506 = vsel %vm3441, %v4505, %v4504
      %v4507 = vrot.slane %v4315, 4
      %v4508 = vsel %vm3443, %v4507, %v4506
      %v4509 = vrot.slane %v4316, 3
      %v4510 = vsel %vm3445, %v4509, %v4508
      %v4511 = vrot.slane %v4317, 2
      %v4512 = vsel %vm3447, %v4511, %v4510
      %v4513 = vrot.slane %v4318, 1
      %v4514 = vsel %vm3449, %v4513, %v4512
      %v4515 = vpack.c.b16 %v4346, %v4332
      %v4516 = vpack.c.b16 %v4374, %v4360
      %v4517 = vpack.c.b16 %v4402, %v4388
      %v4518 = vpack.c.b16 %v4430, %v4416
      %v4519 = vpack.c.b16 %v4458, %v4444
      %v4520 = vpack.c.b16 %v4486, %v4472
      %v4521 = vpack.c.b16 %v4514, %v4500
      %v4545 = vunpack.c.l.b16 %v4079
      %v4546 = vunpack.c.l.b16 %v4080
      %v4547 = vunpack.c.l.b16 %v4081
      %v4548 = vunpack.c.l.b16 %v4082
      %v4549 = vunpack.c.l.b16 %v4083
      %v4550 = vunpack.c.l.b16 %v4084
      %v4551 = vunpack.c.l.b16 %v4085
      %v4552 = vunpack.c.l.b16 %v4086
      %v4553 = vunpack.c.l.b16 %v4087
      %v4554 = vunpack.c.l.b16 %v4088
      %v4555 = vunpack.c.l.b16 %v4089
      %v4556 = vunpack.c.l.b16 %v4090
      %v4557 = vunpack.c.l.b16 %v4091
      %v4558 = vunpack.c.l.b16 %v4092
      %v4559 = vunpack.c.l.b16 %v4093
      %v4560 = vunpack.c.l.b16 %v4094
      %v4561 = vpack.c.b16 %v4546, %v4545
      %v4562 = vpack.c.b16 %v4548, %v4547
      %v4563 = vpack.c.b16 %v4550, %v4549
      %v4564 = vpack.c.b16 %v4552, %v4551
      %v4565 = vpack.c.b16 %v4554, %v4553
      %v4566 = vpack.c.b16 %v4556, %v4555
      %v4567 = vpack.c.b16 %v4558, %v4557
      %v4568 = vpack.c.b16 %v4560, %v4559
      %4577 = vmatprep.subr.bf16.mxu0 0
      %4578 = vmatpush1.bf16.msra.mxu0 %v4561
      %4579 = vmatprep.subr.bf16.mxu0 0
      %4580 = vmatpush1.bf16.msra.mxu0 %v4562
      %4581 = vmatprep.subr.bf16.mxu0 0
      %4582 = vmatpush1.bf16.msra.mxu0 %v4563
      %4583 = vmatprep.subr.bf16.mxu0 0
      %4584 = vmatpush1.bf16.msra.mxu0 %v4564
      %4585 = vmatprep.subr.bf16.mxu0 0
      %4586 = vmatpush1.bf16.msra.mxu0 %v4565
      %4587 = vmatprep.subr.bf16.mxu0 0
      %4588 = vmatpush1.bf16.msra.mxu0 %v4566
      %4589 = vmatprep.subr.bf16.mxu0 0
      %4590 = vmatpush1.bf16.msra.mxu0 %v4567
      %4591 = vmatprep.subr.bf16.mxu0 0
      %4592 = vmatpush1.bf16.msra.mxu0 %v4568
      %4593 = vmatprep.subr.bf16.mxu0 0
      %4594 = vmatpush1.bf16.msra.mxu0 0
      %4595 = vmatprep.subr.bf16.mxu0 0
      %4596 = vmatpush1.bf16.msra.mxu0 0
      %4597 = vmatprep.subr.bf16.mxu0 0
      %4598 = vmatpush1.bf16.msra.mxu0 0
      %4599 = vmatprep.subr.bf16.mxu0 0
      %4600 = vmatpush1.bf16.msra.mxu0 0
      %4601 = vmatprep.subr.bf16.mxu0 0
      %4602 = vmatpush1.bf16.msra.mxu0 0
      %4603 = vmatprep.subr.bf16.mxu0 0
      %4604 = vmatpush1.bf16.msra.mxu0 0
      %4605 = vmatprep.subr.bf16.mxu0 0
      %4606 = vmatpush1.bf16.msra.mxu0 0
      %4607 = vmatprep.subr.bf16.mxu0 0
      %4608 = vmatpush1.bf16.msra.mxu0 0
      %4609 = vmatprep.mubr.bf16.mxu0 0
      %4610 = vmatmul.mubr.bf16.gmra.mrb[0].mxu0 %v4515
      %v4611 = vpop.f32.mrb[0].mxu0
      %v4612 = vadd.f32 0.0, %v4611
      %v4613 = vpop.f32.mrb[0].mxu0
      %v4614 = vpop.f32.mrb[0].mxu0
      %v4615 = vadd.f32 0.0, %v4614
      %v4616 = vpop.f32.mrb[0].mxu0
      %4617 = vmatprep.mubr.bf16.mxu0 0
      %4618 = vmatmul.mubr.bf16.gmra.mrb[0].mxu0 %v4516
      %v4619 = vpop.f32.mrb[0].mxu0
      %v4620 = vadd.f32 0.0, %v4619
      %v4621 = vpop.f32.mrb[0].mxu0
      %v4622 = vpop.f32.mrb[0].mxu0
      %v4623 = vadd.f32 0.0, %v4622
      %v4624 = vpop.f32.mrb[0].mxu0
      %4625 = vmatprep.mubr.bf16.mxu0 0
      %4626 = vmatmul.mubr.bf16.gmra.mrb[0].mxu0 %v4517
      %v4627 = vpop.f32.mrb[0].mxu0
      %v4628 = vadd.f32 0.0, %v4627
      %v4629 = vpop.f32.mrb[0].mxu0
      %v4630 = vpop.f32.mrb[0].mxu0
      %v4631 = vadd.f32 0.0, %v4630
      %v4632 = vpop.f32.mrb[0].mxu0
      %4633 = vmatprep.mubr.bf16.mxu0 0
      %4634 = vmatmul.mubr.bf16.gmra.mrb[0].mxu0 %v4518
      %v4635 = vpop.f32.mrb[0].mxu0
      %v4636 = vadd.f32 0.0, %v4635
      %v4637 = vpop.f32.mrb[0].mxu0
      %v4638 = vpop.f32.mrb[0].mxu0
      %v4639 = vadd.f32 0.0, %v4638
      %v4640 = vpop.f32.mrb[0].mxu0
      %4641 = vmatprep.mubr.bf16.mxu0 0
      %4642 = vmatmul.mubr.bf16.gmra.mrb[0].mxu0 %v4519
      %v4643 = vpop.f32.mrb[0].mxu0
      %v4644 = vadd.f32 0.0, %v4643
      %v4645 = vpop.f32.mrb[0].mxu0
      %v4646 = vpop.f32.mrb[0].mxu0
      %v4647 = vadd.f32 0.0, %v4646
      %v4648 = vpop.f32.mrb[0].mxu0
      %4649 = vmatprep.mubr.bf16.mxu0 0
      %4650 = vmatmul.mubr.bf16.gmra.mrb[0].mxu0 %v4520
      %v4651 = vpop.f32.mrb[0].mxu0
      %v4652 = vadd.f32 0.0, %v4651
      %v4653 = vpop.f32.mrb[0].mxu0
      %v4654 = vpop.f32.mrb[0].mxu0
      %v4655 = vadd.f32 0.0, %v4654
      %v4656 = vpop.f32.mrb[0].mxu0
      %4657 = vmatprep.mubr.bf16.mxu0 0
      %4658 = vmatmul.mubr.bf16.gmra.mrb[0].mxu0 %v4521
      %v4659 = vpop.f32.mrb[0].mxu0
      %v4660 = vadd.f32 0.0, %v4659
      %v4661 = vpop.f32.mrb[0].mxu0
      %v4662 = vpop.f32.mrb[0].mxu0
      %v4663 = vadd.f32 0.0, %v4662
      %v4664 = vpop.f32.mrb[0].mxu0
      %4665 = vdwg.mxu0
      %v4680 = vunpack.c.l.b16 %v3949
      %v4681 = vunpack.c.l.b16 %v3950
      %v4682 = vunpack.c.l.b16 %v3951
      %v4683 = vunpack.c.l.b16 %v3952
      %v4684 = vunpack.c.l.b16 %v3953
      %v4685 = vunpack.c.l.b16 %v3954
      %v4686 = vunpack.c.l.b16 %v3955
      %v4687 = vunpack.c.l.b16 %v3956
      %v4688 = vunpack.c.l.b16 %v3957
      %v4689 = vunpack.c.l.b16 %v3958
      %v4690 = vunpack.c.l.b16 %v3959
      %v4691 = vunpack.c.l.b16 %v3960
      %v4692 = vunpack.c.l.b16 %v3961
      %v4693 = vunpack.c.l.b16 %v3962
      %v4694 = vpack.c.b16 %v4681, %v4680
      %v4695 = vpack.c.b16 %v4683, %v4682
      %v4696 = vpack.c.b16 %v4685, %v4684
      %v4697 = vpack.c.b16 %v4687, %v4686
      %v4698 = vpack.c.b16 %v4689, %v4688
      %v4699 = vpack.c.b16 %v4691, %v4690
      %v4700 = vpack.c.b16 %v4693, %v4692
      %v4705 = vunpack.c.l.b16 %v3963
      %v4706 = vunpack.c.l.b16 %v3964
      %v4707 = vunpack.c.l.b16 %v3965
      %v4708 = vunpack.c.l.b16 %v3966
      %v4709 = vpack.c.b16 %v4706, %v4705
      %v4710 = vpack.c.b16 %v4708, %v4707
      %v4714 = vsel %vm769, %v4694, 0
      %v4717 = vsel %vm769, %v4695, 0
      %v4720 = vsel %vm769, %v4696, 0
      %v4723 = vsel %vm769, %v4697, 0
      %v4726 = vsel %vm769, %v4698, 0
      %v4729 = vsel %vm769, %v4699, 0
      %v4732 = vsel %vm769, %v4700, 0
      %4734 = vmatprep.subr.bf16.mxu0 0
      %4735 = vmatpush1.bf16.msra.mxu0 %v4709
      %4736 = vmatprep.subr.bf16.mxu0 0
      %4737 = vmatpush1.bf16.msra.mxu0 %v4710
      %4738 = vmatprep.subr.bf16.mxu0 0
      %4739 = vmatpush1.bf16.msra.mxu0 0
      %4740 = vmatprep.subr.bf16.mxu0 0
      %4741 = vmatpush1.bf16.msra.mxu0 0
      %4742 = vmatprep.subr.bf16.mxu0 0
      %4743 = vmatpush1.bf16.msra.mxu0 0
      %4744 = vmatprep.subr.bf16.mxu0 0
      %4745 = vmatpush1.bf16.msra.mxu0 0
      %4746 = vmatprep.subr.bf16.mxu0 0
      %4747 = vmatpush1.bf16.msra.mxu0 0
      %4748 = vmatprep.subr.bf16.mxu0 0
      %4749 = vmatpush1.bf16.msra.mxu0 0
      %4750 = vmatprep.subr.bf16.mxu0 0
      %4751 = vmatpush1.bf16.msra.mxu0 0
      %4752 = vmatprep.subr.bf16.mxu0 0
      %4753 = vmatpush1.bf16.msra.mxu0 0
      %4754 = vmatprep.subr.bf16.mxu0 0
      %4755 = vmatpush1.bf16.msra.mxu0 0
      %4756 = vmatprep.subr.bf16.mxu0 0
      %4757 = vmatpush1.bf16.msra.mxu0 0
      %4758 = vmatprep.subr.bf16.mxu0 0
      %4759 = vmatpush1.bf16.msra.mxu0 0
      %4760 = vmatprep.subr.bf16.mxu0 0
      %4761 = vmatpush1.bf16.msra.mxu0 0
      %4762 = vmatprep.subr.bf16.mxu0 0
      %4763 = vmatpush1.bf16.msra.mxu0 0
      %4764 = vmatprep.subr.bf16.mxu0 0
      %4765 = vmatpush1.bf16.msra.mxu0 0
      %4766 = vmatprep.mubr.bf16.mxu0 0
      %4767 = vmatmul.mubr.bf16.gmra.mrb[0].mxu0 %v4714
      %v4768 = vpop.f32.mrb[0].mxu0
      %v4769 = vadd.f32 %v4612, %v4768
      %v4770 = vpop.f32.mrb[0].mxu0
      %v4771 = vpop.f32.mrb[0].mxu0
      %v4772 = vadd.f32 %v4615, %v4771
      %v4773 = vpop.f32.mrb[0].mxu0
      %4774 = vmatprep.mubr.bf16.mxu0 0
      %4775 = vmatmul.mubr.bf16.gmra.mrb[0].mxu0 %v4717
      %v4776 = vpop.f32.mrb[0].mxu0
      %v4777 = vadd.f32 %v4620, %v4776
      %v4778 = vpop.f32.mrb[0].mxu0
      %v4779 = vpop.f32.mrb[0].mxu0
      %v4780 = vadd.f32 %v4623, %v4779
      %v4781 = vpop.f32.mrb[0].mxu0
      %4782 = vmatprep.mubr.bf16.mxu0 0
      %4783 = vmatmul.mubr.bf16.gmra.mrb[0].mxu0 %v4720
      %v4784 = vpop.f32.mrb[0].mxu0
      %v4785 = vadd.f32 %v4628, %v4784
      %v4786 = vpop.f32.mrb[0].mxu0
      %v4787 = vpop.f32.mrb[0].mxu0
      %v4788 = vadd.f32 %v4631, %v4787
      %v4789 = vpop.f32.mrb[0].mxu0
      %4790 = vmatprep.mubr.bf16.mxu0 0
      %4791 = vmatmul.mubr.bf16.gmra.mrb[0].mxu0 %v4723
      %v4792 = vpop.f32.mrb[0].mxu0
      %v4793 = vadd.f32 %v4636, %v4792
      %v4794 = vpop.f32.mrb[0].mxu0
      %v4795 = vpop.f32.mrb[0].mxu0
      %v4796 = vadd.f32 %v4639, %v4795
      %v4797 = vpop.f32.mrb[0].mxu0
      %4798 = vmatprep.mubr.bf16.mxu0 0
      %4799 = vmatmul.mubr.bf16.gmra.mrb[0].mxu0 %v4726
      %v4800 = vpop.f32.mrb[0].mxu0
      %v4801 = vadd.f32 %v4644, %v4800
      %v4802 = vpop.f32.mrb[0].mxu0
      %v4803 = vpop.f32.mrb[0].mxu0
      %v4804 = vadd.f32 %v4647, %v4803
      %v4805 = vpop.f32.mrb[0].mxu0
      %4806 = vmatprep.mubr.bf16.mxu0 0
      %4807 = vmatmul.mubr.bf16.gmra.mrb[0].mxu0 %v4729
      %v4808 = vpop.f32.mrb[0].mxu0
      %v4809 = vadd.f32 %v4652, %v4808
      %v4810 = vpop.f32.mrb[0].mxu0
      %v4811 = vpop.f32.mrb[0].mxu0
      %v4812 = vadd.f32 %v4655, %v4811
      %v4813 = vpop.f32.mrb[0].mxu0
      %4814 = vmatprep.mubr.bf16.mxu0 0
      %4815 = vmatmul.mubr.bf16.gmra.mrb[0].mxu0 %v4732
      %v4816 = vpop.f32.mrb[0].mxu0
      %v4817 = vadd.f32 %v4660, %v4816
      %v4818 = vpop.f32.mrb[0].mxu0
      %v4819 = vpop.f32.mrb[0].mxu0
      %v4820 = vadd.f32 %v4663, %v4819
      %v4821 = vpop.f32.mrb[0].mxu0
      %4822 = vdwg.mxu0
      %v4823 = vld [vmem:[%s7] sm:$0x1]
      %v4825 = vlaneseq
      %v4826 = vshrl.u32 %v4825, 7
      %v4827 = vsub.s32 0, %v4826
      %v4828 = vrot.slane %v4823, %v4827
      %v4830 = vadd.f32 %v4769, %v4828
      %v4831 = vadd.f32 %v4772, %v4828
      %v4832 = vadd.f32 %v4777, %v4828
      %v4833 = vadd.f32 %v4780, %v4828
      %v4834 = vadd.f32 %v4785, %v4828
      %v4835 = vadd.f32 %v4788, %v4828
      %v4836 = vadd.f32 %v4793, %v4828
      %v4837 = vadd.f32 %v4796, %v4828
      %v4838 = vadd.f32 %v4801, %v4828
      %v4839 = vadd.f32 %v4804, %v4828
      %v4840 = vadd.f32 %v4809, %v4828
      %v4841 = vadd.f32 %v4812, %v4828
      %v4842 = vadd.f32 %v4817, %v4828
      %v4843 = vadd.f32 %v4820, %v4828
      %v4844 = vmax.f32 %v4830, 0.0
      %v4845 = vmax.f32 %v4831, 0.0
      %v4846 = vmax.f32 %v4832, 0.0
      %v4847 = vmax.f32 %v4833, 0.0
      %v4848 = vmax.f32 %v4834, 0.0
      %v4849 = vmax.f32 %v4835, 0.0
      %v4850 = vmax.f32 %v4836, 0.0
      %v4851 = vmax.f32 %v4837, 0.0
      %v4852 = vmax.f32 %v4838, 0.0
      %v4853 = vmax.f32 %v4839, 0.0
      %v4854 = vmax.f32 %v4840, 0.0
      %v4855 = vmax.f32 %v4841, 0.0
      %v4856 = vmax.f32 %v4842, 0.0
      %v4857 = vmax.f32 %v4843, 0.0
      %v4858 = vmul.f32 %v4844, %v4844
      %v4859 = vmul.f32 %v4845, %v4845
      %v4860 = vmul.f32 %v4846, %v4846
      %v4861 = vmul.f32 %v4847, %v4847
      %v4862 = vmul.f32 %v4848, %v4848
      %v4863 = vmul.f32 %v4849, %v4849
      %v4864 = vmul.f32 %v4850, %v4850
      %v4865 = vmul.f32 %v4851, %v4851
      %v4866 = vmul.f32 %v4852, %v4852
      %v4867 = vmul.f32 %v4853, %v4853
      %v4868 = vmul.f32 %v4854, %v4854
      %v4869 = vmul.f32 %v4855, %v4855
      %v4870 = vmul.f32 %v4856, %v4856
      %v4871 = vmul.f32 %v4857, %v4857
      %4872 = vadd.xlane.f32.xlu0 %v4858
      %v4873 = vpop.xlane.xlu0 %4872
      %4874 = vadd.xlane.f32.xlu0 %v4859
      %v4875 = vpop.xlane.xlu0 %4874
      %4876 = vadd.xlane.f32.xlu0 %v4860
      %v4877 = vpop.xlane.xlu0 %4876
      %4878 = vadd.xlane.f32.xlu0 %v4861
      %v4879 = vpop.xlane.xlu0 %4878
      %4880 = vadd.xlane.f32.xlu0 %v4862
      %v4881 = vpop.xlane.xlu0 %4880
      %4882 = vadd.xlane.f32.xlu0 %v4863
      %v4883 = vpop.xlane.xlu0 %4882
      %4884 = vadd.xlane.f32.xlu0 %v4864
      %v4885 = vpop.xlane.xlu0 %4884
      %4886 = vadd.xlane.f32.xlu0 %v4865
      %v4887 = vpop.xlane.xlu0 %4886
      %4888 = vadd.xlane.f32.xlu0 %v4866
      %v4889 = vpop.xlane.xlu0 %4888
      %4890 = vadd.xlane.f32.xlu0 %v4867
      %v4891 = vpop.xlane.xlu0 %4890
      %4892 = vadd.xlane.f32.xlu0 %v4868
      %v4893 = vpop.xlane.xlu0 %4892
      %4894 = vadd.xlane.f32.xlu0 %v4869
      %v4895 = vpop.xlane.xlu0 %4894
      %4896 = vadd.xlane.f32.xlu0 %v4870
      %v4897 = vpop.xlane.xlu0 %4896
      %4898 = vadd.xlane.f32.xlu0 %v4871
      %v4899 = vpop.xlane.xlu0 %4898
      %v4900 = vadd.f32 %v4873, 1e-12
      %v4901 = vadd.f32 %v4875, 1e-12
      %v4902 = vadd.f32 %v4877, 1e-12
      %v4903 = vadd.f32 %v4879, 1e-12
      %v4904 = vadd.f32 %v4881, 1e-12
      %v4905 = vadd.f32 %v4883, 1e-12
      %v4906 = vadd.f32 %v4885, 1e-12
      %v4907 = vadd.f32 %v4887, 1e-12
      %v4908 = vadd.f32 %v4889, 1e-12
      %v4909 = vadd.f32 %v4891, 1e-12
      %v4910 = vadd.f32 %v4893, 1e-12
      %v4911 = vadd.f32 %v4895, 1e-12
      %v4912 = vadd.f32 %v4897, 1e-12
      %v4913 = vadd.f32 %v4899, 1e-12
      %v4914 = vrsqrt.pop %v4900
      %v4915 = vrsqrt.pop %v4901
      %v4916 = vrsqrt.pop %v4902
      %v4917 = vrsqrt.pop %v4903
      %v4918 = vrsqrt.pop %v4904
      %v4919 = vrsqrt.pop %v4905
      %v4920 = vrsqrt.pop %v4906
      %v4921 = vrsqrt.pop %v4907
      %v4922 = vrsqrt.pop %v4908
      %v4923 = vrsqrt.pop %v4909
      %v4924 = vrsqrt.pop %v4910
      %v4925 = vrsqrt.pop %v4911
      %v4926 = vrsqrt.pop %v4912
      %v4927 = vrsqrt.pop %v4913
      %v4928 = vmul.f32 %v4844, %v4914
      %v4929 = vmul.f32 %v4845, %v4915
      %v4930 = vmul.f32 %v4846, %v4916
      %v4931 = vmul.f32 %v4847, %v4917
      %v4932 = vmul.f32 %v4848, %v4918
      %v4933 = vmul.f32 %v4849, %v4919
      %v4934 = vmul.f32 %v4850, %v4920
      %v4935 = vmul.f32 %v4851, %v4921
      %v4936 = vmul.f32 %v4852, %v4922
      %v4937 = vmul.f32 %v4853, %v4923
      %v4938 = vmul.f32 %v4854, %v4924
      %v4939 = vmul.f32 %v4855, %v4925
      %v4940 = vmul.f32 %v4856, %v4926
      %v4941 = vmul.f32 %v4857, %v4927
      %4942 = vst [vmem:[%s351] sm:$0xff] %v4928
      %4943 = vst [vmem:[%s351 + $0x8] sm:$0xff] %v4929
      %4944 = vst [vmem:[%s351 + $0x10] sm:$0xff] %v4930
      %4945 = vst [vmem:[%s351 + $0x18] sm:$0xff] %v4931
      %4946 = vst [vmem:[%s351 + $0x20] sm:$0xff] %v4932
      %4947 = vst [vmem:[%s351 + $0x28] sm:$0xff] %v4933
      %4948 = vst [vmem:[%s351 + $0x30] sm:$0xff] %v4934
      %4949 = vst [vmem:[%s351 + $0x38] sm:$0xff] %v4935
      %4950 = vst [vmem:[%s351 + $0x40] sm:$0xff] %v4936
      %4951 = vst [vmem:[%s351 + $0x48] sm:$0xff] %v4937
      %4952 = vst [vmem:[%s351 + $0x50] sm:$0xff] %v4938
      %4953 = vst [vmem:[%s351 + $0x58] sm:$0xff] %v4939
      %4954 = vst [vmem:[%s351 + $0x60] sm:$0xff] %v4940
      %4955 = vst [vmem:[%s351 + $0x68] sm:$0xff] %v4941
      %s4956 = smul.u32 14, %s19
      %p4957 = scmp.lt.s32.totalorder %s4956, 27
      %s4958 = scalar_select %p4957, %s4956, 27
      %s4959 = smul.addr %s4958, 8
      %s4960 = scalar_lea.vmem %s8, %s4959
      // Predicated region
      $region53: #{pinsage_conv.1} parent=51 // pred_check
        %p4961 = pneg %p220
      $region54: #{pinsage_conv.1} parent=51 // pred_check_branch
        %4963 = sbr.rel (%p4961) target = $region56
      $region55: #{pinsage_conv.1} parent=51 // pred_region
        %s4964 = smul.u32 14, %s19
      $region56: #{pinsage_conv.1} parent=51 // pred_fallthru
        _
    $region52: #{pinsage_conv.1} parent=5 // pred_fallthru
      _
    %p4965 = scmp.le.s32.totalorder 2, %s14
    // Predicated region
    $region57: #{pinsage_conv.1} parent=5 // pred_check
      %p4966 = pneg %p4965
    $region58: #{pinsage_conv.1} parent=5 // pred_check_branch
      %4968 = sbr.rel (%p4966) target = $region60
    $region59: #{pinsage_conv.1} parent=5 // pred_region
      %s4969 = ssub.s32 %s14, 2
      // Predicated region
      $region61: #{pinsage_conv.1} parent=59 // pred_check
        %p4970 = pneg %p226
      $region62: #{pinsage_conv.1} parent=59 // pred_check_branch
        %4972 = sbr.rel (%p4970) target = $region64
      $region63: #{pinsage_conv.1} parent=59 // pred_region
        %s4973 = smul.u32 14, %s20
        %p4974 = scmp.lt.s32.totalorder %s4973, 27
        %s4975 = scalar_select %p4974, %s4973, 27
        %s4976 = smul.addr %s4975, 8
        %s4977 = scalar_lea.vmem %s8, %s4976
      $region64: #{pinsage_conv.1} parent=59 // pred_fallthru
        _
    $region60: #{pinsage_conv.1} parent=5 // pred_fallthru
      _
  $region6: #{pinsage_conv.1} parent=0 // loop_footer
    %s18 = sadd.s32 1, %s14
  $region7: #{pinsage_conv.1} parent=0 // loop_footer_branch
    %13 = sbr.rel target = $region3
  $region8: #{pinsage_conv.1} parent=0 // loop_exit
    _

</llo_original>
